<compile_context>
chip_gen: v6e
topology: v6e:2x2x1
jax: 0.10.0
libtpu: 0.0.40
codegen_flags: <defaults>
</compile_context>

<pallas_src>
import jax
import jax.numpy as jnp
from jax.experimental import pallas as pl
from jax.experimental.pallas import tpu as pltpu

EPS = 1e-5
LANE = 128                       # output channels padded to a multiple of this
VMEM_LIMIT = 40 * 1024 * 1024    # explicit scoped-VMEM budget (v7x-safe)


def _round_up(x, m):
    return ((x + m - 1) // m) * m


def _mosaic_params(ndims):
    return pltpu.CompilerParams(
        dimension_semantics=("parallel",) * ndims,
        vmem_limit_bytes=VMEM_LIMIT,
    )


# ---------------------------------------------------------------------------
# Kernels
# ---------------------------------------------------------------------------
def _make_conv_kernel(KH, KW, Ho, Wo, Cpad, *, pad_out, in_bn):
    """Fused conv kernel (one image per grid step).

    Inputs : x (Hs, Ws, Cin_eff) bf16 (structurally zero-padded as needed),
             w (KH*KW, Cin_eff, Cpad) bf16,
             [scale, shift] (1, Cpad) f32 when in_bn (BN+ReLU of the *input*
             fused into the tap loads; assumes a 1-px zero padding ring).
    Outputs: y  -> (Ho+2, Wo+2, Cpad) bf16 zero-bordered   if pad_out
                   (Ho*Wo, Cpad)      bf16                 otherwise
             st -> (8, Cpad) f32: row 0 = sum(y_pre), row 1 = sum(y_pre^2).
    """

    def kernel(*refs):
        if in_bn:
            x_ref, w_ref, sc_ref, sh_ref, y_ref, s_ref = refs
            sc = sc_ref[...]          # (1, Cpad) f32, broadcasts over (Ho,Wo,Cpad)
            sh = sh_ref[...]
            ri = jax.lax.broadcasted_iota(jnp.int32, (Ho, Wo, 1), 0)
            ci = jax.lax.broadcasted_iota(jnp.int32, (Ho, Wo, 1), 1)
        else:
            x_ref, w_ref, y_ref, s_ref = refs

        acc = jnp.zeros((Ho * Wo, Cpad), jnp.float32)
        for kh in range(KH):
            for kw in range(KW):
                xs = x_ref[pl.ds(kh, Ho), pl.ds(kw, Wo), :]   # (Ho, Wo, Cin_eff)
                if in_bn:
                    v = xs.astype(jnp.float32) * sc + sh
                    v = jnp.maximum(v, 0.0)
                    # Keep the structural zero-padding ring at exactly zero
                    # (BN shift would otherwise leak into the conv sum).
                    valid = ((ri + kh >= 1) & (ri + kh <= Ho) &
                             (ci + kw >= 1) & (ci + kw <= Wo))
                    v = jnp.where(valid, v, 0.0)
                    xs = v.astype(jnp.bfloat16)
                lhs = xs.reshape(Ho * Wo, xs.shape[-1])
                acc = acc + jnp.dot(lhs, w_ref[kh * KW + kw],
                                    preferred_element_type=jnp.float32)

        # Per-image BN partials from the exact (f32, unpadded) conv outputs.
        s1 = jnp.sum(acc, axis=0, keepdims=True)
        s2 = jnp.sum(acc * acc, axis=0, keepdims=True)
        row = jax.lax.broadcasted_iota(jnp.int32, (8, Cpad), 0)
        s_ref[...] = jnp.where(row == 0, s1, jnp.where(row == 1, s2, 0.0))

        y = acc.astype(jnp.bfloat16)
        if pad_out:
            y_ref[...] = jnp.zeros((Ho + 2, Wo + 2, Cpad), jnp.bfloat16)
            y_ref[pl.ds(1, Ho), pl.ds(1, Wo), :] = y.reshape(Ho, Wo, Cpad)
        else:
            y_ref[...] = y

    return kernel


def _final_kernel(y_ref, sc_ref, s2_ref, b2_ref, ss_ref, bs_ref, o_ref):
    """out = relu(BN2(y2_pre) + BN_s(shortcut_pre)); bf16 in, f32 math."""
    main = y_ref[...].astype(jnp.float32) * s2_ref[...] + b2_ref[...]
    short = sc_ref[...].astype(jnp.float32) * ss_ref[...] + bs_ref[...]
    o_ref[...] = jnp.maximum(main + short, 0.0).astype(o_ref.dtype)


# ---------------------------------------------------------------------------
# pallas_call wrappers
# ---------------------------------------------------------------------------
def _fused_conv(xin, w_taps, KH, KW, Ho, Wo, *, pad_out, in_affine=None):
    """xin: (N, Hs, Ws, Cin_eff) bf16; w_taps: (KH*KW, Cin_eff, Cpad) bf16."""
    N, Hs, Ws, Cin_eff = xin.shape
    KT, ci_w, Cpad = w_taps.shape
    assert KT == KH * KW and ci_w == Cin_eff
    assert Hs >= Ho + KH - 1 and Ws >= Wo + KW - 1

    if pad_out:
        y_shape = jax.ShapeDtypeStruct((N, Ho + 2, Wo + 2, Cpad), jnp.bfloat16)
        y_spec = pl.BlockSpec((None, Ho + 2, Wo + 2, Cpad),
                              lambda n: (n, 0, 0, 0))
    else:
        y_shape = jax.ShapeDtypeStruct((N, Ho * Wo, Cpad), jnp.bfloat16)
        y_spec = pl.BlockSpec((None, Ho * Wo, Cpad), lambda n: (n, 0, 0))
    s_shape = jax.ShapeDtypeStruct((N, 8, Cpad), jnp.float32)
    s_spec = pl.BlockSpec((None, 8, Cpad), lambda n: (n, 0, 0))

    in_specs = [
        pl.BlockSpec((None, Hs, Ws, Cin_eff), lambda n: (n, 0, 0, 0)),
        # Grid-invariant weight block (constant index_map -> fetched once).
        pl.BlockSpec((KT, Cin_eff, Cpad), lambda n: (0, 0, 0)),
    ]
    args = [xin, w_taps]
    if in_affine is not None:
        scale, shift = in_affine
        in_specs += [pl.BlockSpec((1, Cpad), lambda n: (0, 0)),
                     pl.BlockSpec((1, Cpad), lambda n: (0, 0))]
        args += [scale, shift]

    kernel = _make_conv_kernel(KH, KW, Ho, Wo, Cpad, pad_out=pad_out,
                               in_bn=in_affine is not None)

    flops = 2 * N * Ho * Wo * KT * Cin_eff * Cpad
    bytes_accessed = (xin.size * 2 + w_taps.size * 2
                      + N * Ho * Wo * Cpad * 2 + N * 8 * Cpad * 4)

    return pl.pallas_call(
        kernel,
        out_shape=(y_shape, s_shape),
        grid=(N,),
        in_specs=in_specs,
        out_specs=(y_spec, s_spec),
        compiler_params=_mosaic_params(1),
        cost_estimate=pl.CostEstimate(flops=flops, transcendentals=0,
                                      bytes_accessed=bytes_accessed),
    )(*args)


def _pick_chunk(n, target=2048):
    """Largest divisor of n that is <= target and a multiple of 8 (else n)."""
    if n <= target:
        return n
    best = None
    d = 8
    while d <= target:
        if n % d == 0:
            best = d
        d += 8
    return best if best is not None else n


def _final(y2, sc, s2, b2, ss, bs):
    N, L, Cpad = y2.shape
    chunk = _pick_chunk(L)
    tile = pl.BlockSpec((None, chunk, Cpad), lambda n, j: (n, j, 0))
    vec = pl.BlockSpec((1, Cpad), lambda n, j: (0, 0))
    bytes_accessed = y2.size * 2 + sc.size * 2 + N * L * Cpad * 4
    return pl.pallas_call(
        _final_kernel,
        out_shape=jax.ShapeDtypeStruct((N, L, Cpad), jnp.float32),
        grid=(N, L // chunk),
        in_specs=[tile, tile, vec, vec, vec, vec],
        out_specs=tile,
        compiler_params=_mosaic_params(2),
        cost_estimate=pl.CostEstimate(flops=4 * N * L * Cpad, transcendentals=0,
                                      bytes_accessed=bytes_accessed),
    )(y2, sc, s2, b2, ss, bs)


# ---------------------------------------------------------------------------
# Host-side glue: weight/tap reshaping, space-to-depth, BN reduction
# ---------------------------------------------------------------------------
def _w_taps(w_oihw, cin_pad, cout_pad):
    # (Cout, Cin, KH, KW) -> (KH*KW, cin_pad, cout_pad), tap index = kh*KW + kw.
    co, ci, kh, kw = w_oihw.shape
    w = jnp.transpose(w_oihw, (2, 3, 1, 0)).reshape(kh * kw, ci, co)
    w = jnp.pad(w, ((0, 0), (0, cin_pad - ci), (0, cout_pad - co)))
    return w.astype(jnp.bfloat16)


def _w_taps_s2d(w_oihw, cout_pad):
    # stride-2 3x3 conv == stride-1 2x2 conv over a space-to-depth(2) input.
    co, ci, _, _ = w_oihw.shape
    wp = jnp.pad(w_oihw, ((0, 0), (0, 0), (0, 1), (0, 1)))       # (co, ci, 4, 4)
    wp = wp.reshape(co, ci, 2, 2, 2, 2)                           # (co,ci,a,ph,b,pw)
    wp = jnp.transpose(wp, (2, 4, 3, 5, 1, 0))                    # (a,b,ph,pw,ci,co)
    wp = wp.reshape(4, 4 * ci, co)
    wp = jnp.pad(wp, ((0, 0), (0, 0), (0, cout_pad - co)))
    return wp.astype(jnp.bfloat16)


def _space_to_depth2(x_pad):
    # x_pad: (N, Hp, Wp, C) (already zero-padded); channel order (ph*2+pw)*C + c.
    N, Hp, Wp, C = x_pad.shape
    Hp2, Wp2 = _round_up(Hp, 2), _round_up(Wp, 2)
    x_pad = jnp.pad(x_pad, ((0, 0), (0, Hp2 - Hp), (0, Wp2 - Wp), (0, 0)))
    x = x_pad.reshape(N, Hp2 // 2, 2, Wp2 // 2, 2, C)
    x = jnp.transpose(x, (0, 1, 3, 2, 4, 5))
    return x.reshape(N, Hp2 // 2, Wp2 // 2, 4 * C)


def _pad_c(v, cpad):
    v = v.reshape(1, -1).astype(jnp.float32)
    return jnp.pad(v, ((0, 0), (0, cpad - v.shape[1])))


def _bn_scale_shift(stats, m_valid, gamma, beta, cpad):
    """(N,8,Cpad) per-image (sum, sumsq) partials -> per-channel (scale, shift)."""
    s1 = jnp.sum(stats[:, 0, :], axis=0)
    s2 = jnp.sum(stats[:, 1, :], axis=0)
    mean = s1 / m_valid
    var = jnp.maximum(s2 / m_valid - mean * mean, 0.0)
    inv = jax.lax.rsqrt(var + EPS)
    scale = _pad_c(gamma, cpad) * inv[None, :]        # (1, Cpad)
    shift = _pad_c(beta, cpad) - mean[None, :] * scale
    return scale, shift


# ---------------------------------------------------------------------------
# Forward
# ---------------------------------------------------------------------------
def basic_block_forward(x_nchw, params, stride):
    assert stride in (1, 2)
    x_bf = x_nchw.astype(jnp.bfloat16)                # bf16 before the transpose
    x = jnp.transpose(x_bf, (0, 2, 3, 1))             # NCHW -> NHWC
    N, H, W, Cin = x.shape
    Cout = params["w1"].shape[0]
    Cpad = _round_up(Cout, LANE)

    # ---- conv1 (3x3, stride, pad 1) + BN stats ---------------------------
    Ho = (H - 1) // stride + 1
    Wo = (W - 1) // stride + 1
    if stride == 1:
        xin1 = jnp.pad(x, ((0, 0), (1, 1), (1, 1), (0, 0)))
        w1 = _w_taps(params["w1"], Cin, Cpad)
        KH1 = KW1 = 3
    else:
        xin1 = _space_to_depth2(jnp.pad(x, ((0, 0), (1, 1), (1, 1), (0, 0))))
        w1 = _w_taps_s2d(params["w1"], Cpad)
        KH1 = KW1 = 2
    # conv1 output is written directly in padded layout (zero border) for conv2.
    y1pad, st1 = _fused_conv(xin1, w1, KH1, KW1, Ho, Wo, pad_out=True)

    M = N * Ho * Wo
    sc1, sh1 = _bn_scale_shift(st1, M, params["g1"], params["b1"], Cpad)

    # ---- conv2 (3x3, stride 1, pad 1) with BN1+ReLU fused into its taps --
    w2 = _w_taps(params["w2"], Cpad, Cpad)
    y2_pre, st2 = _fused_conv(y1pad, w2, 3, 3, Ho, Wo, pad_out=False,
                              in_affine=(sc1, sh1))
    sc2, sh2 = _bn_scale_shift(st2, M, params["g2"], params["b2"], Cpad)

    # ---- shortcut ----------------------------------------------------------
    need_proj = (stride != 1) or (Cin != Cout)
    if need_proj:
        xs = x if stride == 1 else x[:, ::stride, ::stride, :]
        ws = _w_taps(params["ws"], Cin, Cpad)
        sc_pre, st_s = _fused_conv(xs, ws, 1, 1, Ho, Wo, pad_out=False)
        scs, shs = _bn_scale_shift(st_s, M, params["gs"], params["bs"], Cpad)
    else:
        sc_pre = jnp.pad(x.reshape(N, H * W, Cin),
                         ((0, 0), (0, 0), (0, Cpad - Cin)))      # bf16 identity
        scs = jnp.ones((1, Cpad), jnp.float32)
        shs = jnp.zeros((1, Cpad), jnp.float32)

    # ---- BN2 + shortcut-BN + add + ReLU ----------------------------------
    out = _final(y2_pre, sc_pre, sc2, sh2, scs, shs)   # (N, Ho*Wo, Cpad) f32
    out = out[:, :, :Cout].reshape(N, Ho, Wo, Cout)
    return jnp.transpose(out, (0, 3, 1, 2))            # NHWC -> NCHW


# ---------------------------------------------------------------------------
# Pure-JAX f32 reference (verification only)
# ---------------------------------------------------------------------------
def _ref_forward(x_nchw, params, stride):
    def conv(x, w, s, p):
        return jax.lax.conv_general_dilated(
            x, w, (s, s), ((p, p), (p, p)),
            dimension_numbers=("NCHW", "OIHW", "NCHW"))

    def bn(x, g, b):
        mean = jnp.mean(x, axis=(0, 2, 3), keepdims=True)
        var = jnp.mean(jnp.square(x - mean), axis=(0, 2, 3), keepdims=True)
        return ((x - mean) * jax.lax.rsqrt(var + EPS)
                * g.reshape(1, -1, 1, 1) + b.reshape(1, -1, 1, 1))

    Cin = x_nchw.shape[1]
    Cout = params["w1"].shape[0]
    y = jax.nn.relu(bn(conv(x_nchw, params["w1"], stride, 1),
                       params["g1"][0], params["b1"][0]))
    y = bn(conv(y, params["w2"], 1, 1), params["g2"][0], params["b2"][0])
    if stride != 1 or Cin != Cout:
        sc = bn(conv(x_nchw, params["ws"], stride, 0),
                params["gs"][0], params["bs"][0])
    else:
        sc = x_nchw
    return jax.nn.relu(y + sc)


def _make_params(key, cin, cout, need_proj):
    ks = jax.random.split(key, 8)
    p = {
        "w1": jax.random.normal(ks[0], (cout, cin, 3, 3), jnp.float32) * 0.1,
        "g1": 1.0 + 0.1 * jax.random.normal(ks[1], (1, cout), jnp.float32),
        "b1": 0.1 * jax.random.normal(ks[2], (1, cout), jnp.float32),
        "w2": jax.random.normal(ks[3], (cout, cout, 3, 3), jnp.float32) * 0.1,
        "g2": 1.0 + 0.1 * jax.random.normal(ks[4], (1, cout), jnp.float32),
        "b2": 0.1 * jax.random.normal(ks[5], (1, cout), jnp.float32),
    }
    if need_proj:
        p["ws"] = jax.random.normal(ks[6], (cout, cin, 1, 1), jnp.float32) * 0.1
        p["gs"] = jnp.ones((1, cout), jnp.float32)
        p["bs"] = jnp.zeros((1, cout), jnp.float32)
    return p


if __name__ == "__main__":
    key = jax.random.PRNGKey(0)
    k_x, k_p, k_x2, k_p2 = jax.random.split(key, 4)

    fwd = jax.jit(basic_block_forward, static_argnames=("stride",))

    # Tolerances are bf16-MXU + bf16-intermediate scale (~2-3e-2 typical);
    # structural bugs (wrong taps, BN stats, masking) would blow far past them.

    # Case 1: projection shortcut (in=4 -> out=8, stride=2), input (2,4,16,16).
    # Exercises: space-to-depth stride-2 conv1, conv2 with fused BN1+ReLU+mask,
    # 1x1 projection shortcut conv.
    x = jax.random.normal(k_x, (2, 4, 16, 16), jnp.float32)
    params = _make_params(k_p, cin=4, cout=8, need_proj=True)
    out = jax.block_until_ready(fwd(x, params, stride=2))
    ref = _ref_forward(x, params, 2)
    assert out.shape == (2, 8, 8, 8)
    err1 = float(jnp.max(jnp.abs(out - ref)))
    assert jnp.allclose(out, ref, atol=6e-2, rtol=6e-2), err1

    # Case 2: identity shortcut (in=out=8, stride=1), input (2,8,16,16).
    # Exercises: stride-1 3x3 conv1, padded-output handoff to conv2, identity
    # shortcut path, cross-image two-phase BatchNorm reduction.
    x2 = jax.random.normal(k_x2, (2, 8, 16, 16), jnp.float32)
    params2 = _make_params(k_p2, cin=8, cout=8, need_proj=False)
    out2 = jax.block_until_ready(fwd(x2, params2, stride=1))
    ref2 = _ref_forward(x2, params2, 1)
    assert out2.shape == (2, 8, 16, 16)
    err2 = float(jnp.max(jnp.abs(out2 - ref2)))
    assert jnp.allclose(out2, ref2, atol=6e-2, rtol=6e-2), err2

    print("KERNEL_OK")
</pallas_src>

<mosaic_0001>
module attributes {stable_mosaic.version = 11 : i64} {
  func.func @kernel(%arg0: i32, %arg1: memref<1x9x9x16xbf16, #tpu.memory_space<vmem>>, %arg2: memref<4x16x128xbf16, #tpu.memory_space<vmem>>, %arg3: memref<1x10x10x128xbf16, #tpu.memory_space<vmem>>, %arg4: memref<1x8x128xf32, #tpu.memory_space<vmem>>) attributes {dimension_semantics = [#tpu.dimension_semantics<parallel>], iteration_bounds = array<i64: 2>, scalar_prefetch = 0 : i64, scratch_operands = 0 : i64, tpu.core_type = #tpu.core_type<tc>, window_params = [{transform_indices = @transform_0, window_bounds = array<i64: 1, 9, 9, 16>}, {pipeline_mode = #tpu.pipeline_mode<synchronous>, transform_indices = @transform_1, window_bounds = array<i64: 4, 16, 128>}, {transform_indices = @transform_2, window_bounds = array<i64: 1, 10, 10, 128>}, {transform_indices = @transform_3, window_bounds = array<i64: 1, 8, 128>}]} {
    %cst = arith.constant 0.000000e+00 : f32
    %0 = vector.broadcast %cst : f32 to vector<64x128xf32>
    %c0 = arith.constant 0 : index
    %c0_0 = arith.constant 0 : index
    %c0_1 = arith.constant 0 : index
    %c0_2 = arith.constant 0 : index
    %1 = vector.load %arg1[%c0, %c0_0, %c0_1, %c0_2] : memref<1x9x9x16xbf16, #tpu.memory_space<vmem>>, vector<1x8x8x16xbf16>
    %2 = vector.shape_cast %1 : vector<1x8x8x16xbf16> to vector<8x8x16xbf16>
    %3 = vector.shape_cast %2 : vector<8x8x16xbf16> to vector<64x16xbf16>
    %c0_3 = arith.constant 0 : index
    %c0_4 = arith.constant 0 : index
    %c0_5 = arith.constant 0 : index
    %4 = vector.load %arg2[%c0_3, %c0_4, %c0_5] : memref<4x16x128xbf16, #tpu.memory_space<vmem>>, vector<1x16x128xbf16>
    %5 = vector.shape_cast %4 : vector<1x16x128xbf16> to vector<16x128xbf16>
    %cst_6 = arith.constant dense<0.000000e+00> : vector<64x128xf32>
    %6 = tpu.matmul %3, %5, %cst_6 {dimension_numbers = #tpu.dot_dimension_numbers<[1], [0], [0], [1], [0, 0, 1, 1], [], []>} : vector<64x16xbf16>, vector<16x128xbf16>, vector<64x128xf32> -> vector<64x128xf32>
    %7 = arith.addf %0, %6 : vector<64x128xf32>
    %c0_7 = arith.constant 0 : index
    %c0_8 = arith.constant 0 : index
    %c1 = arith.constant 1 : index
    %c0_9 = arith.constant 0 : index
    %8 = vector.load %arg1[%c0_7, %c0_8, %c1, %c0_9] : memref<1x9x9x16xbf16, #tpu.memory_space<vmem>>, vector<1x8x8x16xbf16>
    %9 = vector.shape_cast %8 : vector<1x8x8x16xbf16> to vector<8x8x16xbf16>
    %10 = vector.shape_cast %9 : vector<8x8x16xbf16> to vector<64x16xbf16>
    %c1_10 = arith.constant 1 : index
    %c0_11 = arith.constant 0 : index
    %c0_12 = arith.constant 0 : index
    %11 = vector.load %arg2[%c1_10, %c0_11, %c0_12] : memref<4x16x128xbf16, #tpu.memory_space<vmem>>, vector<1x16x128xbf16>
    %12 = vector.shape_cast %11 : vector<1x16x128xbf16> to vector<16x128xbf16>
    %cst_13 = arith.constant dense<0.000000e+00> : vector<64x128xf32>
    %13 = tpu.matmul %10, %12, %cst_13 {dimension_numbers = #tpu.dot_dimension_numbers<[1], [0], [0], [1], [0, 0, 1, 1], [], []>} : vector<64x16xbf16>, vector<16x128xbf16>, vector<64x128xf32> -> vector<64x128xf32>
    %14 = arith.addf %7, %13 : vector<64x128xf32>
    %c0_14 = arith.constant 0 : index
    %c1_15 = arith.constant 1 : index
    %c0_16 = arith.constant 0 : index
    %c0_17 = arith.constant 0 : index
    %15 = vector.load %arg1[%c0_14, %c1_15, %c0_16, %c0_17] : memref<1x9x9x16xbf16, #tpu.memory_space<vmem>>, vector<1x8x8x16xbf16>
    %16 = vector.shape_cast %15 : vector<1x8x8x16xbf16> to vector<8x8x16xbf16>
    %17 = vector.shape_cast %16 : vector<8x8x16xbf16> to vector<64x16xbf16>
    %c2 = arith.constant 2 : index
    %c0_18 = arith.constant 0 : index
    %c0_19 = arith.constant 0 : index
    %18 = vector.load %arg2[%c2, %c0_18, %c0_19] : memref<4x16x128xbf16, #tpu.memory_space<vmem>>, vector<1x16x128xbf16>
    %19 = vector.shape_cast %18 : vector<1x16x128xbf16> to vector<16x128xbf16>
    %cst_20 = arith.constant dense<0.000000e+00> : vector<64x128xf32>
    %20 = tpu.matmul %17, %19, %cst_20 {dimension_numbers = #tpu.dot_dimension_numbers<[1], [0], [0], [1], [0, 0, 1, 1], [], []>} : vector<64x16xbf16>, vector<16x128xbf16>, vector<64x128xf32> -> vector<64x128xf32>
    %21 = arith.addf %14, %20 : vector<64x128xf32>
    %c0_21 = arith.constant 0 : index
    %c1_22 = arith.constant 1 : index
    %c1_23 = arith.constant 1 : index
    %c0_24 = arith.constant 0 : index
    %22 = vector.load %arg1[%c0_21, %c1_22, %c1_23, %c0_24] : memref<1x9x9x16xbf16, #tpu.memory_space<vmem>>, vector<1x8x8x16xbf16>
    %23 = vector.shape_cast %22 : vector<1x8x8x16xbf16> to vector<8x8x16xbf16>
    %24 = vector.shape_cast %23 : vector<8x8x16xbf16> to vector<64x16xbf16>
    %c3 = arith.constant 3 : index
    %c0_25 = arith.constant 0 : index
    %c0_26 = arith.constant 0 : index
    %25 = vector.load %arg2[%c3, %c0_25, %c0_26] : memref<4x16x128xbf16, #tpu.memory_space<vmem>>, vector<1x16x128xbf16>
    %26 = vector.shape_cast %25 : vector<1x16x128xbf16> to vector<16x128xbf16>
    %cst_27 = arith.constant dense<0.000000e+00> : vector<64x128xf32>
    %27 = tpu.matmul %24, %26, %cst_27 {dimension_numbers = #tpu.dot_dimension_numbers<[1], [0], [0], [1], [0, 0, 1, 1], [], []>} : vector<64x16xbf16>, vector<16x128xbf16>, vector<64x128xf32> -> vector<64x128xf32>
    %28 = arith.addf %21, %27 : vector<64x128xf32>
    %cst_28 = arith.constant dense<0.000000e+00> : vector<128xf32>
    %29 = vector.multi_reduction <add>, %28, %cst_28 [0] : vector<64x128xf32> to vector<128xf32>
    %30 = vector.shape_cast %29 : vector<128xf32> to vector<1x128xf32>
    %31 = arith.mulf %28, %28 : vector<64x128xf32>
    %cst_29 = arith.constant dense<0.000000e+00> : vector<128xf32>
    %32 = vector.multi_reduction <add>, %31, %cst_29 [0] : vector<64x128xf32> to vector<128xf32>
    %33 = vector.shape_cast %32 : vector<128xf32> to vector<1x128xf32>
    %34 = tpu.iota {dimensions = array<i32: 0>} : vector<8x128xi32>
    %c0_i32 = arith.constant 0 : i32
    %35 = vector.broadcast %c0_i32 : i32 to vector<8x128xi32>
    %36 = arith.cmpi eq, %34, %35 : vector<8x128xi32>
    %c1_i32 = arith.constant 1 : i32
    %37 = vector.broadcast %c1_i32 : i32 to vector<8x128xi32>
    %38 = arith.cmpi eq, %34, %37 : vector<8x128xi32>
    %cst_30 = arith.constant 0.000000e+00 : f32
    %39 = vector.shape_cast %33 : vector<1x128xf32> to vector<1x128xf32>
    %40 = vector.broadcast %39 : vector<1x128xf32> to vector<8x128xf32>
    %41 = vector.broadcast %cst_30 : f32 to vector<8x128xf32>
    %42 = arith.select %38, %40, %41 : vector<8x128xi1>, vector<8x128xf32>
    %43 = vector.shape_cast %30 : vector<1x128xf32> to vector<1x128xf32>
    %44 = vector.broadcast %43 : vector<1x128xf32> to vector<8x128xf32>
    %45 = arith.select %36, %44, %42 : vector<8x128xi1>, vector<8x128xf32>
    %c0_31 = arith.constant 0 : index
    %c0_32 = arith.constant 0 : index
    %c0_33 = arith.constant 0 : index
    %46 = vector.load %arg4[%c0_31, %c0_32, %c0_33] : memref<1x8x128xf32, #tpu.memory_space<vmem>>, vector<1x8x128xf32>
    %47 = vector.shape_cast %46 : vector<1x8x128xf32> to vector<8x128xf32>
    %48 = vector.shape_cast %45 : vector<8x128xf32> to vector<1x8x128xf32>
    tpu.vector_store %arg4[%c0_31, %c0_32, %c0_33], %48 {strides = array<i32>} : memref<1x8x128xf32, #tpu.memory_space<vmem>>, vector<1x8x128xf32>,
    %49 = arith.truncf %28 : vector<64x128xf32> to vector<64x128xbf16>
    %cst_34 = arith.constant 0.000000e+00 : bf16
    %50 = vector.broadcast %cst_34 : bf16 to vector<10x10x128xbf16>
    %c0_35 = arith.constant 0 : index
    %c0_36 = arith.constant 0 : index
    %c0_37 = arith.constant 0 : index
    %c0_38 = arith.constant 0 : index
    %51 = vector.load %arg3[%c0_35, %c0_36, %c0_37, %c0_38] : memref<1x10x10x128xbf16, #tpu.memory_space<vmem>>, vector<1x10x10x128xbf16>
    %52 = vector.shape_cast %51 : vector<1x10x10x128xbf16> to vector<10x10x128xbf16>
    %53 = vector.shape_cast %50 : vector<10x10x128xbf16> to vector<1x10x10x128xbf16>
    tpu.vector_store %arg3[%c0_35, %c0_36, %c0_37, %c0_38], %53 {strides = array<i32>} : memref<1x10x10x128xbf16, #tpu.memory_space<vmem>>, vector<1x10x10x128xbf16>,
    %54 = vector.shape_cast %49 : vector<64x128xbf16> to vector<8x8x128xbf16>
    %c0_39 = arith.constant 0 : index
    %c1_40 = arith.constant 1 : index
    %c1_41 = arith.constant 1 : index
    %c0_42 = arith.constant 0 : index
    %55 = vector.load %arg3[%c0_39, %c1_40, %c1_41, %c0_42] : memref<1x10x10x128xbf16, #tpu.memory_space<vmem>>, vector<1x8x8x128xbf16>
    %56 = vector.shape_cast %55 : vector<1x8x8x128xbf16> to vector<8x8x128xbf16>
    %57 = vector.shape_cast %54 : vector<8x8x128xbf16> to vector<1x8x8x128xbf16>
    tpu.vector_store %arg3[%c0_39, %c1_40, %c1_41, %c0_42], %57 {strides = array<i32>} : memref<1x10x10x128xbf16, #tpu.memory_space<vmem>>, vector<1x8x8x128xbf16>,
    return
  }
  func.func @transform_0(%arg0: i32) -> (i32, i32, i32, i32) {
    %c0_i32 = arith.constant 0 : i32
    %c0_i32_0 = arith.constant 0 : i32
    %c0_i32_1 = arith.constant 0 : i32
    %c0_i32_2 = arith.constant 0 : i32
    return %arg0, %c0_i32, %c0_i32_0, %c0_i32_1 : i32, i32, i32, i32
  }
  func.func @transform_1(%arg0: i32) -> (i32, i32, i32) {
    %c0_i32 = arith.constant 0 : i32
    %c0_i32_0 = arith.constant 0 : i32
    %c0_i32_1 = arith.constant 0 : i32
    %c0_i32_2 = arith.constant 0 : i32
    return %c0_i32, %c0_i32_0, %c0_i32_1 : i32, i32, i32
  }
  func.func @transform_2(%arg0: i32) -> (i32, i32, i32, i32) {
    %c0_i32 = arith.constant 0 : i32
    %c0_i32_0 = arith.constant 0 : i32
    %c0_i32_1 = arith.constant 0 : i32
    %c0_i32_2 = arith.constant 0 : i32
    return %arg0, %c0_i32, %c0_i32_0, %c0_i32_1 : i32, i32, i32, i32
  }
  func.func @transform_3(%arg0: i32) -> (i32, i32, i32) {
    %c0_i32 = arith.constant 0 : i32
    %c0_i32_0 = arith.constant 0 : i32
    %c0_i32_1 = arith.constant 0 : i32
    return %arg0, %c0_i32, %c0_i32_0 : i32, i32, i32
  }
}

module attributes {stable_mosaic.version = 11 : i64} {
  func.func @kernel(%arg0: i32, %arg1: memref<1x10x10x128xbf16, #tpu.memory_space<vmem>>, %arg2: memref<9x128x128xbf16, #tpu.memory_space<vmem>>, %arg3: memref<1x128xf32, #tpu.memory_space<vmem>>, %arg4: memref<1x128xf32, #tpu.memory_space<vmem>>, %arg5: memref<1x64x128xbf16, #tpu.memory_space<vmem>>, %arg6: memref<1x8x128xf32, #tpu.memory_space<vmem>>) attributes {dimension_semantics = [#tpu.dimension_semantics<parallel>], iteration_bounds = array<i64: 2>, scalar_prefetch = 0 : i64, scratch_operands = 0 : i64, tpu.core_type = #tpu.core_type<tc>, window_params = [{transform_indices = @transform_0, window_bounds = array<i64: 1, 10, 10, 128>}, {pipeline_mode = #tpu.pipeline_mode<synchronous>, transform_indices = @transform_1, window_bounds = array<i64: 9, 128, 128>}, {pipeline_mode = #tpu.pipeline_mode<synchronous>, transform_indices = @transform_2, window_bounds = array<i64: 1, 128>}, {pipeline_mode = #tpu.pipeline_mode<synchronous>, transform_indices = @transform_3, window_bounds = array<i64: 1, 128>}, {transform_indices = @transform_4, window_bounds = array<i64: 1, 64, 128>}, {transform_indices = @transform_5, window_bounds = array<i64: 1, 8, 128>}]} {
    %c0 = arith.constant 0 : index
    %c0_0 = arith.constant 0 : index
    %0 = vector.load %arg3[%c0, %c0_0] : memref<1x128xf32, #tpu.memory_space<vmem>>, vector<1x128xf32>
    %c0_1 = arith.constant 0 : index
    %c0_2 = arith.constant 0 : index
    %1 = vector.load %arg4[%c0_1, %c0_2] : memref<1x128xf32, #tpu.memory_space<vmem>>, vector<1x128xf32>
    %2 = tpu.iota {dimensions = array<i32: 0>} : vector<8x8x1xi32>
    %3 = tpu.iota {dimensions = array<i32: 1>} : vector<8x8x1xi32>
    %cst = arith.constant 0.000000e+00 : f32
    %4 = vector.broadcast %cst : f32 to vector<64x128xf32>
    %c0_3 = arith.constant 0 : index
    %c0_4 = arith.constant 0 : index
    %c0_5 = arith.constant 0 : index
    %c0_6 = arith.constant 0 : index
    %5 = vector.load %arg1[%c0_3, %c0_4, %c0_5, %c0_6] : memref<1x10x10x128xbf16, #tpu.memory_space<vmem>>, vector<1x8x8x128xbf16>
    %6 = vector.shape_cast %5 : vector<1x8x8x128xbf16> to vector<8x8x128xbf16>
    %7 = arith.extf %6 : vector<8x8x128xbf16> to vector<8x8x128xf32>
    %8 = vector.shape_cast %0 : vector<1x128xf32> to vector<1x1x128xf32>
    %9 = vector.broadcast %8 : vector<1x1x128xf32> to vector<8x8x128xf32>
    %10 = arith.mulf %7, %9 : vector<8x8x128xf32>
    %11 = vector.shape_cast %1 : vector<1x128xf32> to vector<1x1x128xf32>
    %12 = vector.broadcast %11 : vector<1x1x128xf32> to vector<8x8x128xf32>
    %13 = arith.addf %10, %12 : vector<8x8x128xf32>
    %cst_7 = arith.constant 0.000000e+00 : f32
    %14 = vector.broadcast %cst_7 : f32 to vector<8x8x128xf32>
    %15 = arith.maximumf %13, %14 : vector<8x8x128xf32>
    %c0_i32 = arith.constant 0 : i32
    %16 = vector.broadcast %c0_i32 : i32 to vector<8x8x1xi32>
    %17 = arith.addi %2, %16 : vector<8x8x1xi32>
    %c1_i32 = arith.constant 1 : i32
    %18 = vector.broadcast %c1_i32 : i32 to vector<8x8x1xi32>
    %19 = arith.cmpi sge, %17, %18 : vector<8x8x1xi32>
    %c0_i32_8 = arith.constant 0 : i32
    %20 = vector.broadcast %c0_i32_8 : i32 to vector<8x8x1xi32>
    %21 = arith.addi %2, %20 : vector<8x8x1xi32>
    %c8_i32 = arith.constant 8 : i32
    %22 = vector.broadcast %c8_i32 : i32 to vector<8x8x1xi32>
    %23 = arith.cmpi sle, %21, %22 : vector<8x8x1xi32>
    %24 = arith.andi %19, %23 : vector<8x8x1xi1>
    %c0_i32_9 = arith.constant 0 : i32
    %25 = vector.broadcast %c0_i32_9 : i32 to vector<8x8x1xi32>
    %26 = arith.addi %3, %25 : vector<8x8x1xi32>
    %c1_i32_10 = arith.constant 1 : i32
    %27 = vector.broadcast %c1_i32_10 : i32 to vector<8x8x1xi32>
    %28 = arith.cmpi sge, %26, %27 : vector<8x8x1xi32>
    %29 = arith.andi %24, %28 : vector<8x8x1xi1>
    %c0_i32_11 = arith.constant 0 : i32
    %30 = vector.broadcast %c0_i32_11 : i32 to vector<8x8x1xi32>
    %31 = arith.addi %3, %30 : vector<8x8x1xi32>
    %c8_i32_12 = arith.constant 8 : i32
    %32 = vector.broadcast %c8_i32_12 : i32 to vector<8x8x1xi32>
    %33 = arith.cmpi sle, %31, %32 : vector<8x8x1xi32>
    %34 = arith.andi %29, %33 : vector<8x8x1xi1>
    %cst_13 = arith.constant 0.000000e+00 : f32
    %35 = vector.shape_cast %34 : vector<8x8x1xi1> to vector<8x8x1xi1>
    %36 = vector.broadcast %35 : vector<8x8x1xi1> to vector<8x8x128xi1>
    %37 = vector.broadcast %cst_13 : f32 to vector<8x8x128xf32>
    %38 = arith.select %36, %15, %37 : vector<8x8x128xi1>, vector<8x8x128xf32>
    %39 = arith.truncf %38 : vector<8x8x128xf32> to vector<8x8x128xbf16>
    %40 = vector.shape_cast %39 : vector<8x8x128xbf16> to vector<64x128xbf16>
    %c0_14 = arith.constant 0 : index
    %c0_15 = arith.constant 0 : index
    %c0_16 = arith.constant 0 : index
    %41 = vector.load %arg2[%c0_14, %c0_15, %c0_16] : memref<9x128x128xbf16, #tpu.memory_space<vmem>>, vector<1x128x128xbf16>
    %42 = vector.shape_cast %41 : vector<1x128x128xbf16> to vector<128x128xbf16>
    %cst_17 = arith.constant dense<0.000000e+00> : vector<64x128xf32>
    %43 = tpu.matmul %40, %42, %cst_17 {dimension_numbers = #tpu.dot_dimension_numbers<[1], [0], [0], [1], [0, 0, 1, 1], [], []>} : vector<64x128xbf16>, vector<128x128xbf16>, vector<64x128xf32> -> vector<64x128xf32>
    %44 = arith.addf %4, %43 : vector<64x128xf32>
    %c0_18 = arith.constant 0 : index
    %c0_19 = arith.constant 0 : index
    %c1 = arith.constant 1 : index
    %c0_20 = arith.constant 0 : index
    %45 = vector.load %arg1[%c0_18, %c0_19, %c1, %c0_20] : memref<1x10x10x128xbf16, #tpu.memory_space<vmem>>, vector<1x8x8x128xbf16>
    %46 = vector.shape_cast %45 : vector<1x8x8x128xbf16> to vector<8x8x128xbf16>
    %47 = arith.extf %46 : vector<8x8x128xbf16> to vector<8x8x128xf32>
    %48 = vector.shape_cast %0 : vector<1x128xf32> to vector<1x1x128xf32>
    %49 = vector.broadcast %48 : vector<1x1x128xf32> to vector<8x8x128xf32>
    %50 = arith.mulf %47, %49 : vector<8x8x128xf32>
    %51 = vector.shape_cast %1 : vector<1x128xf32> to vector<1x1x128xf32>
    %52 = vector.broadcast %51 : vector<1x1x128xf32> to vector<8x8x128xf32>
    %53 = arith.addf %50, %52 : vector<8x8x128xf32>
    %cst_21 = arith.constant 0.000000e+00 : f32
    %54 = vector.broadcast %cst_21 : f32 to vector<8x8x128xf32>
    %55 = arith.maximumf %53, %54 : vector<8x8x128xf32>
    %c0_i32_22 = arith.constant 0 : i32
    %56 = vector.broadcast %c0_i32_22 : i32 to vector<8x8x1xi32>
    %57 = arith.addi %2, %56 : vector<8x8x1xi32>
    %c1_i32_23 = arith.constant 1 : i32
    %58 = vector.broadcast %c1_i32_23 : i32 to vector<8x8x1xi32>
    %59 = arith.cmpi sge, %57, %58 : vector<8x8x1xi32>
    %c0_i32_24 = arith.constant 0 : i32
    %60 = vector.broadcast %c0_i32_24 : i32 to vector<8x8x1xi32>
    %61 = arith.addi %2, %60 : vector<8x8x1xi32>
    %c8_i32_25 = arith.constant 8 : i32
    %62 = vector.broadcast %c8_i32_25 : i32 to vector<8x8x1xi32>
    %63 = arith.cmpi sle, %61, %62 : vector<8x8x1xi32>
    %64 = arith.andi %59, %63 : vector<8x8x1xi1>
    %c1_i32_26 = arith.constant 1 : i32
    %65 = vector.broadcast %c1_i32_26 : i32 to vector<8x8x1xi32>
    %66 = arith.addi %3, %65 : vector<8x8x1xi32>
    %c1_i32_27 = arith.constant 1 : i32
    %67 = vector.broadcast %c1_i32_27 : i32 to vector<8x8x1xi32>
    %68 = arith.cmpi sge, %66, %67 : vector<8x8x1xi32>
    %69 = arith.andi %64, %68 : vector<8x8x1xi1>
    %c1_i32_28 = arith.constant 1 : i32
    %70 = vector.broadcast %c1_i32_28 : i32 to vector<8x8x1xi32>
    %71 = arith.addi %3, %70 : vector<8x8x1xi32>
    %c8_i32_29 = arith.constant 8 : i32
    %72 = vector.broadcast %c8_i32_29 : i32 to vector<8x8x1xi32>
    %73 = arith.cmpi sle, %71, %72 : vector<8x8x1xi32>
    %74 = arith.andi %69, %73 : vector<8x8x1xi1>
    %cst_30 = arith.constant 0.000000e+00 : f32
    %75 = vector.shape_cast %74 : vector<8x8x1xi1> to vector<8x8x1xi1>
    %76 = vector.broadcast %75 : vector<8x8x1xi1> to vector<8x8x128xi1>
    %77 = vector.broadcast %cst_30 : f32 to vector<8x8x128xf32>
    %78 = arith.select %76, %55, %77 : vector<8x8x128xi1>, vector<8x8x128xf32>
    %79 = arith.truncf %78 : vector<8x8x128xf32> to vector<8x8x128xbf16>
    %80 = vector.shape_cast %79 : vector<8x8x128xbf16> to vector<64x128xbf16>
    %c1_31 = arith.constant 1 : index
    %c0_32 = arith.constant 0 : index
    %c0_33 = arith.constant 0 : index
    %81 = vector.load %arg2[%c1_31, %c0_32, %c0_33] : memref<9x128x128xbf16, #tpu.memory_space<vmem>>, vector<1x128x128xbf16>
    %82 = vector.shape_cast %81 : vector<1x128x128xbf16> to vector<128x128xbf16>
    %cst_34 = arith.constant dense<0.000000e+00> : vector<64x128xf32>
    %83 = tpu.matmul %80, %82, %cst_34 {dimension_numbers = #tpu.dot_dimension_numbers<[1], [0], [0], [1], [0, 0, 1, 1], [], []>} : vector<64x128xbf16>, vector<128x128xbf16>, vector<64x128xf32> -> vector<64x128xf32>
    %84 = arith.addf %44, %83 : vector<64x128xf32>
    %c0_35 = arith.constant 0 : index
    %c0_36 = arith.constant 0 : index
    %c2 = arith.constant 2 : index
    %c0_37 = arith.constant 0 : index
    %85 = vector.load %arg1[%c0_35, %c0_36, %c2, %c0_37] : memref<1x10x10x128xbf16, #tpu.memory_space<vmem>>, vector<1x8x8x128xbf16>
    %86 = vector.shape_cast %85 : vector<1x8x8x128xbf16> to vector<8x8x128xbf16>
    %87 = arith.extf %86 : vector<8x8x128xbf16> to vector<8x8x128xf32>
    %88 = vector.shape_cast %0 : vector<1x128xf32> to vector<1x1x128xf32>
    %89 = vector.broadcast %88 : vector<1x1x128xf32> to vector<8x8x128xf32>
    %90 = arith.mulf %87, %89 : vector<8x8x128xf32>
    %91 = vector.shape_cast %1 : vector<1x128xf32> to vector<1x1x128xf32>
    %92 = vector.broadcast %91 : vector<1x1x128xf32> to vector<8x8x128xf32>
    %93 = arith.addf %90, %92 : vector<8x8x128xf32>
    %cst_38 = arith.constant 0.000000e+00 : f32
    %94 = vector.broadcast %cst_38 : f32 to vector<8x8x128xf32>
    %95 = arith.maximumf %93, %94 : vector<8x8x128xf32>
    %c0_i32_39 = arith.constant 0 : i32
    %96 = vector.broadcast %c0_i32_39 : i32 to vector<8x8x1xi32>
    %97 = arith.addi %2, %96 : vector<8x8x1xi32>
    %c1_i32_40 = arith.constant 1 : i32
    %98 = vector.broadcast %c1_i32_40 : i32 to vector<8x8x1xi32>
    %99 = arith.cmpi sge, %97, %98 : vector<8x8x1xi32>
    %c0_i32_41 = arith.constant 0 : i32
    %100 = vector.broadcast %c0_i32_41 : i32 to vector<8x8x1xi32>
    %101 = arith.addi %2, %100 : vector<8x8x1xi32>
    %c8_i32_42 = arith.constant 8 : i32
    %102 = vector.broadcast %c8_i32_42 : i32 to vector<8x8x1xi32>
    %103 = arith.cmpi sle, %101, %102 : vector<8x8x1xi32>
    %104 = arith.andi %99, %103 : vector<8x8x1xi1>
    %c2_i32 = arith.constant 2 : i32
    %105 = vector.broadcast %c2_i32 : i32 to vector<8x8x1xi32>
    %106 = arith.addi %3, %105 : vector<8x8x1xi32>
    %c1_i32_43 = arith.constant 1 : i32
    %107 = vector.broadcast %c1_i32_43 : i32 to vector<8x8x1xi32>
    %108 = arith.cmpi sge, %106, %107 : vector<8x8x1xi32>
    %109 = arith.andi %104, %108 : vector<8x8x1xi1>
    %c2_i32_44 = arith.constant 2 : i32
    %110 = vector.broadcast %c2_i32_44 : i32 to vector<8x8x1xi32>
    %111 = arith.addi %3, %110 : vector<8x8x1xi32>
    %c8_i32_45 = arith.constant 8 : i32
    %112 = vector.broadcast %c8_i32_45 : i32 to vector<8x8x1xi32>
    %113 = arith.cmpi sle, %111, %112 : vector<8x8x1xi32>
    %114 = arith.andi %109, %113 : vector<8x8x1xi1>
    %cst_46 = arith.constant 0.000000e+00 : f32
    %115 = vector.shape_cast %114 : vector<8x8x1xi1> to vector<8x8x1xi1>
    %116 = vector.broadcast %115 : vector<8x8x1xi1> to vector<8x8x128xi1>
    %117 = vector.broadcast %cst_46 : f32 to vector<8x8x128xf32>
    %118 = arith.select %116, %95, %117 : vector<8x8x128xi1>, vector<8x8x128xf32>
    %119 = arith.truncf %118 : vector<8x8x128xf32> to vector<8x8x128xbf16>
    %120 = vector.shape_cast %119 : vector<8x8x128xbf16> to vector<64x128xbf16>
    %c2_47 = arith.constant 2 : index
    %c0_48 = arith.constant 0 : index
    %c0_49 = arith.constant 0 : index
    %121 = vector.load %arg2[%c2_47, %c0_48, %c0_49] : memref<9x128x128xbf16, #tpu.memory_space<vmem>>, vector<1x128x128xbf16>
    %122 = vector.shape_cast %121 : vector<1x128x128xbf16> to vector<128x128xbf16>
    %cst_50 = arith.constant dense<0.000000e+00> : vector<64x128xf32>
    %123 = tpu.matmul %120, %122, %cst_50 {dimension_numbers = #tpu.dot_dimension_numbers<[1], [0], [0], [1], [0, 0, 1, 1], [], []>} : vector<64x128xbf16>, vector<128x128xbf16>, vector<64x128xf32> -> vector<64x128xf32>
    %124 = arith.addf %84, %123 : vector<64x128xf32>
    %c0_51 = arith.constant 0 : index
    %c1_52 = arith.constant 1 : index
    %c0_53 = arith.constant 0 : index
    %c0_54 = arith.constant 0 : index
    %125 = vector.load %arg1[%c0_51, %c1_52, %c0_53, %c0_54] : memref<1x10x10x128xbf16, #tpu.memory_space<vmem>>, vector<1x8x8x128xbf16>
    %126 = vector.shape_cast %125 : vector<1x8x8x128xbf16> to vector<8x8x128xbf16>
    %127 = arith.extf %126 : vector<8x8x128xbf16> to vector<8x8x128xf32>
    %128 = vector.shape_cast %0 : vector<1x128xf32> to vector<1x1x128xf32>
    %129 = vector.broadcast %128 : vector<1x1x128xf32> to vector<8x8x128xf32>
    %130 = arith.mulf %127, %129 : vector<8x8x128xf32>
    %131 = vector.shape_cast %1 : vector<1x128xf32> to vector<1x1x128xf32>
    %132 = vector.broadcast %131 : vector<1x1x128xf32> to vector<8x8x128xf32>
    %133 = arith.addf %130, %132 : vector<8x8x128xf32>
    %cst_55 = arith.constant 0.000000e+00 : f32
    %134 = vector.broadcast %cst_55 : f32 to vector<8x8x128xf32>
    %135 = arith.maximumf %133, %134 : vector<8x8x128xf32>
    %c1_i32_56 = arith.constant 1 : i32
    %136 = vector.broadcast %c1_i32_56 : i32 to vector<8x8x1xi32>
    %137 = arith.addi %2, %136 : vector<8x8x1xi32>
    %c1_i32_57 = arith.constant 1 : i32
    %138 = vector.broadcast %c1_i32_57 : i32 to vector<8x8x1xi32>
    %139 = arith.cmpi sge, %137, %138 : vector<8x8x1xi32>
    %c1_i32_58 = arith.constant 1 : i32
    %140 = vector.broadcast %c1_i32_58 : i32 to vector<8x8x1xi32>
    %141 = arith.addi %2, %140 : vector<8x8x1xi32>
    %c8_i32_59 = arith.constant 8 : i32
    %142 = vector.broadcast %c8_i32_59 : i32 to vector<8x8x1xi32>
    %143 = arith.cmpi sle, %141, %142 : vector<8x8x1xi32>
    %144 = arith.andi %139, %143 : vector<8x8x1xi1>
    %c0_i32_60 = arith.constant 0 : i32
    %145 = vector.broadcast %c0_i32_60 : i32 to vector<8x8x1xi32>
    %146 = arith.addi %3, %145 : vector<8x8x1xi32>
    %c1_i32_61 = arith.constant 1 : i32
    %147 = vector.broadcast %c1_i32_61 : i32 to vector<8x8x1xi32>
    %148 = arith.cmpi sge, %146, %147 : vector<8x8x1xi32>
    %149 = arith.andi %144, %148 : vector<8x8x1xi1>
    %c0_i32_62 = arith.constant 0 : i32
    %150 = vector.broadcast %c0_i32_62 : i32 to vector<8x8x1xi32>
    %151 = arith.addi %3, %150 : vector<8x8x1xi32>
    %c8_i32_63 = arith.constant 8 : i32
    %152 = vector.broadcast %c8_i32_63 : i32 to vector<8x8x1xi32>
    %153 = arith.cmpi sle, %151, %152 : vector<8x8x1xi32>
    %154 = arith.andi %149, %153 : vector<8x8x1xi1>
    %cst_64 = arith.constant 0.000000e+00 : f32
    %155 = vector.shape_cast %154 : vector<8x8x1xi1> to vector<8x8x1xi1>
    %156 = vector.broadcast %155 : vector<8x8x1xi1> to vector<8x8x128xi1>
    %157 = vector.broadcast %cst_64 : f32 to vector<8x8x128xf32>
    %158 = arith.select %156, %135, %157 : vector<8x8x128xi1>, vector<8x8x128xf32>
    %159 = arith.truncf %158 : vector<8x8x128xf32> to vector<8x8x128xbf16>
    %160 = vector.shape_cast %159 : vector<8x8x128xbf16> to vector<64x128xbf16>
    %c3 = arith.constant 3 : index
    %c0_65 = arith.constant 0 : index
    %c0_66 = arith.constant 0 : index
    %161 = vector.load %arg2[%c3, %c0_65, %c0_66] : memref<9x128x128xbf16, #tpu.memory_space<vmem>>, vector<1x128x128xbf16>
    %162 = vector.shape_cast %161 : vector<1x128x128xbf16> to vector<128x128xbf16>
    %cst_67 = arith.constant dense<0.000000e+00> : vector<64x128xf32>
    %163 = tpu.matmul %160, %162, %cst_67 {dimension_numbers = #tpu.dot_dimension_numbers<[1], [0], [0], [1], [0, 0, 1, 1], [], []>} : vector<64x128xbf16>, vector<128x128xbf16>, vector<64x128xf32> -> vector<64x128xf32>
    %164 = arith.addf %124, %163 : vector<64x128xf32>
    %c0_68 = arith.constant 0 : index
    %c1_69 = arith.constant 1 : index
    %c1_70 = arith.constant 1 : index
    %c0_71 = arith.constant 0 : index
    %165 = vector.load %arg1[%c0_68, %c1_69, %c1_70, %c0_71] : memref<1x10x10x128xbf16, #tpu.memory_space<vmem>>, vector<1x8x8x128xbf16>
    %166 = vector.shape_cast %165 : vector<1x8x8x128xbf16> to vector<8x8x128xbf16>
    %167 = arith.extf %166 : vector<8x8x128xbf16> to vector<8x8x128xf32>
    %168 = vector.shape_cast %0 : vector<1x128xf32> to vector<1x1x128xf32>
    %169 = vector.broadcast %168 : vector<1x1x128xf32> to vector<8x8x128xf32>
    %170 = arith.mulf %167, %169 : vector<8x8x128xf32>
    %171 = vector.shape_cast %1 : vector<1x128xf32> to vector<1x1x128xf32>
    %172 = vector.broadcast %171 : vector<1x1x128xf32> to vector<8x8x128xf32>
    %173 = arith.addf %170, %172 : vector<8x8x128xf32>
    %cst_72 = arith.constant 0.000000e+00 : f32
    %174 = vector.broadcast %cst_72 : f32 to vector<8x8x128xf32>
    %175 = arith.maximumf %173, %174 : vector<8x8x128xf32>
    %c1_i32_73 = arith.constant 1 : i32
    %176 = vector.broadcast %c1_i32_73 : i32 to vector<8x8x1xi32>
    %177 = arith.addi %2, %176 : vector<8x8x1xi32>
    %c1_i32_74 = arith.constant 1 : i32
    %178 = vector.broadcast %c1_i32_74 : i32 to vector<8x8x1xi32>
    %179 = arith.cmpi sge, %177, %178 : vector<8x8x1xi32>
    %c1_i32_75 = arith.constant 1 : i32
    %180 = vector.broadcast %c1_i32_75 : i32 to vector<8x8x1xi32>
    %181 = arith.addi %2, %180 : vector<8x8x1xi32>
    %c8_i32_76 = arith.constant 8 : i32
    %182 = vector.broadcast %c8_i32_76 : i32 to vector<8x8x1xi32>
    %183 = arith.cmpi sle, %181, %182 : vector<8x8x1xi32>
    %184 = arith.andi %179, %183 : vector<8x8x1xi1>
    %c1_i32_77 = arith.constant 1 : i32
    %185 = vector.broadcast %c1_i32_77 : i32 to vector<8x8x1xi32>
    %186 = arith.addi %3, %185 : vector<8x8x1xi32>
    %c1_i32_78 = arith.constant 1 : i32
    %187 = vector.broadcast %c1_i32_78 : i32 to vector<8x8x1xi32>
    %188 = arith.cmpi sge, %186, %187 : vector<8x8x1xi32>
    %189 = arith.andi %184, %188 : vector<8x8x1xi1>
    %c1_i32_79 = arith.constant 1 : i32
    %190 = vector.broadcast %c1_i32_79 : i32 to vector<8x8x1xi32>
    %191 = arith.addi %3, %190 : vector<8x8x1xi32>
    %c8_i32_80 = arith.constant 8 : i32
    %192 = vector.broadcast %c8_i32_80 : i32 to vector<8x8x1xi32>
    %193 = arith.cmpi sle, %191, %192 : vector<8x8x1xi32>
    %194 = arith.andi %189, %193 : vector<8x8x1xi1>
    %cst_81 = arith.constant 0.000000e+00 : f32
    %195 = vector.shape_cast %194 : vector<8x8x1xi1> to vector<8x8x1xi1>
    %196 = vector.broadcast %195 : vector<8x8x1xi1> to vector<8x8x128xi1>
    %197 = vector.broadcast %cst_81 : f32 to vector<8x8x128xf32>
    %198 = arith.select %196, %175, %197 : vector<8x8x128xi1>, vector<8x8x128xf32>
    %199 = arith.truncf %198 : vector<8x8x128xf32> to vector<8x8x128xbf16>
    %200 = vector.shape_cast %199 : vector<8x8x128xbf16> to vector<64x128xbf16>
    %c4 = arith.constant 4 : index
    %c0_82 = arith.constant 0 : index
    %c0_83 = arith.constant 0 : index
    %201 = vector.load %arg2[%c4, %c0_82, %c0_83] : memref<9x128x128xbf16, #tpu.memory_space<vmem>>, vector<1x128x128xbf16>
    %202 = vector.shape_cast %201 : vector<1x128x128xbf16> to vector<128x128xbf16>
    %cst_84 = arith.constant dense<0.000000e+00> : vector<64x128xf32>
    %203 = tpu.matmul %200, %202, %cst_84 {dimension_numbers = #tpu.dot_dimension_numbers<[1], [0], [0], [1], [0, 0, 1, 1], [], []>} : vector<64x128xbf16>, vector<128x128xbf16>, vector<64x128xf32> -> vector<64x128xf32>
    %204 = arith.addf %164, %203 : vector<64x128xf32>
    %c0_85 = arith.constant 0 : index
    %c1_86 = arith.constant 1 : index
    %c2_87 = arith.constant 2 : index
    %c0_88 = arith.constant 0 : index
    %205 = vector.load %arg1[%c0_85, %c1_86, %c2_87, %c0_88] : memref<1x10x10x128xbf16, #tpu.memory_space<vmem>>, vector<1x8x8x128xbf16>
    %206 = vector.shape_cast %205 : vector<1x8x8x128xbf16> to vector<8x8x128xbf16>
    %207 = arith.extf %206 : vector<8x8x128xbf16> to vector<8x8x128xf32>
    %208 = vector.shape_cast %0 : vector<1x128xf32> to vector<1x1x128xf32>
    %209 = vector.broadcast %208 : vector<1x1x128xf32> to vector<8x8x128xf32>
    %210 = arith.mulf %207, %209 : vector<8x8x128xf32>
    %211 = vector.shape_cast %1 : vector<1x128xf32> to vector<1x1x128xf32>
    %212 = vector.broadcast %211 : vector<1x1x128xf32> to vector<8x8x128xf32>
    %213 = arith.addf %210, %212 : vector<8x8x128xf32>
    %cst_89 = arith.constant 0.000000e+00 : f32
    %214 = vector.broadcast %cst_89 : f32 to vector<8x8x128xf32>
    %215 = arith.maximumf %213, %214 : vector<8x8x128xf32>
    %c1_i32_90 = arith.constant 1 : i32
    %216 = vector.broadcast %c1_i32_90 : i32 to vector<8x8x1xi32>
    %217 = arith.addi %2, %216 : vector<8x8x1xi32>
    %c1_i32_91 = arith.constant 1 : i32
    %218 = vector.broadcast %c1_i32_91 : i32 to vector<8x8x1xi32>
    %219 = arith.cmpi sge, %217, %218 : vector<8x8x1xi32>
    %c1_i32_92 = arith.constant 1 : i32
    %220 = vector.broadcast %c1_i32_92 : i32 to vector<8x8x1xi32>
    %221 = arith.addi %2, %220 : vector<8x8x1xi32>
    %c8_i32_93 = arith.constant 8 : i32
    %222 = vector.broadcast %c8_i32_93 : i32 to vector<8x8x1xi32>
    %223 = arith.cmpi sle, %221, %222 : vector<8x8x1xi32>
    %224 = arith.andi %219, %223 : vector<8x8x1xi1>
    %c2_i32_94 = arith.constant 2 : i32
    %225 = vector.broadcast %c2_i32_94 : i32 to vector<8x8x1xi32>
    %226 = arith.addi %3, %225 : vector<8x8x1xi32>
    %c1_i32_95 = arith.constant 1 : i32
    %227 = vector.broadcast %c1_i32_95 : i32 to vector<8x8x1xi32>
    %228 = arith.cmpi sge, %226, %227 : vector<8x8x1xi32>
    %229 = arith.andi %224, %228 : vector<8x8x1xi1>
    %c2_i32_96 = arith.constant 2 : i32
    %230 = vector.broadcast %c2_i32_96 : i32 to vector<8x8x1xi32>
    %231 = arith.addi %3, %230 : vector<8x8x1xi32>
    %c8_i32_97 = arith.constant 8 : i32
    %232 = vector.broadcast %c8_i32_97 : i32 to vector<8x8x1xi32>
    %233 = arith.cmpi sle, %231, %232 : vector<8x8x1xi32>
    %234 = arith.andi %229, %233 : vector<8x8x1xi1>
    %cst_98 = arith.constant 0.000000e+00 : f32
    %235 = vector.shape_cast %234 : vector<8x8x1xi1> to vector<8x8x1xi1>
    %236 = vector.broadcast %235 : vector<8x8x1xi1> to vector<8x8x128xi1>
    %237 = vector.broadcast %cst_98 : f32 to vector<8x8x128xf32>
    %238 = arith.select %236, %215, %237 : vector<8x8x128xi1>, vector<8x8x128xf32>
    %239 = arith.truncf %238 : vector<8x8x128xf32> to vector<8x8x128xbf16>
    %240 = vector.shape_cast %239 : vector<8x8x128xbf16> to vector<64x128xbf16>
    %c5 = arith.constant 5 : index
    %c0_99 = arith.constant 0 : index
    %c0_100 = arith.constant 0 : index
    %241 = vector.load %arg2[%c5, %c0_99, %c0_100] : memref<9x128x128xbf16, #tpu.memory_space<vmem>>, vector<1x128x128xbf16>
    %242 = vector.shape_cast %241 : vector<1x128x128xbf16> to vector<128x128xbf16>
    %cst_101 = arith.constant dense<0.000000e+00> : vector<64x128xf32>
    %243 = tpu.matmul %240, %242, %cst_101 {dimension_numbers = #tpu.dot_dimension_numbers<[1], [0], [0], [1], [0, 0, 1, 1], [], []>} : vector<64x128xbf16>, vector<128x128xbf16>, vector<64x128xf32> -> vector<64x128xf32>
    %244 = arith.addf %204, %243 : vector<64x128xf32>
    %c0_102 = arith.constant 0 : index
    %c2_103 = arith.constant 2 : index
    %c0_104 = arith.constant 0 : index
    %c0_105 = arith.constant 0 : index
    %245 = vector.load %arg1[%c0_102, %c2_103, %c0_104, %c0_105] : memref<1x10x10x128xbf16, #tpu.memory_space<vmem>>, vector<1x8x8x128xbf16>
    %246 = vector.shape_cast %245 : vector<1x8x8x128xbf16> to vector<8x8x128xbf16>
    %247 = arith.extf %246 : vector<8x8x128xbf16> to vector<8x8x128xf32>
    %248 = vector.shape_cast %0 : vector<1x128xf32> to vector<1x1x128xf32>
    %249 = vector.broadcast %248 : vector<1x1x128xf32> to vector<8x8x128xf32>
    %250 = arith.mulf %247, %249 : vector<8x8x128xf32>
    %251 = vector.shape_cast %1 : vector<1x128xf32> to vector<1x1x128xf32>
    %252 = vector.broadcast %251 : vector<1x1x128xf32> to vector<8x8x128xf32>
    %253 = arith.addf %250, %252 : vector<8x8x128xf32>
    %cst_106 = arith.constant 0.000000e+00 : f32
    %254 = vector.broadcast %cst_106 : f32 to vector<8x8x128xf32>
    %255 = arith.maximumf %253, %254 : vector<8x8x128xf32>
    %c2_i32_107 = arith.constant 2 : i32
    %256 = vector.broadcast %c2_i32_107 : i32 to vector<8x8x1xi32>
    %257 = arith.addi %2, %256 : vector<8x8x1xi32>
    %c1_i32_108 = arith.constant 1 : i32
    %258 = vector.broadcast %c1_i32_108 : i32 to vector<8x8x1xi32>
    %259 = arith.cmpi sge, %257, %258 : vector<8x8x1xi32>
    %c2_i32_109 = arith.constant 2 : i32
    %260 = vector.broadcast %c2_i32_109 : i32 to vector<8x8x1xi32>
    %261 = arith.addi %2, %260 : vector<8x8x1xi32>
    %c8_i32_110 = arith.constant 8 : i32
    %262 = vector.broadcast %c8_i32_110 : i32 to vector<8x8x1xi32>
    %263 = arith.cmpi sle, %261, %262 : vector<8x8x1xi32>
    %264 = arith.andi %259, %263 : vector<8x8x1xi1>
    %c0_i32_111 = arith.constant 0 : i32
    %265 = vector.broadcast %c0_i32_111 : i32 to vector<8x8x1xi32>
    %266 = arith.addi %3, %265 : vector<8x8x1xi32>
    %c1_i32_112 = arith.constant 1 : i32
    %267 = vector.broadcast %c1_i32_112 : i32 to vector<8x8x1xi32>
    %268 = arith.cmpi sge, %266, %267 : vector<8x8x1xi32>
    %269 = arith.andi %264, %268 : vector<8x8x1xi1>
    %c0_i32_113 = arith.constant 0 : i32
    %270 = vector.broadcast %c0_i32_113 : i32 to vector<8x8x1xi32>
    %271 = arith.addi %3, %270 : vector<8x8x1xi32>
    %c8_i32_114 = arith.constant 8 : i32
    %272 = vector.broadcast %c8_i32_114 : i32 to vector<8x8x1xi32>
    %273 = arith.cmpi sle, %271, %272 : vector<8x8x1xi32>
    %274 = arith.andi %269, %273 : vector<8x8x1xi1>
    %cst_115 = arith.constant 0.000000e+00 : f32
    %275 = vector.shape_cast %274 : vector<8x8x1xi1> to vector<8x8x1xi1>
    %276 = vector.broadcast %275 : vector<8x8x1xi1> to vector<8x8x128xi1>
    %277 = vector.broadcast %cst_115 : f32 to vector<8x8x128xf32>
    %278 = arith.select %276, %255, %277 : vector<8x8x128xi1>, vector<8x8x128xf32>
    %279 = arith.truncf %278 : vector<8x8x128xf32> to vector<8x8x128xbf16>
    %280 = vector.shape_cast %279 : vector<8x8x128xbf16> to vector<64x128xbf16>
    %c6 = arith.constant 6 : index
    %c0_116 = arith.constant 0 : index
    %c0_117 = arith.constant 0 : index
    %281 = vector.load %arg2[%c6, %c0_116, %c0_117] : memref<9x128x128xbf16, #tpu.memory_space<vmem>>, vector<1x128x128xbf16>
    %282 = vector.shape_cast %281 : vector<1x128x128xbf16> to vector<128x128xbf16>
    %cst_118 = arith.constant dense<0.000000e+00> : vector<64x128xf32>
    %283 = tpu.matmul %280, %282, %cst_118 {dimension_numbers = #tpu.dot_dimension_numbers<[1], [0], [0], [1], [0, 0, 1, 1], [], []>} : vector<64x128xbf16>, vector<128x128xbf16>, vector<64x128xf32> -> vector<64x128xf32>
    %284 = arith.addf %244, %283 : vector<64x128xf32>
    %c0_119 = arith.constant 0 : index
    %c2_120 = arith.constant 2 : index
    %c1_121 = arith.constant 1 : index
    %c0_122 = arith.constant 0 : index
    %285 = vector.load %arg1[%c0_119, %c2_120, %c1_121, %c0_122] : memref<1x10x10x128xbf16, #tpu.memory_space<vmem>>, vector<1x8x8x128xbf16>
    %286 = vector.shape_cast %285 : vector<1x8x8x128xbf16> to vector<8x8x128xbf16>
    %287 = arith.extf %286 : vector<8x8x128xbf16> to vector<8x8x128xf32>
    %288 = vector.shape_cast %0 : vector<1x128xf32> to vector<1x1x128xf32>
    %289 = vector.broadcast %288 : vector<1x1x128xf32> to vector<8x8x128xf32>
    %290 = arith.mulf %287, %289 : vector<8x8x128xf32>
    %291 = vector.shape_cast %1 : vector<1x128xf32> to vector<1x1x128xf32>
    %292 = vector.broadcast %291 : vector<1x1x128xf32> to vector<8x8x128xf32>
    %293 = arith.addf %290, %292 : vector<8x8x128xf32>
    %cst_123 = arith.constant 0.000000e+00 : f32
    %294 = vector.broadcast %cst_123 : f32 to vector<8x8x128xf32>
    %295 = arith.maximumf %293, %294 : vector<8x8x128xf32>
    %c2_i32_124 = arith.constant 2 : i32
    %296 = vector.broadcast %c2_i32_124 : i32 to vector<8x8x1xi32>
    %297 = arith.addi %2, %296 : vector<8x8x1xi32>
    %c1_i32_125 = arith.constant 1 : i32
    %298 = vector.broadcast %c1_i32_125 : i32 to vector<8x8x1xi32>
    %299 = arith.cmpi sge, %297, %298 : vector<8x8x1xi32>
    %c2_i32_126 = arith.constant 2 : i32
    %300 = vector.broadcast %c2_i32_126 : i32 to vector<8x8x1xi32>
    %301 = arith.addi %2, %300 : vector<8x8x1xi32>
    %c8_i32_127 = arith.constant 8 : i32
    %302 = vector.broadcast %c8_i32_127 : i32 to vector<8x8x1xi32>
    %303 = arith.cmpi sle, %301, %302 : vector<8x8x1xi32>
    %304 = arith.andi %299, %303 : vector<8x8x1xi1>
    %c1_i32_128 = arith.constant 1 : i32
    %305 = vector.broadcast %c1_i32_128 : i32 to vector<8x8x1xi32>
    %306 = arith.addi %3, %305 : vector<8x8x1xi32>
    %c1_i32_129 = arith.constant 1 : i32
    %307 = vector.broadcast %c1_i32_129 : i32 to vector<8x8x1xi32>
    %308 = arith.cmpi sge, %306, %307 : vector<8x8x1xi32>
    %309 = arith.andi %304, %308 : vector<8x8x1xi1>
    %c1_i32_130 = arith.constant 1 : i32
    %310 = vector.broadcast %c1_i32_130 : i32 to vector<8x8x1xi32>
    %311 = arith.addi %3, %310 : vector<8x8x1xi32>
    %c8_i32_131 = arith.constant 8 : i32
    %312 = vector.broadcast %c8_i32_131 : i32 to vector<8x8x1xi32>
    %313 = arith.cmpi sle, %311, %312 : vector<8x8x1xi32>
    %314 = arith.andi %309, %313 : vector<8x8x1xi1>
    %cst_132 = arith.constant 0.000000e+00 : f32
    %315 = vector.shape_cast %314 : vector<8x8x1xi1> to vector<8x8x1xi1>
    %316 = vector.broadcast %315 : vector<8x8x1xi1> to vector<8x8x128xi1>
    %317 = vector.broadcast %cst_132 : f32 to vector<8x8x128xf32>
    %318 = arith.select %316, %295, %317 : vector<8x8x128xi1>, vector<8x8x128xf32>
    %319 = arith.truncf %318 : vector<8x8x128xf32> to vector<8x8x128xbf16>
    %320 = vector.shape_cast %319 : vector<8x8x128xbf16> to vector<64x128xbf16>
    %c7 = arith.constant 7 : index
    %c0_133 = arith.constant 0 : index
    %c0_134 = arith.constant 0 : index
    %321 = vector.load %arg2[%c7, %c0_133, %c0_134] : memref<9x128x128xbf16, #tpu.memory_space<vmem>>, vector<1x128x128xbf16>
    %322 = vector.shape_cast %321 : vector<1x128x128xbf16> to vector<128x128xbf16>
    %cst_135 = arith.constant dense<0.000000e+00> : vector<64x128xf32>
    %323 = tpu.matmul %320, %322, %cst_135 {dimension_numbers = #tpu.dot_dimension_numbers<[1], [0], [0], [1], [0, 0, 1, 1], [], []>} : vector<64x128xbf16>, vector<128x128xbf16>, vector<64x128xf32> -> vector<64x128xf32>
    %324 = arith.addf %284, %323 : vector<64x128xf32>
    %c0_136 = arith.constant 0 : index
    %c2_137 = arith.constant 2 : index
    %c2_138 = arith.constant 2 : index
    %c0_139 = arith.constant 0 : index
    %325 = vector.load %arg1[%c0_136, %c2_137, %c2_138, %c0_139] : memref<1x10x10x128xbf16, #tpu.memory_space<vmem>>, vector<1x8x8x128xbf16>
    %326 = vector.shape_cast %325 : vector<1x8x8x128xbf16> to vector<8x8x128xbf16>
    %327 = arith.extf %326 : vector<8x8x128xbf16> to vector<8x8x128xf32>
    %328 = vector.shape_cast %0 : vector<1x128xf32> to vector<1x1x128xf32>
    %329 = vector.broadcast %328 : vector<1x1x128xf32> to vector<8x8x128xf32>
    %330 = arith.mulf %327, %329 : vector<8x8x128xf32>
    %331 = vector.shape_cast %1 : vector<1x128xf32> to vector<1x1x128xf32>
    %332 = vector.broadcast %331 : vector<1x1x128xf32> to vector<8x8x128xf32>
    %333 = arith.addf %330, %332 : vector<8x8x128xf32>
    %cst_140 = arith.constant 0.000000e+00 : f32
    %334 = vector.broadcast %cst_140 : f32 to vector<8x8x128xf32>
    %335 = arith.maximumf %333, %334 : vector<8x8x128xf32>
    %c2_i32_141 = arith.constant 2 : i32
    %336 = vector.broadcast %c2_i32_141 : i32 to vector<8x8x1xi32>
    %337 = arith.addi %2, %336 : vector<8x8x1xi32>
    %c1_i32_142 = arith.constant 1 : i32
    %338 = vector.broadcast %c1_i32_142 : i32 to vector<8x8x1xi32>
    %339 = arith.cmpi sge, %337, %338 : vector<8x8x1xi32>
    %c2_i32_143 = arith.constant 2 : i32
    %340 = vector.broadcast %c2_i32_143 : i32 to vector<8x8x1xi32>
    %341 = arith.addi %2, %340 : vector<8x8x1xi32>
    %c8_i32_144 = arith.constant 8 : i32
    %342 = vector.broadcast %c8_i32_144 : i32 to vector<8x8x1xi32>
    %343 = arith.cmpi sle, %341, %342 : vector<8x8x1xi32>
    %344 = arith.andi %339, %343 : vector<8x8x1xi1>
    %c2_i32_145 = arith.constant 2 : i32
    %345 = vector.broadcast %c2_i32_145 : i32 to vector<8x8x1xi32>
    %346 = arith.addi %3, %345 : vector<8x8x1xi32>
    %c1_i32_146 = arith.constant 1 : i32
    %347 = vector.broadcast %c1_i32_146 : i32 to vector<8x8x1xi32>
    %348 = arith.cmpi sge, %346, %347 : vector<8x8x1xi32>
    %349 = arith.andi %344, %348 : vector<8x8x1xi1>
    %c2_i32_147 = arith.constant 2 : i32
    %350 = vector.broadcast %c2_i32_147 : i32 to vector<8x8x1xi32>
    %351 = arith.addi %3, %350 : vector<8x8x1xi32>
    %c8_i32_148 = arith.constant 8 : i32
    %352 = vector.broadcast %c8_i32_148 : i32 to vector<8x8x1xi32>
    %353 = arith.cmpi sle, %351, %352 : vector<8x8x1xi32>
    %354 = arith.andi %349, %353 : vector<8x8x1xi1>
    %cst_149 = arith.constant 0.000000e+00 : f32
    %355 = vector.shape_cast %354 : vector<8x8x1xi1> to vector<8x8x1xi1>
    %356 = vector.broadcast %355 : vector<8x8x1xi1> to vector<8x8x128xi1>
    %357 = vector.broadcast %cst_149 : f32 to vector<8x8x128xf32>
    %358 = arith.select %356, %335, %357 : vector<8x8x128xi1>, vector<8x8x128xf32>
    %359 = arith.truncf %358 : vector<8x8x128xf32> to vector<8x8x128xbf16>
    %360 = vector.shape_cast %359 : vector<8x8x128xbf16> to vector<64x128xbf16>
    %c8 = arith.constant 8 : index
    %c0_150 = arith.constant 0 : index
    %c0_151 = arith.constant 0 : index
    %361 = vector.load %arg2[%c8, %c0_150, %c0_151] : memref<9x128x128xbf16, #tpu.memory_space<vmem>>, vector<1x128x128xbf16>
    %362 = vector.shape_cast %361 : vector<1x128x128xbf16> to vector<128x128xbf16>
    %cst_152 = arith.constant dense<0.000000e+00> : vector<64x128xf32>
    %363 = tpu.matmul %360, %362, %cst_152 {dimension_numbers = #tpu.dot_dimension_numbers<[1], [0], [0], [1], [0, 0, 1, 1], [], []>} : vector<64x128xbf16>, vector<128x128xbf16>, vector<64x128xf32> -> vector<64x128xf32>
    %364 = arith.addf %324, %363 : vector<64x128xf32>
    %cst_153 = arith.constant dense<0.000000e+00> : vector<128xf32>
    %365 = vector.multi_reduction <add>, %364, %cst_153 [0] : vector<64x128xf32> to vector<128xf32>
    %366 = vector.shape_cast %365 : vector<128xf32> to vector<1x128xf32>
    %367 = arith.mulf %364, %364 : vector<64x128xf32>
    %cst_154 = arith.constant dense<0.000000e+00> : vector<128xf32>
    %368 = vector.multi_reduction <add>, %367, %cst_154 [0] : vector<64x128xf32> to vector<128xf32>
    %369 = vector.shape_cast %368 : vector<128xf32> to vector<1x128xf32>
    %370 = tpu.iota {dimensions = array<i32: 0>} : vector<8x128xi32>
    %c0_i32_155 = arith.constant 0 : i32
    %371 = vector.broadcast %c0_i32_155 : i32 to vector<8x128xi32>
    %372 = arith.cmpi eq, %370, %371 : vector<8x128xi32>
    %c1_i32_156 = arith.constant 1 : i32
    %373 = vector.broadcast %c1_i32_156 : i32 to vector<8x128xi32>
    %374 = arith.cmpi eq, %370, %373 : vector<8x128xi32>
    %cst_157 = arith.constant 0.000000e+00 : f32
    %375 = vector.shape_cast %369 : vector<1x128xf32> to vector<1x128xf32>
    %376 = vector.broadcast %375 : vector<1x128xf32> to vector<8x128xf32>
    %377 = vector.broadcast %cst_157 : f32 to vector<8x128xf32>
    %378 = arith.select %374, %376, %377 : vector<8x128xi1>, vector<8x128xf32>
    %379 = vector.shape_cast %366 : vector<1x128xf32> to vector<1x128xf32>
    %380 = vector.broadcast %379 : vector<1x128xf32> to vector<8x128xf32>
    %381 = arith.select %372, %380, %378 : vector<8x128xi1>, vector<8x128xf32>
    %c0_158 = arith.constant 0 : index
    %c0_159 = arith.constant 0 : index
    %c0_160 = arith.constant 0 : index
    %382 = vector.load %arg6[%c0_158, %c0_159, %c0_160] : memref<1x8x128xf32, #tpu.memory_space<vmem>>, vector<1x8x128xf32>
    %383 = vector.shape_cast %382 : vector<1x8x128xf32> to vector<8x128xf32>
    %384 = vector.shape_cast %381 : vector<8x128xf32> to vector<1x8x128xf32>
    tpu.vector_store %arg6[%c0_158, %c0_159, %c0_160], %384 {strides = array<i32>} : memref<1x8x128xf32, #tpu.memory_space<vmem>>, vector<1x8x128xf32>,
    %385 = arith.truncf %364 : vector<64x128xf32> to vector<64x128xbf16>
    %c0_161 = arith.constant 0 : index
    %c0_162 = arith.constant 0 : index
    %c0_163 = arith.constant 0 : index
    %386 = vector.load %arg5[%c0_161, %c0_162, %c0_163] : memref<1x64x128xbf16, #tpu.memory_space<vmem>>, vector<1x64x128xbf16>
    %387 = vector.shape_cast %386 : vector<1x64x128xbf16> to vector<64x128xbf16>
    %388 = vector.shape_cast %385 : vector<64x128xbf16> to vector<1x64x128xbf16>
    tpu.vector_store %arg5[%c0_161, %c0_162, %c0_163], %388 {strides = array<i32>} : memref<1x64x128xbf16, #tpu.memory_space<vmem>>, vector<1x64x128xbf16>,
    return
  }
  func.func @transform_0(%arg0: i32) -> (i32, i32, i32, i32) {
    %c0_i32 = arith.constant 0 : i32
    %c0_i32_0 = arith.constant 0 : i32
    %c0_i32_1 = arith.constant 0 : i32
    %c0_i32_2 = arith.constant 0 : i32
    return %arg0, %c0_i32, %c0_i32_0, %c0_i32_1 : i32, i32, i32, i32
  }
  func.func @transform_1(%arg0: i32) -> (i32, i32, i32) {
    %c0_i32 = arith.constant 0 : i32
    %c0_i32_0 = arith.constant 0 : i32
    %c0_i32_1 = arith.constant 0 : i32
    %c0_i32_2 = arith.constant 0 : i32
    return %c0_i32, %c0_i32_0, %c0_i32_1 : i32, i32, i32
  }
  func.func @transform_2(%arg0: i32) -> (i32, i32) {
    %c0_i32 = arith.constant 0 : i32
    %c0_i32_0 = arith.constant 0 : i32
    %c0_i32_1 = arith.constant 0 : i32
    return %c0_i32, %c0_i32_0 : i32, i32
  }
  func.func @transform_3(%arg0: i32) -> (i32, i32) {
    %c0_i32 = arith.constant 0 : i32
    %c0_i32_0 = arith.constant 0 : i32
    %c0_i32_1 = arith.constant 0 : i32
    return %c0_i32, %c0_i32_0 : i32, i32
  }
  func.func @transform_4(%arg0: i32) -> (i32, i32, i32) {
    %c0_i32 = arith.constant 0 : i32
    %c0_i32_0 = arith.constant 0 : i32
    %c0_i32_1 = arith.constant 0 : i32
    return %arg0, %c0_i32, %c0_i32_0 : i32, i32, i32
  }
  func.func @transform_5(%arg0: i32) -> (i32, i32, i32) {
    %c0_i32 = arith.constant 0 : i32
    %c0_i32_0 = arith.constant 0 : i32
    %c0_i32_1 = arith.constant 0 : i32
    return %arg0, %c0_i32, %c0_i32_0 : i32, i32, i32
  }
}

module attributes {stable_mosaic.version = 11 : i64} {
  func.func @kernel(%arg0: i32, %arg1: memref<1x8x8x4xbf16, #tpu.memory_space<vmem>>, %arg2: memref<1x4x128xbf16, #tpu.memory_space<vmem>>, %arg3: memref<1x64x128xbf16, #tpu.memory_space<vmem>>, %arg4: memref<1x8x128xf32, #tpu.memory_space<vmem>>) attributes {dimension_semantics = [#tpu.dimension_semantics<parallel>], iteration_bounds = array<i64: 2>, scalar_prefetch = 0 : i64, scratch_operands = 0 : i64, tpu.core_type = #tpu.core_type<tc>, window_params = [{transform_indices = @transform_0, window_bounds = array<i64: 1, 8, 8, 4>}, {pipeline_mode = #tpu.pipeline_mode<synchronous>, transform_indices = @transform_1, window_bounds = array<i64: 1, 4, 128>}, {transform_indices = @transform_2, window_bounds = array<i64: 1, 64, 128>}, {transform_indices = @transform_3, window_bounds = array<i64: 1, 8, 128>}]} {
    %cst = arith.constant 0.000000e+00 : f32
    %0 = vector.broadcast %cst : f32 to vector<64x128xf32>
    %c0 = arith.constant 0 : index
    %c0_0 = arith.constant 0 : index
    %c0_1 = arith.constant 0 : index
    %c0_2 = arith.constant 0 : index
    %1 = vector.load %arg1[%c0, %c0_0, %c0_1, %c0_2] : memref<1x8x8x4xbf16, #tpu.memory_space<vmem>>, vector<1x8x8x4xbf16>
    %2 = vector.shape_cast %1 : vector<1x8x8x4xbf16> to vector<8x8x4xbf16>
    %3 = vector.shape_cast %2 : vector<8x8x4xbf16> to vector<64x4xbf16>
    %c0_3 = arith.constant 0 : index
    %c0_4 = arith.constant 0 : index
    %c0_5 = arith.constant 0 : index
    %4 = vector.load %arg2[%c0_3, %c0_4, %c0_5] : memref<1x4x128xbf16, #tpu.memory_space<vmem>>, vector<1x4x128xbf16>
    %5 = vector.shape_cast %4 : vector<1x4x128xbf16> to vector<4x128xbf16>
    %cst_6 = arith.constant dense<0.000000e+00> : vector<64x128xf32>
    %6 = tpu.matmul %3, %5, %cst_6 {dimension_numbers = #tpu.dot_dimension_numbers<[1], [0], [0], [1], [0, 0, 1, 1], [], []>} : vector<64x4xbf16>, vector<4x128xbf16>, vector<64x128xf32> -> vector<64x128xf32>
    %7 = arith.addf %0, %6 : vector<64x128xf32>
    %cst_7 = arith.constant dense<0.000000e+00> : vector<128xf32>
    %8 = vector.multi_reduction <add>, %7, %cst_7 [0] : vector<64x128xf32> to vector<128xf32>
    %9 = vector.shape_cast %8 : vector<128xf32> to vector<1x128xf32>
    %10 = arith.mulf %7, %7 : vector<64x128xf32>
    %cst_8 = arith.constant dense<0.000000e+00> : vector<128xf32>
    %11 = vector.multi_reduction <add>, %10, %cst_8 [0] : vector<64x128xf32> to vector<128xf32>
    %12 = vector.shape_cast %11 : vector<128xf32> to vector<1x128xf32>
    %13 = tpu.iota {dimensions = array<i32: 0>} : vector<8x128xi32>
    %c0_i32 = arith.constant 0 : i32
    %14 = vector.broadcast %c0_i32 : i32 to vector<8x128xi32>
    %15 = arith.cmpi eq, %13, %14 : vector<8x128xi32>
    %c1_i32 = arith.constant 1 : i32
    %16 = vector.broadcast %c1_i32 : i32 to vector<8x128xi32>
    %17 = arith.cmpi eq, %13, %16 : vector<8x128xi32>
    %cst_9 = arith.constant 0.000000e+00 : f32
    %18 = vector.shape_cast %12 : vector<1x128xf32> to vector<1x128xf32>
    %19 = vector.broadcast %18 : vector<1x128xf32> to vector<8x128xf32>
    %20 = vector.broadcast %cst_9 : f32 to vector<8x128xf32>
    %21 = arith.select %17, %19, %20 : vector<8x128xi1>, vector<8x128xf32>
    %22 = vector.shape_cast %9 : vector<1x128xf32> to vector<1x128xf32>
    %23 = vector.broadcast %22 : vector<1x128xf32> to vector<8x128xf32>
    %24 = arith.select %15, %23, %21 : vector<8x128xi1>, vector<8x128xf32>
    %c0_10 = arith.constant 0 : index
    %c0_11 = arith.constant 0 : index
    %c0_12 = arith.constant 0 : index
    %25 = vector.load %arg4[%c0_10, %c0_11, %c0_12] : memref<1x8x128xf32, #tpu.memory_space<vmem>>, vector<1x8x128xf32>
    %26 = vector.shape_cast %25 : vector<1x8x128xf32> to vector<8x128xf32>
    %27 = vector.shape_cast %24 : vector<8x128xf32> to vector<1x8x128xf32>
    tpu.vector_store %arg4[%c0_10, %c0_11, %c0_12], %27 {strides = array<i32>} : memref<1x8x128xf32, #tpu.memory_space<vmem>>, vector<1x8x128xf32>,
    %28 = arith.truncf %7 : vector<64x128xf32> to vector<64x128xbf16>
    %c0_13 = arith.constant 0 : index
    %c0_14 = arith.constant 0 : index
    %c0_15 = arith.constant 0 : index
    %29 = vector.load %arg3[%c0_13, %c0_14, %c0_15] : memref<1x64x128xbf16, #tpu.memory_space<vmem>>, vector<1x64x128xbf16>
    %30 = vector.shape_cast %29 : vector<1x64x128xbf16> to vector<64x128xbf16>
    %31 = vector.shape_cast %28 : vector<64x128xbf16> to vector<1x64x128xbf16>
    tpu.vector_store %arg3[%c0_13, %c0_14, %c0_15], %31 {strides = array<i32>} : memref<1x64x128xbf16, #tpu.memory_space<vmem>>, vector<1x64x128xbf16>,
    return
  }
  func.func @transform_0(%arg0: i32) -> (i32, i32, i32, i32) {
    %c0_i32 = arith.constant 0 : i32
    %c0_i32_0 = arith.constant 0 : i32
    %c0_i32_1 = arith.constant 0 : i32
    %c0_i32_2 = arith.constant 0 : i32
    return %arg0, %c0_i32, %c0_i32_0, %c0_i32_1 : i32, i32, i32, i32
  }
  func.func @transform_1(%arg0: i32) -> (i32, i32, i32) {
    %c0_i32 = arith.constant 0 : i32
    %c0_i32_0 = arith.constant 0 : i32
    %c0_i32_1 = arith.constant 0 : i32
    %c0_i32_2 = arith.constant 0 : i32
    return %c0_i32, %c0_i32_0, %c0_i32_1 : i32, i32, i32
  }
  func.func @transform_2(%arg0: i32) -> (i32, i32, i32) {
    %c0_i32 = arith.constant 0 : i32
    %c0_i32_0 = arith.constant 0 : i32
    %c0_i32_1 = arith.constant 0 : i32
    return %arg0, %c0_i32, %c0_i32_0 : i32, i32, i32
  }
  func.func @transform_3(%arg0: i32) -> (i32, i32, i32) {
    %c0_i32 = arith.constant 0 : i32
    %c0_i32_0 = arith.constant 0 : i32
    %c0_i32_1 = arith.constant 0 : i32
    return %arg0, %c0_i32, %c0_i32_0 : i32, i32, i32
  }
}

module attributes {stable_mosaic.version = 11 : i64} {
  func.func @_final_kernel(%arg0: i32, %arg1: i32, %arg2: memref<1x64x128xbf16, #tpu.memory_space<vmem>>, %arg3: memref<1x64x128xbf16, #tpu.memory_space<vmem>>, %arg4: memref<1x128xf32, #tpu.memory_space<vmem>>, %arg5: memref<1x128xf32, #tpu.memory_space<vmem>>, %arg6: memref<1x128xf32, #tpu.memory_space<vmem>>, %arg7: memref<1x128xf32, #tpu.memory_space<vmem>>, %arg8: memref<1x64x128xf32, #tpu.memory_space<vmem>>) attributes {dimension_semantics = [#tpu.dimension_semantics<parallel>, #tpu.dimension_semantics<parallel>], iteration_bounds = array<i64: 2, 1>, scalar_prefetch = 0 : i64, scratch_operands = 0 : i64, tpu.core_type = #tpu.core_type<tc>, window_params = [{transform_indices = @transform_0, window_bounds = array<i64: 1, 64, 128>}, {transform_indices = @transform_1, window_bounds = array<i64: 1, 64, 128>}, {pipeline_mode = #tpu.pipeline_mode<synchronous>, transform_indices = @transform_2, window_bounds = array<i64: 1, 128>}, {pipeline_mode = #tpu.pipeline_mode<synchronous>, transform_indices = @transform_3, window_bounds = array<i64: 1, 128>}, {pipeline_mode = #tpu.pipeline_mode<synchronous>, transform_indices = @transform_4, window_bounds = array<i64: 1, 128>}, {pipeline_mode = #tpu.pipeline_mode<synchronous>, transform_indices = @transform_5, window_bounds = array<i64: 1, 128>}, {transform_indices = @transform_6, window_bounds = array<i64: 1, 64, 128>}]} {
    %c0 = arith.constant 0 : index
    %c0_0 = arith.constant 0 : index
    %c0_1 = arith.constant 0 : index
    %0 = vector.load %arg2[%c0, %c0_0, %c0_1] : memref<1x64x128xbf16, #tpu.memory_space<vmem>>, vector<1x64x128xbf16>
    %1 = vector.shape_cast %0 : vector<1x64x128xbf16> to vector<64x128xbf16>
    %2 = arith.extf %1 : vector<64x128xbf16> to vector<64x128xf32>
    %c0_2 = arith.constant 0 : index
    %c0_3 = arith.constant 0 : index
    %3 = vector.load %arg4[%c0_2, %c0_3] : memref<1x128xf32, #tpu.memory_space<vmem>>, vector<1x128xf32>
    %4 = vector.broadcast %3 : vector<1x128xf32> to vector<64x128xf32>
    %5 = arith.mulf %2, %4 : vector<64x128xf32>
    %c0_4 = arith.constant 0 : index
    %c0_5 = arith.constant 0 : index
    %6 = vector.load %arg5[%c0_4, %c0_5] : memref<1x128xf32, #tpu.memory_space<vmem>>, vector<1x128xf32>
    %7 = vector.broadcast %6 : vector<1x128xf32> to vector<64x128xf32>
    %8 = arith.addf %5, %7 : vector<64x128xf32>
    %c0_6 = arith.constant 0 : index
    %c0_7 = arith.constant 0 : index
    %c0_8 = arith.constant 0 : index
    %9 = vector.load %arg3[%c0_6, %c0_7, %c0_8] : memref<1x64x128xbf16, #tpu.memory_space<vmem>>, vector<1x64x128xbf16>
    %10 = vector.shape_cast %9 : vector<1x64x128xbf16> to vector<64x128xbf16>
    %11 = arith.extf %10 : vector<64x128xbf16> to vector<64x128xf32>
    %c0_9 = arith.constant 0 : index
    %c0_10 = arith.constant 0 : index
    %12 = vector.load %arg6[%c0_9, %c0_10] : memref<1x128xf32, #tpu.memory_space<vmem>>, vector<1x128xf32>
    %13 = vector.broadcast %12 : vector<1x128xf32> to vector<64x128xf32>
    %14 = arith.mulf %11, %13 : vector<64x128xf32>
    %c0_11 = arith.constant 0 : index
    %c0_12 = arith.constant 0 : index
    %15 = vector.load %arg7[%c0_11, %c0_12] : memref<1x128xf32, #tpu.memory_space<vmem>>, vector<1x128xf32>
    %16 = vector.broadcast %15 : vector<1x128xf32> to vector<64x128xf32>
    %17 = arith.addf %14, %16 : vector<64x128xf32>
    %18 = arith.addf %8, %17 : vector<64x128xf32>
    %cst = arith.constant 0.000000e+00 : f32
    %19 = vector.broadcast %cst : f32 to vector<64x128xf32>
    %20 = arith.maximumf %18, %19 : vector<64x128xf32>
    %c0_13 = arith.constant 0 : index
    %c0_14 = arith.constant 0 : index
    %c0_15 = arith.constant 0 : index
    %21 = vector.load %arg8[%c0_13, %c0_14, %c0_15] : memref<1x64x128xf32, #tpu.memory_space<vmem>>, vector<1x64x128xf32>
    %22 = vector.shape_cast %21 : vector<1x64x128xf32> to vector<64x128xf32>
    %23 = vector.shape_cast %20 : vector<64x128xf32> to vector<1x64x128xf32>
    tpu.vector_store %arg8[%c0_13, %c0_14, %c0_15], %23 {strides = array<i32>} : memref<1x64x128xf32, #tpu.memory_space<vmem>>, vector<1x64x128xf32>,
    return
  }
  func.func @transform_0(%arg0: i32, %arg1: i32) -> (i32, i32, i32) {
    %c0_i32 = arith.constant 0 : i32
    %c0_i32_0 = arith.constant 0 : i32
    return %arg0, %arg1, %c0_i32 : i32, i32, i32
  }
  func.func @transform_1(%arg0: i32, %arg1: i32) -> (i32, i32, i32) {
    %c0_i32 = arith.constant 0 : i32
    %c0_i32_0 = arith.constant 0 : i32
    return %arg0, %arg1, %c0_i32 : i32, i32, i32
  }
  func.func @transform_2(%arg0: i32, %arg1: i32) -> (i32, i32) {
    %c0_i32 = arith.constant 0 : i32
    %c0_i32_0 = arith.constant 0 : i32
    %c0_i32_1 = arith.constant 0 : i32
    return %c0_i32, %c0_i32_0 : i32, i32
  }
  func.func @transform_3(%arg0: i32, %arg1: i32) -> (i32, i32) {
    %c0_i32 = arith.constant 0 : i32
    %c0_i32_0 = arith.constant 0 : i32
    %c0_i32_1 = arith.constant 0 : i32
    return %c0_i32, %c0_i32_0 : i32, i32
  }
  func.func @transform_4(%arg0: i32, %arg1: i32) -> (i32, i32) {
    %c0_i32 = arith.constant 0 : i32
    %c0_i32_0 = arith.constant 0 : i32
    %c0_i32_1 = arith.constant 0 : i32
    return %c0_i32, %c0_i32_0 : i32, i32
  }
  func.func @transform_5(%arg0: i32, %arg1: i32) -> (i32, i32) {
    %c0_i32 = arith.constant 0 : i32
    %c0_i32_0 = arith.constant 0 : i32
    %c0_i32_1 = arith.constant 0 : i32
    return %c0_i32, %c0_i32_0 : i32, i32
  }
  func.func @transform_6(%arg0: i32, %arg1: i32) -> (i32, i32, i32) {
    %c0_i32 = arith.constant 0 : i32
    %c0_i32_0 = arith.constant 0 : i32
    return %arg0, %arg1, %c0_i32 : i32, i32, i32
  }
}

</mosaic_0001>

<llo_original>
// kernel: basic_block_forward.4
$region0: #{basic_block_forward.4}
  #allocation0 [shape = 'u32[]', space=smem, size = 0x4, offset = 0x4, fixed_abs, tag = 'smem constant byte address 0x4 - core index']
  #allocation1 [shape = 'u32[144,128]{1,0:T(1,128)}', space=vmem, size = 0x12000, scoped, tag = 'internal scratch']
  %s0 = inlined_call_operand.vmem [shape: bf16[2,9,9,16], index: 0, kind: input, shape index: {}]
  %s1 = inlined_call_operand.vmem [shape: bf16[4,16,128], index: 1, kind: input, shape index: {}]
  %s2 = inlined_call_operand.vmem [shape: bf16[2,10,10,128], index: 2, kind: output, shape index: {0}]
  %s3 = inlined_call_operand.vmem [shape: f32[2,8,128], index: 3, kind: output, shape index: {1}]
  %4 = xla_tuple %s2, %s3
  %s5 = sld [smem:[#allocation0]]
  $region49: #{basic_block_forward.4} parent=0
    _
  %s7 = ssub.s32 1, %s5
  %s8 = scalar_select 0, %s7, %s5
  loop: start=0, step=1, limit=4
  $region2: #{basic_block_forward.4} parent=0 // loop_pre_header
    _
  $region3: #{basic_block_forward.4} parent=0 // loop_header
    %s10 = sphi 0, %s14
    %p11 = scmp.ge.s32.totalorder %s10, 4
    %s20 = sphi 0, %s22
    %s23 = sphi 0, %s20
    %s24 = sphi 0, %s23
    %s40 = sphi 0, %s24
    %s44 = sphi 0, %s44
    %s46 = sphi 0, %s44
    %s47 = sphi 0, %s46
    %s61 = sphi 0, %s47
    %s67 = sphi 0, %s69
    %s70 = sphi 0, %s67
    %s71 = sphi 0, %s70
    %s87 = sphi 0, %s71
    %s93 = sphi 0, %s95
    %s96 = sphi 0, %s93
    %s97 = sphi 0, %s96
    %s113 = sphi 0, %s97
  $region4: #{basic_block_forward.4} parent=0 // loop_header_branch
    %13 = sbr.rel (%p11) target = $region8
  $region5: #{basic_block_forward.4} parent=0 // loop_body
    %s15 = ssub.s32 %s10, 1
    %s16 = ssub.s32 %s10, 2
    %s17 = sadd.s32 %s10, 1
    %s18 = ssub.s32 %s10, %s17
    %p19 = scmp.eq.s32.totalorder %s18, 0
    %s21 = sadd.s32 %s20, 1
    %s22 = scalar_select %p19, %s20, %s21
    %p25 = pneg %p19
    %p26 = scmp.eq.s32.totalorder %s10, 1
    %p27 = por %p25, %p26
    %p28 = scmp.ne.s32.totalorder %s20, %s23
    %p29 = scmp.eq.s32.totalorder %s10, 0
    %p30 = por %p28, %p29
    %p31 = scmp.ne.s32.totalorder %s20, %s23
    %p32 = scmp.eq.s32.totalorder %s15, 1
    %p33 = por %p31, %p32
    %p34 = scmp.ne.s32.totalorder %s23, %s24
    %p35 = scmp.eq.s32.totalorder %s15, 0
    %p36 = por %p34, %p35
    %p37 = scmp.ne.s32.totalorder %s23, %s24
    %p38 = scmp.eq.s32.totalorder %s16, 1
    %p39 = por %p37, %p38
    %p41 = scmp.ne.s32.totalorder %s24, %s40
    %p42 = scmp.eq.s32.totalorder %s16, 0
    %p43 = por %p41, %p42
    %s45 = sadd.s32 %s44, 1
    %p48 = scmp.eq.s32.totalorder %s10, 1
    %p49 = scmp.ne.s32.totalorder %s44, %s46
    %p50 = scmp.eq.s32.totalorder %s10, 0
    %p51 = por %p49, %p50
    %p52 = scmp.ne.s32.totalorder %s44, %s46
    %p53 = scmp.eq.s32.totalorder %s15, 1
    %p54 = por %p52, %p53
    %p55 = scmp.ne.s32.totalorder %s46, %s47
    %p56 = scmp.eq.s32.totalorder %s15, 0
    %p57 = por %p55, %p56
    %p58 = scmp.ne.s32.totalorder %s46, %s47
    %p59 = scmp.eq.s32.totalorder %s16, 1
    %p60 = por %p58, %p59
    %p62 = scmp.ne.s32.totalorder %s47, %s61
    %p63 = scmp.eq.s32.totalorder %s16, 0
    %p64 = por %p62, %p63
    %s65 = ssub.s32 %s10, %s17
    %p66 = scmp.eq.s32.totalorder %s65, 0
    %s68 = sadd.s32 %s67, 1
    %s69 = scalar_select %p66, %s67, %s68
    %p72 = pneg %p66
    %p73 = scmp.eq.s32.totalorder %s10, 1
    %p74 = por %p72, %p73
    %p75 = scmp.ne.s32.totalorder %s67, %s70
    %p76 = scmp.eq.s32.totalorder %s10, 0
    %p77 = por %p75, %p76
    %p78 = scmp.ne.s32.totalorder %s67, %s70
    %p79 = scmp.eq.s32.totalorder %s15, 1
    %p80 = por %p78, %p79
    %p81 = scmp.ne.s32.totalorder %s70, %s71
    %p82 = scmp.eq.s32.totalorder %s15, 0
    %p83 = por %p81, %p82
    %p84 = scmp.ne.s32.totalorder %s70, %s71
    %p85 = scmp.eq.s32.totalorder %s16, 1
    %p86 = por %p84, %p85
    %p88 = scmp.ne.s32.totalorder %s71, %s87
    %p89 = scmp.eq.s32.totalorder %s16, 0
    %p90 = por %p88, %p89
    %s91 = ssub.s32 %s10, %s17
    %p92 = scmp.eq.s32.totalorder %s91, 0
    %s94 = sadd.s32 %s93, 1
    %s95 = scalar_select %p92, %s93, %s94
    %p98 = pneg %p92
    %p99 = scmp.eq.s32.totalorder %s10, 1
    %p100 = por %p98, %p99
    %p101 = scmp.ne.s32.totalorder %s93, %s96
    %p102 = scmp.eq.s32.totalorder %s10, 0
    %p103 = por %p101, %p102
    %p104 = scmp.ne.s32.totalorder %s93, %s96
    %p105 = scmp.eq.s32.totalorder %s15, 1
    %p106 = por %p104, %p105
    %p107 = scmp.ne.s32.totalorder %s96, %s97
    %p108 = scmp.eq.s32.totalorder %s15, 0
    %p109 = por %p107, %p108
    %p110 = scmp.ne.s32.totalorder %s96, %s97
    %p111 = scmp.eq.s32.totalorder %s16, 1
    %p112 = por %p110, %p111
    %p114 = scmp.ne.s32.totalorder %s97, %s113
    %p115 = scmp.eq.s32.totalorder %s16, 0
    %p116 = por %p114, %p115
    %p117 = scmp.le.s32.totalorder 1, %s10
    %p118 = scmp.lt.s32.totalorder %s10, 3
    %p119 = pnand %p117, %p118
    %p120 = pneg %p119
    // Predicated region
    $region9: #{basic_block_forward.4} parent=5 // pred_check
      _
    $region10: #{basic_block_forward.4} parent=5 // pred_check_branch
      %122 = sbr.rel (%p119) target = $region12
    $region11: #{basic_block_forward.4} parent=5 // pred_region
      %s123 = ssub.s32 %s10, 1
      // Predicated region
      $region13: #{basic_block_forward.4} parent=11 // pred_check
        %p124 = pneg %p57
      $region14: #{basic_block_forward.4} parent=11 // pred_check_branch
        %126 = sbr.rel (%p124) target = $region16
      $region15: #{basic_block_forward.4} parent=11 // pred_region
        _
      $region16: #{basic_block_forward.4} parent=11 // pred_fallthru
        _
    $region12: #{basic_block_forward.4} parent=5 // pred_fallthru
      _
    %p127 = scmp.lt.s32.totalorder %s10, 2
    // Predicated region
    $region17: #{basic_block_forward.4} parent=5 // pred_check
      %p128 = pneg %p127
    $region18: #{basic_block_forward.4} parent=5 // pred_check_branch
      %130 = sbr.rel (%p128) target = $region20
    $region19: #{basic_block_forward.4} parent=5 // pred_region
      // Predicated region
      $region21: #{basic_block_forward.4} parent=19 // pred_check
        %p131 = pneg %p30
      $region22: #{basic_block_forward.4} parent=19 // pred_check_branch
        %133 = sbr.rel (%p131) target = $region24
      $region23: #{basic_block_forward.4} parent=19 // pred_region
        %p134 = scmp.lt.s32.totalorder %s10, 1
        %s135 = scalar_select %p134, %s10, 1
        %s136 = smul.addr %s135, 18
        %s137 = smul.addr %s136, 4
        %s138 = scalar_lea.vmem %s0, %s137
      $region24: #{basic_block_forward.4} parent=19 // pred_fallthru
        _
    $region20: #{basic_block_forward.4} parent=5 // pred_fallthru
      _
    %p139 = scmp.le.s32.totalorder 1, %s10
    %p140 = scmp.lt.s32.totalorder %s10, 3
    %p141 = pnand %p139, %p140
    %p142 = pneg %p141
    // Predicated region
    $region25: #{basic_block_forward.4} parent=5 // pred_check
      _
    $region26: #{basic_block_forward.4} parent=5 // pred_check_branch
      %144 = sbr.rel (%p141) target = $region28
    $region27: #{basic_block_forward.4} parent=5 // pred_region
      %s145 = ssub.s32 %s10, 1
      %p146 = scmp.lt.s32.totalorder %s15, 1
      %s147 = scalar_select %p146, %s15, 1
      %s148 = smul.addr %s147, 18
      %s149 = smul.addr %s148, 4
      %s150 = scalar_lea.vmem %s0, %s149
      %p151 = pneg %p36
      %p152 = pneg %p33
      %p153 = pneg %p57
      %p154 = pneg %p54
      %p155 = pneg %p83
      %p156 = pneg %p80
      %p157 = scmp.lt.s32.totalorder %s15, 1
      %s158 = scalar_select %p157, %s15, 1
      %s159 = smul.addr %s158, 20
      %s160 = smul.addr %s159, 4
      %s161 = scalar_lea.vmem %s2, %s160
      %p162 = pneg %p109
      %p163 = pneg %p106
      %p164 = scmp.lt.s32.totalorder %s15, 1
      %s165 = scalar_select %p164, %s15, 1
      %s166 = smul.addr %s165, 8
      %s167 = scalar_lea.vmem %s3, %s166
      %p168 = scmp.lt.s32.totalorder %s15, 1
      %s169 = scalar_select %p168, %s15, 1
      %s170 = smul.addr %s169, 18
      %s171 = smul.addr %s170, 4
      %s172 = scalar_lea.vmem %s0, %s171
      %p173 = scmp.lt.s32.totalorder %s15, 1
      %s174 = scalar_select %p173, %s15, 1
      %s175 = smul.addr %s174, 20
      %s176 = smul.addr %s175, 4
      %s177 = scalar_lea.vmem %s2, %s176
      %p178 = scmp.lt.s32.totalorder %s15, 1
      %s179 = scalar_select %p178, %s15, 1
      %s180 = smul.addr %s179, 8
      %s181 = scalar_lea.vmem %s3, %s180
      %v183 = vld [vmem:[%s172] sm:$0xf]
      %v184 = vld [vmem:[%s172 + $0x8] sm:$0xf]
      %v185 = vld [vmem:[%s172 + $0x10] sm:$0xf]
      %v186 = vld [vmem:[%s172 + $0x18] sm:$0xf]
      %v187 = vld [vmem:[%s172 + $0x20] sm:$0xf]
      %v188 = vld [vmem:[%s172 + $0x28] sm:$0xf]
      %v189 = vld [vmem:[%s172 + $0x30] sm:$0xf]
      %v190 = vld [vmem:[%s172 + $0x38] sm:$0xf]
      %v191 = vld [vmem:[%s1] sm:$0xf]
      %v192 = vld [vmem:[%s1 + $0x4] sm:$0xf]
      %v193 = vld [vmem:[%s172 + $0x4] sm:$0x1]
      %v194 = vld [vmem:[%s172 + $0xc] sm:$0x1]
      %v195 = vld [vmem:[%s172 + $0x14] sm:$0x1]
      %v196 = vld [vmem:[%s172 + $0x1c] sm:$0x1]
      %v197 = vld [vmem:[%s172 + $0x24] sm:$0x1]
      %v198 = vld [vmem:[%s172 + $0x2c] sm:$0x1]
      %v199 = vld [vmem:[%s172 + $0x34] sm:$0x1]
      %v200 = vld [vmem:[%s172 + $0x3c] sm:$0x1]
      %vm201 = vsmask.f32 3328
      %vm202 = vsmask.f32 7440
      %vm203 = vmor %vm201, %vm202
      %v205 = vshrl.u32 %v183, 16
      %v207 = vrot.slane %v205, 4
      %v208 = vshll.u32 %v183, 16
      %v210 = vrot.slane %v208, 5
      %v211 = vor.u32 %v207, %v210
      %v212 = vrot.slane %v211, 4
      %v214 = vshll.u32 %v193, 16
      %v216 = vrot.slane %v214, 5
      %v217 = vsel %vm203, %v212, %v216
      %v219 = vshrl.u32 %v184, 16
      %v221 = vrot.slane %v219, 4
      %v222 = vshll.u32 %v184, 16
      %v224 = vrot.slane %v222, 5
      %v225 = vor.u32 %v221, %v224
      %v226 = vrot.slane %v225, 4
      %v228 = vshll.u32 %v194, 16
      %v230 = vrot.slane %v228, 5
      %v231 = vsel %vm203, %v226, %v230
      %v233 = vshrl.u32 %v185, 16
      %v235 = vrot.slane %v233, 4
      %v236 = vshll.u32 %v185, 16
      %v238 = vrot.slane %v236, 5
      %v239 = vor.u32 %v235, %v238
      %v240 = vrot.slane %v239, 4
      %v242 = vshll.u32 %v195, 16
      %v244 = vrot.slane %v242, 5
      %v245 = vsel %vm203, %v240, %v244
      %v247 = vshrl.u32 %v186, 16
      %v249 = vrot.slane %v247, 4
      %v250 = vshll.u32 %v186, 16
      %v252 = vrot.slane %v250, 5
      %v253 = vor.u32 %v249, %v252
      %v254 = vrot.slane %v253, 4
      %v256 = vshll.u32 %v196, 16
      %v258 = vrot.slane %v256, 5
      %v259 = vsel %vm203, %v254, %v258
      %v261 = vshrl.u32 %v187, 16
      %v263 = vrot.slane %v261, 4
      %v264 = vshll.u32 %v187, 16
      %v266 = vrot.slane %v264, 5
      %v267 = vor.u32 %v263, %v266
      %v268 = vrot.slane %v267, 4
      %v270 = vshll.u32 %v197, 16
      %v272 = vrot.slane %v270, 5
      %v273 = vsel %vm203, %v268, %v272
      %v275 = vshrl.u32 %v188, 16
      %v277 = vrot.slane %v275, 4
      %v278 = vshll.u32 %v188, 16
      %v280 = vrot.slane %v278, 5
      %v281 = vor.u32 %v277, %v280
      %v282 = vrot.slane %v281, 4
      %v284 = vshll.u32 %v198, 16
      %v286 = vrot.slane %v284, 5
      %v287 = vsel %vm203, %v282, %v286
      %v289 = vshrl.u32 %v189, 16
      %v291 = vrot.slane %v289, 4
      %v292 = vshll.u32 %v189, 16
      %v294 = vrot.slane %v292, 5
      %v295 = vor.u32 %v291, %v294
      %v296 = vrot.slane %v295, 4
      %v298 = vshll.u32 %v199, 16
      %v300 = vrot.slane %v298, 5
      %v301 = vsel %vm203, %v296, %v300
      %v303 = vshrl.u32 %v190, 16
      %v305 = vrot.slane %v303, 4
      %v306 = vshll.u32 %v190, 16
      %v308 = vrot.slane %v306, 5
      %v309 = vor.u32 %v305, %v308
      %v310 = vrot.slane %v309, 4
      %v312 = vshll.u32 %v200, 16
      %v314 = vrot.slane %v312, 5
      %v315 = vsel %vm203, %v310, %v314
      %s316 = scalar_lea.vmem %s1, 8
      %v317 = vld [vmem:[%s316] sm:$0xf]
      %v318 = vld [vmem:[%s316 + $0x4] sm:$0xf]
      %v319 = vunpack.c.l.b16 %v217
      %v320 = vunpack.c.l.b16 %v231
      %v321 = vunpack.c.l.b16 %v245
      %v322 = vunpack.c.l.b16 %v259
      %v323 = vunpack.c.l.b16 %v273
      %v324 = vunpack.c.l.b16 %v287
      %v325 = vunpack.c.l.b16 %v301
      %v326 = vunpack.c.l.b16 %v315
      %v327 = vpack.c.b16 %v320, %v319
      %v328 = vpack.c.b16 %v322, %v321
      %v329 = vpack.c.b16 %v324, %v323
      %v330 = vpack.c.b16 %v326, %v325
      %v333 = vunpack.c.l.b16 %v317
      %v334 = vunpack.c.l.b16 %v318
      %v335 = vpack.c.b16 %v334, %v333
      %vm337 = vcmask 130048
      %v339 = vsel %vm337, %v327, 0
      %v342 = vsel %vm337, %v328, 0
      %v345 = vsel %vm337, %v329, 0
      %v348 = vsel %vm337, %v330, 0
      %350 = vmatprep.subr.bf16.mxu0 0
      %351 = vmatpush1.bf16.msra.mxu0 0
      %352 = vmatprep.subr.bf16.mxu0 0
      %353 = vmatpush1.bf16.msra.mxu0 0
      %354 = vmatprep.subr.bf16.mxu0 0
      %355 = vmatpush1.bf16.msra.mxu0 0
      %356 = vmatprep.subr.bf16.mxu0 0
      %357 = vmatpush1.bf16.msra.mxu0 0
      %358 = vmatprep.subr.bf16.mxu0 0
      %359 = vmatpush1.bf16.msra.mxu0 0
      %360 = vmatprep.subr.bf16.mxu0 0
      %361 = vmatpush1.bf16.msra.mxu0 0
      %362 = vmatprep.subr.bf16.mxu0 0
      %363 = vmatpush1.bf16.msra.mxu0 0
      %364 = vmatprep.subr.bf16.mxu0 0
      %365 = vmatpush1.bf16.msra.mxu0 %v335
      %366 = vmatprep.subr.bf16.mxu0 0
      %367 = vmatpush2.bf16.msra.mxu0 0
      %368 = vmatprep.subr.bf16.mxu0 0
      %369 = vmatpush2.bf16.msra.mxu0 0
      %370 = vmatprep.subr.bf16.mxu0 0
      %371 = vmatpush2.bf16.msra.mxu0 0
      %372 = vmatprep.subr.bf16.mxu0 0
      %373 = vmatpush2.bf16.msra.mxu0 0
      %374 = vmatprep.subr.bf16.mxu0 0
      %375 = vmatpush2.bf16.msra.mxu0 0
      %376 = vmatprep.subr.bf16.mxu0 0
      %377 = vmatpush2.bf16.msra.mxu0 0
      %378 = vmatprep.subr.bf16.mxu0 0
      %379 = vmatpush2.bf16.msra.mxu0 0
      %380 = vmatprep.subr.bf16.mxu0 0
      %381 = vmatpush2.bf16.msra.mxu0 0
      %382 = vmatprep.mubr.bf16.mxu0 0
      %383 = vmatmul.mubr.bf16.gmra.mxu0 %v339
      %v384 = vpop.f32.mrf.mxu0
      %v385 = vadd.f32 0.0, %v384
      %v386 = vpop.f32.mrf.mxu0
      %v387 = vpop.f32.mrf.mxu0
      %v388 = vadd.f32 0.0, %v387
      %v389 = vpop.f32.mrf.mxu0
      %390 = vmatprep.mubr.bf16.mxu0 0
      %391 = vmatmul.mubr.bf16.gmra.mxu0 %v342
      %v392 = vpop.f32.mrf.mxu0
      %v393 = vadd.f32 0.0, %v392
      %v394 = vpop.f32.mrf.mxu0
      %v395 = vpop.f32.mrf.mxu0
      %v396 = vadd.f32 0.0, %v395
      %v397 = vpop.f32.mrf.mxu0
      %398 = vmatprep.mubr.bf16.mxu0 0
      %399 = vmatmul.mubr.bf16.gmra.mxu0 %v345
      %v400 = vpop.f32.mrf.mxu0
      %v401 = vadd.f32 0.0, %v400
      %v402 = vpop.f32.mrf.mxu0
      %v403 = vpop.f32.mrf.mxu0
      %v404 = vadd.f32 0.0, %v403
      %v405 = vpop.f32.mrf.mxu0
      %406 = vmatprep.mubr.bf16.mxu0 0
      %407 = vmatmul.mubr.bf16.gmra.mxu0 %v348
      %v408 = vpop.f32.mrf.mxu0
      %v409 = vadd.f32 0.0, %v408
      %v410 = vpop.f32.mrf.mxu0
      %v411 = vpop.f32.mrf.mxu0
      %v412 = vadd.f32 0.0, %v411
      %v413 = vpop.f32.mrf.mxu0
      %414 = vdwg.mxu0
      %v423 = vunpack.c.l.b16 %v183
      %v424 = vunpack.c.l.b16 %v184
      %v425 = vunpack.c.l.b16 %v185
      %v426 = vunpack.c.l.b16 %v186
      %v427 = vunpack.c.l.b16 %v187
      %v428 = vunpack.c.l.b16 %v188
      %v429 = vunpack.c.l.b16 %v189
      %v430 = vunpack.c.l.b16 %v190
      %v431 = vpack.c.b16 %v424, %v423
      %v432 = vpack.c.b16 %v426, %v425
      %v433 = vpack.c.b16 %v428, %v427
      %v434 = vpack.c.b16 %v430, %v429
      %v437 = vunpack.c.l.b16 %v191
      %v438 = vunpack.c.l.b16 %v192
      %v439 = vpack.c.b16 %v438, %v437
      %v442 = vsel %vm337, %v431, 0
      %v445 = vsel %vm337, %v432, 0
      %v448 = vsel %vm337, %v433, 0
      %v451 = vsel %vm337, %v434, 0
      %453 = vmatprep.subr.bf16.mxu0 0
      %454 = vmatpush1.bf16.msra.mxu0 0
      %455 = vmatprep.subr.bf16.mxu0 0
      %456 = vmatpush1.bf16.msra.mxu0 0
      %457 = vmatprep.subr.bf16.mxu0 0
      %458 = vmatpush1.bf16.msra.mxu0 0
      %459 = vmatprep.subr.bf16.mxu0 0
      %460 = vmatpush1.bf16.msra.mxu0 0
      %461 = vmatprep.subr.bf16.mxu0 0
      %462 = vmatpush1.bf16.msra.mxu0 0
      %463 = vmatprep.subr.bf16.mxu0 0
      %464 = vmatpush1.bf16.msra.mxu0 0
      %465 = vmatprep.subr.bf16.mxu0 0
      %466 = vmatpush1.bf16.msra.mxu0 0
      %467 = vmatprep.subr.bf16.mxu0 0
      %468 = vmatpush1.bf16.msra.mxu0 %v439
      %469 = vmatprep.subr.bf16.mxu0 0
      %470 = vmatpush2.bf16.msra.mxu0 0
      %471 = vmatprep.subr.bf16.mxu0 0
      %472 = vmatpush2.bf16.msra.mxu0 0
      %473 = vmatprep.subr.bf16.mxu0 0
      %474 = vmatpush2.bf16.msra.mxu0 0
      %475 = vmatprep.subr.bf16.mxu0 0
      %476 = vmatpush2.bf16.msra.mxu0 0
      %477 = vmatprep.subr.bf16.mxu0 0
      %478 = vmatpush2.bf16.msra.mxu0 0
      %479 = vmatprep.subr.bf16.mxu0 0
      %480 = vmatpush2.bf16.msra.mxu0 0
      %481 = vmatprep.subr.bf16.mxu0 0
      %482 = vmatpush2.bf16.msra.mxu0 0
      %483 = vmatprep.subr.bf16.mxu0 0
      %484 = vmatpush2.bf16.msra.mxu0 0
      %485 = vmatprep.mubr.bf16.mxu0 0
      %486 = vmatmul.mubr.bf16.gmra.mxu0 %v442
      %v487 = vpop.f32.mrf.mxu0
      %v488 = vadd.f32 %v385, %v487
      %v489 = vpop.f32.mrf.mxu0
      %v490 = vpop.f32.mrf.mxu0
      %v491 = vadd.f32 %v388, %v490
      %v492 = vpop.f32.mrf.mxu0
      %493 = vmatprep.mubr.bf16.mxu0 0
      %494 = vmatmul.mubr.bf16.gmra.mxu0 %v445
      %v495 = vpop.f32.mrf.mxu0
      %v496 = vadd.f32 %v393, %v495
      %v497 = vpop.f32.mrf.mxu0
      %v498 = vpop.f32.mrf.mxu0
      %v499 = vadd.f32 %v396, %v498
      %v500 = vpop.f32.mrf.mxu0
      %501 = vmatprep.mubr.bf16.mxu0 0
      %502 = vmatmul.mubr.bf16.gmra.mxu0 %v448
      %v503 = vpop.f32.mrf.mxu0
      %v504 = vadd.f32 %v401, %v503
      %v505 = vpop.f32.mrf.mxu0
      %v506 = vpop.f32.mrf.mxu0
      %v507 = vadd.f32 %v404, %v506
      %v508 = vpop.f32.mrf.mxu0
      %509 = vmatprep.mubr.bf16.mxu0 0
      %510 = vmatmul.mubr.bf16.gmra.mxu0 %v451
      %v511 = vpop.f32.mrf.mxu0
      %v512 = vadd.f32 %v409, %v511
      %v513 = vpop.f32.mrf.mxu0
      %v514 = vpop.f32.mrf.mxu0
      %v515 = vadd.f32 %v412, %v514
      %v516 = vpop.f32.mrf.mxu0
      %517 = vdwg.mxu0
      %s518 = scalar_lea.vmem %s172, 8
      %v519 = vld [vmem:[%s518] sm:$0xf]
      %v520 = vld [vmem:[%s518 + $0x8] sm:$0xf]
      %v521 = vld [vmem:[%s518 + $0x10] sm:$0xf]
      %v522 = vld [vmem:[%s518 + $0x18] sm:$0xf]
      %v523 = vld [vmem:[%s518 + $0x20] sm:$0xf]
      %v524 = vld [vmem:[%s518 + $0x28] sm:$0xf]
      %v525 = vld [vmem:[%s518 + $0x30] sm:$0xf]
      %v526 = vld [vmem:[%s518 + $0x38] sm:$0xf]
      %s527 = scalar_lea.vmem %s1, 16
      %v528 = vld [vmem:[%s527] sm:$0xf]
      %v529 = vld [vmem:[%s527 + $0x4] sm:$0xf]
      %v538 = vunpack.c.l.b16 %v519
      %v539 = vunpack.c.l.b16 %v520
      %v540 = vunpack.c.l.b16 %v521
      %v541 = vunpack.c.l.b16 %v522
      %v542 = vunpack.c.l.b16 %v523
      %v543 = vunpack.c.l.b16 %v524
      %v544 = vunpack.c.l.b16 %v525
      %v545 = vunpack.c.l.b16 %v526
      %v546 = vpack.c.b16 %v539, %v538
      %v547 = vpack.c.b16 %v541, %v540
      %v548 = vpack.c.b16 %v543, %v542
      %v549 = vpack.c.b16 %v545, %v544
      %v552 = vunpack.c.l.b16 %v528
      %v553 = vunpack.c.l.b16 %v529
      %v554 = vpack.c.b16 %v553, %v552
      %v557 = vsel %vm337, %v546, 0
      %v560 = vsel %vm337, %v547, 0
      %v563 = vsel %vm337, %v548, 0
      %v566 = vsel %vm337, %v549, 0
      %568 = vmatprep.subr.bf16.mxu0 0
      %569 = vmatpush1.bf16.msra.mxu0 0
      %570 = vmatprep.subr.bf16.mxu0 0
      %571 = vmatpush1.bf16.msra.mxu0 0
      %572 = vmatprep.subr.bf16.mxu0 0
      %573 = vmatpush1.bf16.msra.mxu0 0
      %574 = vmatprep.subr.bf16.mxu0 0
      %575 = vmatpush1.bf16.msra.mxu0 0
      %576 = vmatprep.subr.bf16.mxu0 0
      %577 = vmatpush1.bf16.msra.mxu0 0
      %578 = vmatprep.subr.bf16.mxu0 0
      %579 = vmatpush1.bf16.msra.mxu0 0
      %580 = vmatprep.subr.bf16.mxu0 0
      %581 = vmatpush1.bf16.msra.mxu0 0
      %582 = vmatprep.subr.bf16.mxu0 0
      %583 = vmatpush1.bf16.msra.mxu0 %v554
      %584 = vmatprep.subr.bf16.mxu0 0
      %585 = vmatpush2.bf16.msra.mxu0 0
      %586 = vmatprep.subr.bf16.mxu0 0
      %587 = vmatpush2.bf16.msra.mxu0 0
      %588 = vmatprep.subr.bf16.mxu0 0
      %589 = vmatpush2.bf16.msra.mxu0 0
      %590 = vmatprep.subr.bf16.mxu0 0
      %591 = vmatpush2.bf16.msra.mxu0 0
      %592 = vmatprep.subr.bf16.mxu0 0
      %593 = vmatpush2.bf16.msra.mxu0 0
      %594 = vmatprep.subr.bf16.mxu0 0
      %595 = vmatpush2.bf16.msra.mxu0 0
      %596 = vmatprep.subr.bf16.mxu0 0
      %597 = vmatpush2.bf16.msra.mxu0 0
      %598 = vmatprep.subr.bf16.mxu0 0
      %599 = vmatpush2.bf16.msra.mxu0 0
      %600 = vmatprep.mubr.bf16.mxu0 0
      %601 = vmatmul.mubr.bf16.gmra.mxu0 %v557
      %v602 = vpop.f32.mrf.mxu0
      %v603 = vadd.f32 0.0, %v602
      %v604 = vpop.f32.mrf.mxu0
      %v605 = vpop.f32.mrf.mxu0
      %v606 = vadd.f32 0.0, %v605
      %v607 = vpop.f32.mrf.mxu0
      %608 = vmatprep.mubr.bf16.mxu0 0
      %609 = vmatmul.mubr.bf16.gmra.mxu0 %v560
      %v610 = vpop.f32.mrf.mxu0
      %v611 = vadd.f32 0.0, %v610
      %v612 = vpop.f32.mrf.mxu0
      %v613 = vpop.f32.mrf.mxu0
      %v614 = vadd.f32 0.0, %v613
      %v615 = vpop.f32.mrf.mxu0
      %616 = vmatprep.mubr.bf16.mxu0 0
      %617 = vmatmul.mubr.bf16.gmra.mxu0 %v563
      %v618 = vpop.f32.mrf.mxu0
      %v619 = vadd.f32 0.0, %v618
      %v620 = vpop.f32.mrf.mxu0
      %v621 = vpop.f32.mrf.mxu0
      %v622 = vadd.f32 0.0, %v621
      %v623 = vpop.f32.mrf.mxu0
      %624 = vmatprep.mubr.bf16.mxu0 0
      %625 = vmatmul.mubr.bf16.gmra.mxu0 %v566
      %v626 = vpop.f32.mrf.mxu0
      %v627 = vadd.f32 0.0, %v626
      %v628 = vpop.f32.mrf.mxu0
      %v629 = vpop.f32.mrf.mxu0
      %v630 = vadd.f32 0.0, %v629
      %v631 = vpop.f32.mrf.mxu0
      %632 = vdwg.mxu0
      %v633 = vadd.f32 %v488, %v603
      %v634 = vadd.f32 %v491, %v606
      %v635 = vadd.f32 %v496, %v611
      %v636 = vadd.f32 %v499, %v614
      %v637 = vadd.f32 %v504, %v619
      %v638 = vadd.f32 %v507, %v622
      %v639 = vadd.f32 %v512, %v627
      %v640 = vadd.f32 %v515, %v630
      %v641 = vld [vmem:[%s518] sm:$0xf]
      %v642 = vld [vmem:[%s518 + $0x4] sm:$0x1]
      %v643 = vld [vmem:[%s518 + $0x8] sm:$0xf]
      %v644 = vld [vmem:[%s518 + $0xc] sm:$0x1]
      %v645 = vld [vmem:[%s518 + $0x10] sm:$0xf]
      %v646 = vld [vmem:[%s518 + $0x14] sm:$0x1]
      %v647 = vld [vmem:[%s518 + $0x18] sm:$0xf]
      %v648 = vld [vmem:[%s518 + $0x1c] sm:$0x1]
      %v649 = vld [vmem:[%s518 + $0x20] sm:$0xf]
      %v650 = vld [vmem:[%s518 + $0x24] sm:$0x1]
      %v651 = vld [vmem:[%s518 + $0x28] sm:$0xf]
      %v652 = vld [vmem:[%s518 + $0x2c] sm:$0x1]
      %v653 = vld [vmem:[%s518 + $0x30] sm:$0xf]
      %v654 = vld [vmem:[%s518 + $0x34] sm:$0x1]
      %v655 = vld [vmem:[%s518 + $0x38] sm:$0xf]
      %v656 = vld [vmem:[%s518 + $0x3c] sm:$0x1]
      %v658 = vshrl.u32 %v641, 16
      %v660 = vrot.slane %v658, 4
      %v661 = vshll.u32 %v641, 16
      %v663 = vrot.slane %v661, 5
      %v664 = vor.u32 %v660, %v663
      %v665 = vrot.slane %v664, 4
      %v667 = vshll.u32 %v642, 16
      %v669 = vrot.slane %v667, 5
      %v670 = vsel %vm203, %v665, %v669
      %v672 = vshrl.u32 %v643, 16
      %v674 = vrot.slane %v672, 4
      %v675 = vshll.u32 %v643, 16
      %v677 = vrot.slane %v675, 5
      %v678 = vor.u32 %v674, %v677
      %v679 = vrot.slane %v678, 4
      %v681 = vshll.u32 %v644, 16
      %v683 = vrot.slane %v681, 5
      %v684 = vsel %vm203, %v679, %v683
      %v686 = vshrl.u32 %v645, 16
      %v688 = vrot.slane %v686, 4
      %v689 = vshll.u32 %v645, 16
      %v691 = vrot.slane %v689, 5
      %v692 = vor.u32 %v688, %v691
      %v693 = vrot.slane %v692, 4
      %v695 = vshll.u32 %v646, 16
      %v697 = vrot.slane %v695, 5
      %v698 = vsel %vm203, %v693, %v697
      %v700 = vshrl.u32 %v647, 16
      %v702 = vrot.slane %v700, 4
      %v703 = vshll.u32 %v647, 16
      %v705 = vrot.slane %v703, 5
      %v706 = vor.u32 %v702, %v705
      %v707 = vrot.slane %v706, 4
      %v709 = vshll.u32 %v648, 16
      %v711 = vrot.slane %v709, 5
      %v712 = vsel %vm203, %v707, %v711
      %v714 = vshrl.u32 %v649, 16
      %v716 = vrot.slane %v714, 4
      %v717 = vshll.u32 %v649, 16
      %v719 = vrot.slane %v717, 5
      %v720 = vor.u32 %v716, %v719
      %v721 = vrot.slane %v720, 4
      %v723 = vshll.u32 %v650, 16
      %v725 = vrot.slane %v723, 5
      %v726 = vsel %vm203, %v721, %v725
      %v728 = vshrl.u32 %v651, 16
      %v730 = vrot.slane %v728, 4
      %v731 = vshll.u32 %v651, 16
      %v733 = vrot.slane %v731, 5
      %v734 = vor.u32 %v730, %v733
      %v735 = vrot.slane %v734, 4
      %v737 = vshll.u32 %v652, 16
      %v739 = vrot.slane %v737, 5
      %v740 = vsel %vm203, %v735, %v739
      %v742 = vshrl.u32 %v653, 16
      %v744 = vrot.slane %v742, 4
      %v745 = vshll.u32 %v653, 16
      %v747 = vrot.slane %v745, 5
      %v748 = vor.u32 %v744, %v747
      %v749 = vrot.slane %v748, 4
      %v751 = vshll.u32 %v654, 16
      %v753 = vrot.slane %v751, 5
      %v754 = vsel %vm203, %v749, %v753
      %v756 = vshrl.u32 %v655, 16
      %v758 = vrot.slane %v756, 4
      %v759 = vshll.u32 %v655, 16
      %v761 = vrot.slane %v759, 5
      %v762 = vor.u32 %v758, %v761
      %v763 = vrot.slane %v762, 4
      %v765 = vshll.u32 %v656, 16
      %v767 = vrot.slane %v765, 5
      %v768 = vsel %vm203, %v763, %v767
      %s769 = scalar_lea.vmem %s1, 24
      %v770 = vld [vmem:[%s769] sm:$0xf]
      %v771 = vld [vmem:[%s769 + $0x4] sm:$0xf]
      %v772 = vunpack.c.l.b16 %v670
      %v773 = vunpack.c.l.b16 %v684
      %v774 = vunpack.c.l.b16 %v698
      %v775 = vunpack.c.l.b16 %v712
      %v776 = vunpack.c.l.b16 %v726
      %v777 = vunpack.c.l.b16 %v740
      %v778 = vunpack.c.l.b16 %v754
      %v779 = vunpack.c.l.b16 %v768
      %v780 = vpack.c.b16 %v773, %v772
      %v781 = vpack.c.b16 %v775, %v774
      %v782 = vpack.c.b16 %v777, %v776
      %v783 = vpack.c.b16 %v779, %v778
      %v786 = vunpack.c.l.b16 %v770
      %v787 = vunpack.c.l.b16 %v771
      %v788 = vpack.c.b16 %v787, %v786
      %v791 = vsel %vm337, %v780, 0
      %v794 = vsel %vm337, %v781, 0
      %v797 = vsel %vm337, %v782, 0
      %v800 = vsel %vm337, %v783, 0
      %802 = vmatprep.subr.bf16.mxu0 0
      %803 = vmatpush1.bf16.msra.mxu0 0
      %804 = vmatprep.subr.bf16.mxu0 0
      %805 = vmatpush1.bf16.msra.mxu0 0
      %806 = vmatprep.subr.bf16.mxu0 0
      %807 = vmatpush1.bf16.msra.mxu0 0
      %808 = vmatprep.subr.bf16.mxu0 0
      %809 = vmatpush1.bf16.msra.mxu0 0
      %810 = vmatprep.subr.bf16.mxu0 0
      %811 = vmatpush1.bf16.msra.mxu0 0
      %812 = vmatprep.subr.bf16.mxu0 0
      %813 = vmatpush1.bf16.msra.mxu0 0
      %814 = vmatprep.subr.bf16.mxu0 0
      %815 = vmatpush1.bf16.msra.mxu0 0
      %816 = vmatprep.subr.bf16.mxu0 0
      %817 = vmatpush1.bf16.msra.mxu0 %v788
      %818 = vmatprep.subr.bf16.mxu0 0
      %819 = vmatpush2.bf16.msra.mxu0 0
      %820 = vmatprep.subr.bf16.mxu0 0
      %821 = vmatpush2.bf16.msra.mxu0 0
      %822 = vmatprep.subr.bf16.mxu0 0
      %823 = vmatpush2.bf16.msra.mxu0 0
      %824 = vmatprep.subr.bf16.mxu0 0
      %825 = vmatpush2.bf16.msra.mxu0 0
      %826 = vmatprep.subr.bf16.mxu0 0
      %827 = vmatpush2.bf16.msra.mxu0 0
      %828 = vmatprep.subr.bf16.mxu0 0
      %829 = vmatpush2.bf16.msra.mxu0 0
      %830 = vmatprep.subr.bf16.mxu0 0
      %831 = vmatpush2.bf16.msra.mxu0 0
      %832 = vmatprep.subr.bf16.mxu0 0
      %833 = vmatpush2.bf16.msra.mxu0 0
      %834 = vmatprep.mubr.bf16.mxu0 0
      %835 = vmatmul.mubr.bf16.gmra.mxu0 %v791
      %v836 = vpop.f32.mrf.mxu0
      %v837 = vadd.f32 0.0, %v836
      %v838 = vpop.f32.mrf.mxu0
      %v839 = vpop.f32.mrf.mxu0
      %v840 = vadd.f32 0.0, %v839
      %v841 = vpop.f32.mrf.mxu0
      %842 = vmatprep.mubr.bf16.mxu0 0
      %843 = vmatmul.mubr.bf16.gmra.mxu0 %v794
      %v844 = vpop.f32.mrf.mxu0
      %v845 = vadd.f32 0.0, %v844
      %v846 = vpop.f32.mrf.mxu0
      %v847 = vpop.f32.mrf.mxu0
      %v848 = vadd.f32 0.0, %v847
      %v849 = vpop.f32.mrf.mxu0
      %850 = vmatprep.mubr.bf16.mxu0 0
      %851 = vmatmul.mubr.bf16.gmra.mxu0 %v797
      %v852 = vpop.f32.mrf.mxu0
      %v853 = vadd.f32 0.0, %v852
      %v854 = vpop.f32.mrf.mxu0
      %v855 = vpop.f32.mrf.mxu0
      %v856 = vadd.f32 0.0, %v855
      %v857 = vpop.f32.mrf.mxu0
      %858 = vmatprep.mubr.bf16.mxu0 0
      %859 = vmatmul.mubr.bf16.gmra.mxu0 %v800
      %v860 = vpop.f32.mrf.mxu0
      %v861 = vadd.f32 0.0, %v860
      %v862 = vpop.f32.mrf.mxu0
      %v863 = vpop.f32.mrf.mxu0
      %v864 = vadd.f32 0.0, %v863
      %v865 = vpop.f32.mrf.mxu0
      %866 = vdwg.mxu0
      %v867 = vadd.f32 %v633, %v837
      %v868 = vadd.f32 %v634, %v840
      %v869 = vadd.f32 %v635, %v845
      %v870 = vadd.f32 %v636, %v848
      %v871 = vadd.f32 %v637, %v853
      %v872 = vadd.f32 %v638, %v856
      %v873 = vadd.f32 %v639, %v861
      %v874 = vadd.f32 %v640, %v864
      %v875 = vadd.f32 %v867, %v868
      %v876 = vadd.f32 %v875, %v869
      %v877 = vadd.f32 %v876, %v870
      %v878 = vadd.f32 %v877, %v871
      %v879 = vadd.f32 %v878, %v872
      %v880 = vadd.f32 %v879, %v873
      %v881 = vadd.f32 %v880, %v874
      %v882 = vrot.slane %v881, 4
      %v883 = vadd.f32 %v881, %v882
      %v884 = vrot.slane %v883, 2
      %v885 = vadd.f32 %v883, %v884
      %v886 = vrot.slane %v885, 1
      %v887 = vadd.f32 %v885, %v886
      %v888 = vmul.f32 %v867, %v867
      %v889 = vmul.f32 %v868, %v868
      %v890 = vmul.f32 %v869, %v869
      %v891 = vmul.f32 %v870, %v870
      %v892 = vmul.f32 %v871, %v871
      %v893 = vmul.f32 %v872, %v872
      %v894 = vmul.f32 %v873, %v873
      %v895 = vmul.f32 %v874, %v874
      %v896 = vadd.f32 %v888, %v889
      %v897 = vadd.f32 %v896, %v890
      %v898 = vadd.f32 %v897, %v891
      %v899 = vadd.f32 %v898, %v892
      %v900 = vadd.f32 %v899, %v893
      %v901 = vadd.f32 %v900, %v894
      %v902 = vadd.f32 %v901, %v895
      %v903 = vrot.slane %v902, 4
      %v904 = vadd.f32 %v902, %v903
      %v905 = vrot.slane %v904, 2
      %v906 = vadd.f32 %v904, %v905
      %v907 = vrot.slane %v906, 1
      %v908 = vadd.f32 %v906, %v907
      %v909 = vlaneseq
      %v910 = vshrl.u32 %v909, 7
      %vm911 = vcmp.eq.s32.totalorder %v910, 0
      %vm912 = vcmp.eq.s32.totalorder %v910, 1
      %v913 = vsel %vm912, %v908, 0.0
      %v914 = vsel %vm911, %v887, %v913
      %915 = vst [vmem:[%s181] sm:$0xff] %v914
      %v916 = vpack.c.bf16 %v868, %v867
      %v917 = vpack.c.bf16 %v870, %v869
      %v918 = vpack.c.bf16 %v872, %v871
      %v919 = vpack.c.bf16 %v874, %v873
      %920 = vst [vmem:[%s177] sm:$0xf] 0
      %921 = vst [vmem:[%s177 + $0x4] sm:$0x1] 0
      %922 = vst [vmem:[%s177 + $0x8] sm:$0xf] 0
      %923 = vst [vmem:[%s177 + $0xc] sm:$0x1] 0
      %924 = vst [vmem:[%s177 + $0x10] sm:$0xf] 0
      %925 = vst [vmem:[%s177 + $0x14] sm:$0x1] 0
      %926 = vst [vmem:[%s177 + $0x18] sm:$0xf] 0
      %927 = vst [vmem:[%s177 + $0x1c] sm:$0x1] 0
      %928 = vst [vmem:[%s177 + $0x20] sm:$0xf] 0
      %929 = vst [vmem:[%s177 + $0x24] sm:$0x1] 0
      %930 = vst [vmem:[%s177 + $0x28] sm:$0xf] 0
      %931 = vst [vmem:[%s177 + $0x2c] sm:$0x1] 0
      %932 = vst [vmem:[%s177 + $0x30] sm:$0xf] 0
      %933 = vst [vmem:[%s177 + $0x34] sm:$0x1] 0
      %934 = vst [vmem:[%s177 + $0x38] sm:$0xf] 0
      %935 = vst [vmem:[%s177 + $0x3c] sm:$0x1] 0
      %936 = vst [vmem:[%s177 + $0x40] sm:$0xf] 0
      %937 = vst [vmem:[%s177 + $0x44] sm:$0x1] 0
      %938 = vst [vmem:[%s177 + $0x48] sm:$0xf] 0
      %939 = vst [vmem:[%s177 + $0x4c] sm:$0x1] 0
      %v944 = vunpack.c.l.b16 %v916
      %v945 = vunpack.c.h.b16 %v916
      %v946 = vunpack.c.l.b16 %v917
      %v947 = vunpack.c.h.b16 %v917
      %v948 = vunpack.c.l.b16 %v918
      %v949 = vunpack.c.h.b16 %v918
      %v950 = vunpack.c.l.b16 %v919
      %v951 = vunpack.c.h.b16 %v919
      %v952 = vpack.c.b16 %v944, %v944
      %v953 = vpack.c.b16 %v945, %v945
      %v954 = vpack.c.b16 %v946, %v946
      %v955 = vpack.c.b16 %v947, %v947
      %v956 = vpack.c.b16 %v948, %v948
      %v957 = vpack.c.b16 %v949, %v949
      %v958 = vpack.c.b16 %v950, %v950
      %v959 = vpack.c.b16 %v951, %v951
      %v961 = vshrl.u32 %v952, 16
      %v963 = vrot.slane %v961, 7
      %v964 = vshll.u32 %v952, 16
      %v966 = vor.u32 %v963, %v964
      %v967 = vrot.slane %v963, 4
      %v969 = vshrl.u32 %v953, 16
      %v971 = vrot.slane %v969, 7
      %v972 = vshll.u32 %v953, 16
      %v974 = vor.u32 %v971, %v972
      %v975 = vrot.slane %v971, 4
      %v977 = vshrl.u32 %v954, 16
      %v979 = vrot.slane %v977, 7
      %v980 = vshll.u32 %v954, 16
      %v982 = vor.u32 %v979, %v980
      %v983 = vrot.slane %v979, 4
      %v985 = vshrl.u32 %v955, 16
      %v987 = vrot.slane %v985, 7
      %v988 = vshll.u32 %v955, 16
      %v990 = vor.u32 %v987, %v988
      %v991 = vrot.slane %v987, 4
      %v993 = vshrl.u32 %v956, 16
      %v995 = vrot.slane %v993, 7
      %v996 = vshll.u32 %v956, 16
      %v998 = vor.u32 %v995, %v996
      %v999 = vrot.slane %v995, 4
      %v1001 = vshrl.u32 %v957, 16
      %v1003 = vrot.slane %v1001, 7
      %v1004 = vshll.u32 %v957, 16
      %v1006 = vor.u32 %v1003, %v1004
      %v1007 = vrot.slane %v1003, 4
      %v1009 = vshrl.u32 %v958, 16
      %v1011 = vrot.slane %v1009, 7
      %v1012 = vshll.u32 %v958, 16
      %v1014 = vor.u32 %v1011, %v1012
      %v1015 = vrot.slane %v1011, 4
      %v1017 = vshrl.u32 %v959, 16
      %v1019 = vrot.slane %v1017, 7
      %v1020 = vshll.u32 %v959, 16
      %v1022 = vor.u32 %v1019, %v1020
      %v1023 = vrot.slane %v1019, 4
      %s1040 = scalar_lea.vmem %s177, 8
      %vm1041 = vcmask 1043456
      %vm1042 = vsmask.f32 7938
      %vm1043 = vmand %vm1041, %vm1042
      %v1044 = vld [vmem:[%s1040] sm:$0xf]
      %v1045 = vsel %vm1043, %v966, %v1044
      %1046 = vst [vmem:[%s1040] sm:$0xf] %v1045
      %vm1047 = vcmask 1040384
      %vm1048 = vsmask.f32 256
      %vm1049 = vmand %vm1047, %vm1048
      %v1050 = vld [vmem:[%s1040 + $0x4] sm:$0x1]
      %v1051 = vsel %vm1049, %v967, %v1050
      %1052 = vst [vmem:[%s1040 + $0x4] sm:$0x1] %v1051
      %v1053 = vld [vmem:[%s1040 + $0x8] sm:$0xf]
      %v1054 = vsel %vm1043, %v974, %v1053
      %1055 = vst [vmem:[%s1040 + $0x8] sm:$0xf] %v1054
      %v1056 = vld [vmem:[%s1040 + $0xc] sm:$0x1]
      %v1057 = vsel %vm1049, %v975, %v1056
      %1058 = vst [vmem:[%s1040 + $0xc] sm:$0x1] %v1057
      %v1059 = vld [vmem:[%s1040 + $0x10] sm:$0xf]
      %v1060 = vsel %vm1043, %v982, %v1059
      %1061 = vst [vmem:[%s1040 + $0x10] sm:$0xf] %v1060
      %v1062 = vld [vmem:[%s1040 + $0x14] sm:$0x1]
      %v1063 = vsel %vm1049, %v983, %v1062
      %1064 = vst [vmem:[%s1040 + $0x14] sm:$0x1] %v1063
      %v1065 = vld [vmem:[%s1040 + $0x18] sm:$0xf]
      %v1066 = vsel %vm1043, %v990, %v1065
      %1067 = vst [vmem:[%s1040 + $0x18] sm:$0xf] %v1066
      %v1068 = vld [vmem:[%s1040 + $0x1c] sm:$0x1]
      %v1069 = vsel %vm1049, %v991, %v1068
      %1070 = vst [vmem:[%s1040 + $0x1c] sm:$0x1] %v1069
      %v1071 = vld [vmem:[%s1040 + $0x20] sm:$0xf]
      %v1072 = vsel %vm1043, %v998, %v1071
      %1073 = vst [vmem:[%s1040 + $0x20] sm:$0xf] %v1072
      %v1074 = vld [vmem:[%s1040 + $0x24] sm:$0x1]
      %v1075 = vsel %vm1049, %v999, %v1074
      %1076 = vst [vmem:[%s1040 + $0x24] sm:$0x1] %v1075
      %v1077 = vld [vmem:[%s1040 + $0x28] sm:$0xf]
      %v1078 = vsel %vm1043, %v1006, %v1077
      %1079 = vst [vmem:[%s1040 + $0x28] sm:$0xf] %v1078
      %v1080 = vld [vmem:[%s1040 + $0x2c] sm:$0x1]
      %v1081 = vsel %vm1049, %v1007, %v1080
      %1082 = vst [vmem:[%s1040 + $0x2c] sm:$0x1] %v1081
      %v1083 = vld [vmem:[%s1040 + $0x30] sm:$0xf]
      %v1084 = vsel %vm1043, %v1014, %v1083
      %1085 = vst [vmem:[%s1040 + $0x30] sm:$0xf] %v1084
      %v1086 = vld [vmem:[%s1040 + $0x34] sm:$0x1]
      %v1087 = vsel %vm1049, %v1015, %v1086
      %1088 = vst [vmem:[%s1040 + $0x34] sm:$0x1] %v1087
      %v1089 = vld [vmem:[%s1040 + $0x38] sm:$0xf]
      %v1090 = vsel %vm1043, %v1022, %v1089
      %1091 = vst [vmem:[%s1040 + $0x38] sm:$0xf] %v1090
      %v1092 = vld [vmem:[%s1040 + $0x3c] sm:$0x1]
      %v1093 = vsel %vm1049, %v1023, %v1092
      %1094 = vst [vmem:[%s1040 + $0x3c] sm:$0x1] %v1093
      %p1095 = scmp.lt.s32.totalorder %s15, 1
      %s1096 = scalar_select %p1095, %s15, 1
      %s1097 = smul.addr %s1096, 20
      %s1098 = smul.addr %s1097, 4
      %s1099 = scalar_lea.vmem %s2, %s1098
      %p1100 = scmp.lt.s32.totalorder %s15, 1
      %s1101 = scalar_select %p1100, %s15, 1
      %s1102 = smul.addr %s1101, 8
      %s1103 = scalar_lea.vmem %s3, %s1102
      // Predicated region
      $region29: #{basic_block_forward.4} parent=27 // pred_check
        %p1104 = pneg %p80
      $region30: #{basic_block_forward.4} parent=27 // pred_check_branch
        %1106 = sbr.rel (%p1104) target = $region32
      $region31: #{basic_block_forward.4} parent=27 // pred_region
        _
      $region32: #{basic_block_forward.4} parent=27 // pred_fallthru
        _
      // Predicated region
      $region33: #{basic_block_forward.4} parent=27 // pred_check
        %p1107 = pneg %p106
      $region34: #{basic_block_forward.4} parent=27 // pred_check_branch
        %1109 = sbr.rel (%p1107) target = $region36
      $region35: #{basic_block_forward.4} parent=27 // pred_region
        _
      $region36: #{basic_block_forward.4} parent=27 // pred_fallthru
        _
    $region28: #{basic_block_forward.4} parent=5 // pred_fallthru
      _
    %p1110 = scmp.le.s32.totalorder 2, %s10
    // Predicated region
    $region37: #{basic_block_forward.4} parent=5 // pred_check
      %p1111 = pneg %p1110
    $region38: #{basic_block_forward.4} parent=5 // pred_check_branch
      %1113 = sbr.rel (%p1111) target = $region40
    $region39: #{basic_block_forward.4} parent=5 // pred_region
      %s1114 = ssub.s32 %s10, 2
      // Predicated region
      $region41: #{basic_block_forward.4} parent=39 // pred_check
        %p1115 = pneg %p86
      $region42: #{basic_block_forward.4} parent=39 // pred_check_branch
        %1117 = sbr.rel (%p1115) target = $region44
      $region43: #{basic_block_forward.4} parent=39 // pred_region
        %p1118 = scmp.lt.s32.totalorder %s16, 1
        %s1119 = scalar_select %p1118, %s16, 1
        %s1120 = smul.addr %s1119, 20
        %s1121 = smul.addr %s1120, 4
        %s1122 = scalar_lea.vmem %s2, %s1121
      $region44: #{basic_block_forward.4} parent=39 // pred_fallthru
        _
      // Predicated region
      $region45: #{basic_block_forward.4} parent=39 // pred_check
        %p1123 = pneg %p112
      $region46: #{basic_block_forward.4} parent=39 // pred_check_branch
        %1125 = sbr.rel (%p1123) target = $region48
      $region47: #{basic_block_forward.4} parent=39 // pred_region
        %p1126 = scmp.lt.s32.totalorder %s16, 1
        %s1127 = scalar_select %p1126, %s16, 1
        %s1128 = smul.addr %s1127, 8
        %s1129 = scalar_lea.vmem %s3, %s1128
      $region48: #{basic_block_forward.4} parent=39 // pred_fallthru
        _
    $region40: #{basic_block_forward.4} parent=5 // pred_fallthru
      _
  $region6: #{basic_block_forward.4} parent=0 // loop_footer
    %s14 = sadd.s32 1, %s10
  $region7: #{basic_block_forward.4} parent=0 // loop_footer_branch
    %9 = sbr.rel target = $region3
  $region8: #{basic_block_forward.4} parent=0 // loop_exit
    _

// kernel: basic_block_forward.6
$region0: #{basic_block_forward.6}
  #allocation0 [shape = 'u32[]', space=smem, size = 0x4, offset = 0x4, fixed_abs, tag = 'smem constant byte address 0x4 - core index']
  #allocation1 [shape = 'u32[144,128]{1,0:T(1,128)}', space=vmem, size = 0x12000, scoped, tag = 'internal scratch']
  %s0 = inlined_call_operand.vmem [shape: bf16[2,8,8,4], index: 0, kind: input, shape index: {}]
  %s1 = inlined_call_operand.vmem [shape: bf16[1,4,128], index: 1, kind: input, shape index: {}]
  %s2 = inlined_call_operand.vmem [shape: bf16[2,64,128], index: 2, kind: output, shape index: {0}]
  %s3 = inlined_call_operand.vmem [shape: f32[2,8,128], index: 3, kind: output, shape index: {1}]
  %4 = xla_tuple %s2, %s3
  %s5 = sld [smem:[#allocation0]]
  $region49: #{basic_block_forward.6} parent=0
    _
  %s7 = ssub.s32 1, %s5
  %s8 = scalar_select 0, %s7, %s5
  loop: start=0, step=1, limit=4
  $region2: #{basic_block_forward.6} parent=0 // loop_pre_header
    _
  $region3: #{basic_block_forward.6} parent=0 // loop_header
    %s10 = sphi 0, %s14
    %p11 = scmp.ge.s32.totalorder %s10, 4
    %s20 = sphi 0, %s22
    %s23 = sphi 0, %s20
    %s24 = sphi 0, %s23
    %s40 = sphi 0, %s24
    %s44 = sphi 0, %s44
    %s46 = sphi 0, %s44
    %s47 = sphi 0, %s46
    %s61 = sphi 0, %s47
    %s67 = sphi 0, %s69
    %s70 = sphi 0, %s67
    %s71 = sphi 0, %s70
    %s87 = sphi 0, %s71
    %s93 = sphi 0, %s95
    %s96 = sphi 0, %s93
    %s97 = sphi 0, %s96
    %s113 = sphi 0, %s97
  $region4: #{basic_block_forward.6} parent=0 // loop_header_branch
    %13 = sbr.rel (%p11) target = $region8
  $region5: #{basic_block_forward.6} parent=0 // loop_body
    %s15 = ssub.s32 %s10, 1
    %s16 = ssub.s32 %s10, 2
    %s17 = sadd.s32 %s10, 1
    %s18 = ssub.s32 %s10, %s17
    %p19 = scmp.eq.s32.totalorder %s18, 0
    %s21 = sadd.s32 %s20, 1
    %s22 = scalar_select %p19, %s20, %s21
    %p25 = pneg %p19
    %p26 = scmp.eq.s32.totalorder %s10, 1
    %p27 = por %p25, %p26
    %p28 = scmp.ne.s32.totalorder %s20, %s23
    %p29 = scmp.eq.s32.totalorder %s10, 0
    %p30 = por %p28, %p29
    %p31 = scmp.ne.s32.totalorder %s20, %s23
    %p32 = scmp.eq.s32.totalorder %s15, 1
    %p33 = por %p31, %p32
    %p34 = scmp.ne.s32.totalorder %s23, %s24
    %p35 = scmp.eq.s32.totalorder %s15, 0
    %p36 = por %p34, %p35
    %p37 = scmp.ne.s32.totalorder %s23, %s24
    %p38 = scmp.eq.s32.totalorder %s16, 1
    %p39 = por %p37, %p38
    %p41 = scmp.ne.s32.totalorder %s24, %s40
    %p42 = scmp.eq.s32.totalorder %s16, 0
    %p43 = por %p41, %p42
    %s45 = sadd.s32 %s44, 1
    %p48 = scmp.eq.s32.totalorder %s10, 1
    %p49 = scmp.ne.s32.totalorder %s44, %s46
    %p50 = scmp.eq.s32.totalorder %s10, 0
    %p51 = por %p49, %p50
    %p52 = scmp.ne.s32.totalorder %s44, %s46
    %p53 = scmp.eq.s32.totalorder %s15, 1
    %p54 = por %p52, %p53
    %p55 = scmp.ne.s32.totalorder %s46, %s47
    %p56 = scmp.eq.s32.totalorder %s15, 0
    %p57 = por %p55, %p56
    %p58 = scmp.ne.s32.totalorder %s46, %s47
    %p59 = scmp.eq.s32.totalorder %s16, 1
    %p60 = por %p58, %p59
    %p62 = scmp.ne.s32.totalorder %s47, %s61
    %p63 = scmp.eq.s32.totalorder %s16, 0
    %p64 = por %p62, %p63
    %s65 = ssub.s32 %s10, %s17
    %p66 = scmp.eq.s32.totalorder %s65, 0
    %s68 = sadd.s32 %s67, 1
    %s69 = scalar_select %p66, %s67, %s68
    %p72 = pneg %p66
    %p73 = scmp.eq.s32.totalorder %s10, 1
    %p74 = por %p72, %p73
    %p75 = scmp.ne.s32.totalorder %s67, %s70
    %p76 = scmp.eq.s32.totalorder %s10, 0
    %p77 = por %p75, %p76
    %p78 = scmp.ne.s32.totalorder %s67, %s70
    %p79 = scmp.eq.s32.totalorder %s15, 1
    %p80 = por %p78, %p79
    %p81 = scmp.ne.s32.totalorder %s70, %s71
    %p82 = scmp.eq.s32.totalorder %s15, 0
    %p83 = por %p81, %p82
    %p84 = scmp.ne.s32.totalorder %s70, %s71
    %p85 = scmp.eq.s32.totalorder %s16, 1
    %p86 = por %p84, %p85
    %p88 = scmp.ne.s32.totalorder %s71, %s87
    %p89 = scmp.eq.s32.totalorder %s16, 0
    %p90 = por %p88, %p89
    %s91 = ssub.s32 %s10, %s17
    %p92 = scmp.eq.s32.totalorder %s91, 0
    %s94 = sadd.s32 %s93, 1
    %s95 = scalar_select %p92, %s93, %s94
    %p98 = pneg %p92
    %p99 = scmp.eq.s32.totalorder %s10, 1
    %p100 = por %p98, %p99
    %p101 = scmp.ne.s32.totalorder %s93, %s96
    %p102 = scmp.eq.s32.totalorder %s10, 0
    %p103 = por %p101, %p102
    %p104 = scmp.ne.s32.totalorder %s93, %s96
    %p105 = scmp.eq.s32.totalorder %s15, 1
    %p106 = por %p104, %p105
    %p107 = scmp.ne.s32.totalorder %s96, %s97
    %p108 = scmp.eq.s32.totalorder %s15, 0
    %p109 = por %p107, %p108
    %p110 = scmp.ne.s32.totalorder %s96, %s97
    %p111 = scmp.eq.s32.totalorder %s16, 1
    %p112 = por %p110, %p111
    %p114 = scmp.ne.s32.totalorder %s97, %s113
    %p115 = scmp.eq.s32.totalorder %s16, 0
    %p116 = por %p114, %p115
    %p117 = scmp.le.s32.totalorder 1, %s10
    %p118 = scmp.lt.s32.totalorder %s10, 3
    %p119 = pnand %p117, %p118
    %p120 = pneg %p119
    // Predicated region
    $region9: #{basic_block_forward.6} parent=5 // pred_check
      _
    $region10: #{basic_block_forward.6} parent=5 // pred_check_branch
      %122 = sbr.rel (%p119) target = $region12
    $region11: #{basic_block_forward.6} parent=5 // pred_region
      %s123 = ssub.s32 %s10, 1
      // Predicated region
      $region13: #{basic_block_forward.6} parent=11 // pred_check
        %p124 = pneg %p57
      $region14: #{basic_block_forward.6} parent=11 // pred_check_branch
        %126 = sbr.rel (%p124) target = $region16
      $region15: #{basic_block_forward.6} parent=11 // pred_region
        _
      $region16: #{basic_block_forward.6} parent=11 // pred_fallthru
        _
    $region12: #{basic_block_forward.6} parent=5 // pred_fallthru
      _
    %p127 = scmp.lt.s32.totalorder %s10, 2
    // Predicated region
    $region17: #{basic_block_forward.6} parent=5 // pred_check
      %p128 = pneg %p127
    $region18: #{basic_block_forward.6} parent=5 // pred_check_branch
      %130 = sbr.rel (%p128) target = $region20
    $region19: #{basic_block_forward.6} parent=5 // pred_region
      // Predicated region
      $region21: #{basic_block_forward.6} parent=19 // pred_check
        %p131 = pneg %p30
      $region22: #{basic_block_forward.6} parent=19 // pred_check_branch
        %133 = sbr.rel (%p131) target = $region24
      $region23: #{basic_block_forward.6} parent=19 // pred_region
        %p134 = scmp.lt.s32.totalorder %s10, 1
        %s135 = scalar_select %p134, %s10, 1
        %s136 = smul.addr %s135, 8
        %s137 = smul.addr %s136, 4
        %s138 = scalar_lea.vmem %s0, %s137
      $region24: #{basic_block_forward.6} parent=19 // pred_fallthru
        _
    $region20: #{basic_block_forward.6} parent=5 // pred_fallthru
      _
    %p139 = scmp.le.s32.totalorder 1, %s10
    %p140 = scmp.lt.s32.totalorder %s10, 3
    %p141 = pnand %p139, %p140
    %p142 = pneg %p141
    // Predicated region
    $region25: #{basic_block_forward.6} parent=5 // pred_check
      _
    $region26: #{basic_block_forward.6} parent=5 // pred_check_branch
      %144 = sbr.rel (%p141) target = $region28
    $region27: #{basic_block_forward.6} parent=5 // pred_region
      %s145 = ssub.s32 %s10, 1
      %p146 = scmp.lt.s32.totalorder %s15, 1
      %s147 = scalar_select %p146, %s15, 1
      %s148 = smul.addr %s147, 8
      %s149 = smul.addr %s148, 4
      %s150 = scalar_lea.vmem %s0, %s149
      %p151 = pneg %p36
      %p152 = pneg %p33
      %p153 = pneg %p57
      %p154 = pneg %p54
      %p155 = pneg %p83
      %p156 = pneg %p80
      %p157 = scmp.lt.s32.totalorder %s15, 1
      %s158 = scalar_select %p157, %s15, 1
      %s159 = smul.addr %s158, 8
      %s160 = smul.addr %s159, 4
      %s161 = scalar_lea.vmem %s2, %s160
      %p162 = pneg %p109
      %p163 = pneg %p106
      %p164 = scmp.lt.s32.totalorder %s15, 1
      %s165 = scalar_select %p164, %s15, 1
      %s166 = smul.addr %s165, 8
      %s167 = scalar_lea.vmem %s3, %s166
      %p168 = scmp.lt.s32.totalorder %s15, 1
      %s169 = scalar_select %p168, %s15, 1
      %s170 = smul.addr %s169, 8
      %s171 = smul.addr %s170, 4
      %s172 = scalar_lea.vmem %s0, %s171
      %p173 = scmp.lt.s32.totalorder %s15, 1
      %s174 = scalar_select %p173, %s15, 1
      %s175 = smul.addr %s174, 8
      %s176 = smul.addr %s175, 4
      %s177 = scalar_lea.vmem %s2, %s176
      %p178 = scmp.lt.s32.totalorder %s15, 1
      %s179 = scalar_select %p178, %s15, 1
      %s180 = smul.addr %s179, 8
      %s181 = scalar_lea.vmem %s3, %s180
      %v183 = vld [vmem:[%s172] sm:$0xf]
      %v184 = vld [vmem:[%s172 + $0x4] sm:$0xf]
      %v185 = vld [vmem:[%s172 + $0x8] sm:$0xf]
      %v186 = vld [vmem:[%s172 + $0xc] sm:$0xf]
      %v187 = vld [vmem:[%s172 + $0x10] sm:$0xf]
      %v188 = vld [vmem:[%s172 + $0x14] sm:$0xf]
      %v189 = vld [vmem:[%s172 + $0x18] sm:$0xf]
      %v190 = vld [vmem:[%s172 + $0x1c] sm:$0xf]
      %v191 = vld [vmem:[%s1] sm:$0x3]
      %v200 = vunpack.c.l.b16 %v183
      %v201 = vunpack.c.l.b16 %v184
      %v202 = vunpack.c.l.b16 %v185
      %v203 = vunpack.c.l.b16 %v186
      %v204 = vunpack.c.l.b16 %v187
      %v205 = vunpack.c.l.b16 %v188
      %v206 = vunpack.c.l.b16 %v189
      %v207 = vunpack.c.l.b16 %v190
      %v208 = vpack.c.b16 %v201, %v200
      %v209 = vpack.c.b16 %v203, %v202
      %v210 = vpack.c.b16 %v205, %v204
      %v211 = vpack.c.b16 %v207, %v206
      %vm212 = vcmask 31744
      %v214 = vsel %vm212, %v208, 0
      %v217 = vsel %vm212, %v209, 0
      %v220 = vsel %vm212, %v210, 0
      %v223 = vsel %vm212, %v211, 0
      %vm225 = vcmask 1041408
      %v227 = vsel %vm225, %v191, 0
      %229 = vmatprep.subr.bf16.mxu0 0
      %230 = vmatpush1.bf16.msra.mxu0 0
      %231 = vmatprep.subr.bf16.mxu0 0
      %232 = vmatpush1.bf16.msra.mxu0 0
      %233 = vmatprep.subr.bf16.mxu0 0
      %234 = vmatpush1.bf16.msra.mxu0 0
      %235 = vmatprep.subr.bf16.mxu0 0
      %236 = vmatpush1.bf16.msra.mxu0 0
      %237 = vmatprep.subr.bf16.mxu0 0
      %238 = vmatpush1.bf16.msra.mxu0 0
      %239 = vmatprep.subr.bf16.mxu0 0
      %240 = vmatpush1.bf16.msra.mxu0 0
      %241 = vmatprep.subr.bf16.mxu0 0
      %242 = vmatpush1.bf16.msra.mxu0 0
      %243 = vmatprep.subr.bf16.mxu0 0
      %244 = vmatpush1.bf16.msra.mxu0 %v227
      %245 = vmatprep.subr.bf16.mxu0 0
      %246 = vmatpush2.bf16.msra.mxu0 0
      %247 = vmatprep.subr.bf16.mxu0 0
      %248 = vmatpush2.bf16.msra.mxu0 0
      %249 = vmatprep.subr.bf16.mxu0 0
      %250 = vmatpush2.bf16.msra.mxu0 0
      %251 = vmatprep.subr.bf16.mxu0 0
      %252 = vmatpush2.bf16.msra.mxu0 0
      %253 = vmatprep.subr.bf16.mxu0 0
      %254 = vmatpush2.bf16.msra.mxu0 0
      %255 = vmatprep.subr.bf16.mxu0 0
      %256 = vmatpush2.bf16.msra.mxu0 0
      %257 = vmatprep.subr.bf16.mxu0 0
      %258 = vmatpush2.bf16.msra.mxu0 0
      %259 = vmatprep.subr.bf16.mxu0 0
      %260 = vmatpush2.bf16.msra.mxu0 0
      %261 = vmatprep.mubr.bf16.mxu0 0
      %262 = vmatmul.mubr.bf16.gmra.mxu0 %v214
      %v263 = vpop.f32.mrf.mxu0
      %v264 = vadd.f32 0.0, %v263
      %v265 = vpop.f32.mrf.mxu0
      %v266 = vpop.f32.mrf.mxu0
      %v267 = vadd.f32 0.0, %v266
      %v268 = vpop.f32.mrf.mxu0
      %269 = vmatprep.mubr.bf16.mxu0 0
      %270 = vmatmul.mubr.bf16.gmra.mxu0 %v217
      %v271 = vpop.f32.mrf.mxu0
      %v272 = vadd.f32 0.0, %v271
      %v273 = vpop.f32.mrf.mxu0
      %v274 = vpop.f32.mrf.mxu0
      %v275 = vadd.f32 0.0, %v274
      %v276 = vpop.f32.mrf.mxu0
      %277 = vmatprep.mubr.bf16.mxu0 0
      %278 = vmatmul.mubr.bf16.gmra.mxu0 %v220
      %v279 = vpop.f32.mrf.mxu0
      %v280 = vadd.f32 0.0, %v279
      %v281 = vpop.f32.mrf.mxu0
      %v282 = vpop.f32.mrf.mxu0
      %v283 = vadd.f32 0.0, %v282
      %v284 = vpop.f32.mrf.mxu0
      %285 = vmatprep.mubr.bf16.mxu0 0
      %286 = vmatmul.mubr.bf16.gmra.mxu0 %v223
      %v287 = vpop.f32.mrf.mxu0
      %v288 = vadd.f32 0.0, %v287
      %v289 = vpop.f32.mrf.mxu0
      %v290 = vpop.f32.mrf.mxu0
      %v291 = vadd.f32 0.0, %v290
      %v292 = vpop.f32.mrf.mxu0
      %293 = vdwg.mxu0
      %v294 = vadd.f32 %v264, %v267
      %v295 = vadd.f32 %v294, %v272
      %v296 = vadd.f32 %v295, %v275
      %v297 = vadd.f32 %v296, %v280
      %v298 = vadd.f32 %v297, %v283
      %v299 = vadd.f32 %v298, %v288
      %v300 = vadd.f32 %v299, %v291
      %v301 = vrot.slane %v300, 4
      %v302 = vadd.f32 %v300, %v301
      %v303 = vrot.slane %v302, 2
      %v304 = vadd.f32 %v302, %v303
      %v305 = vrot.slane %v304, 1
      %v306 = vadd.f32 %v304, %v305
      %v307 = vmul.f32 %v264, %v264
      %v308 = vmul.f32 %v267, %v267
      %v309 = vmul.f32 %v272, %v272
      %v310 = vmul.f32 %v275, %v275
      %v311 = vmul.f32 %v280, %v280
      %v312 = vmul.f32 %v283, %v283
      %v313 = vmul.f32 %v288, %v288
      %v314 = vmul.f32 %v291, %v291
      %v315 = vadd.f32 %v307, %v308
      %v316 = vadd.f32 %v315, %v309
      %v317 = vadd.f32 %v316, %v310
      %v318 = vadd.f32 %v317, %v311
      %v319 = vadd.f32 %v318, %v312
      %v320 = vadd.f32 %v319, %v313
      %v321 = vadd.f32 %v320, %v314
      %v322 = vrot.slane %v321, 4
      %v323 = vadd.f32 %v321, %v322
      %v324 = vrot.slane %v323, 2
      %v325 = vadd.f32 %v323, %v324
      %v326 = vrot.slane %v325, 1
      %v327 = vadd.f32 %v325, %v326
      %v328 = vlaneseq
      %v329 = vshrl.u32 %v328, 7
      %vm330 = vcmp.eq.s32.totalorder %v329, 0
      %vm331 = vcmp.eq.s32.totalorder %v329, 1
      %v332 = vsel %vm331, %v327, 0.0
      %v333 = vsel %vm330, %v306, %v332
      %334 = vst [vmem:[%s181] sm:$0xff] %v333
      %v335 = vpack.c.bf16 %v267, %v264
      %v336 = vpack.c.bf16 %v275, %v272
      %v337 = vpack.c.bf16 %v283, %v280
      %v338 = vpack.c.bf16 %v291, %v288
      %v343 = vunpack.c.l.b16 %v335
      %v344 = vunpack.c.h.b16 %v335
      %v345 = vunpack.c.l.b16 %v336
      %v346 = vunpack.c.h.b16 %v336
      %v347 = vunpack.c.l.b16 %v337
      %v348 = vunpack.c.h.b16 %v337
      %v349 = vunpack.c.l.b16 %v338
      %v350 = vunpack.c.h.b16 %v338
      %v351 = vpack.c.b16 %v343, %v343
      %v352 = vpack.c.b16 %v344, %v344
      %v353 = vpack.c.b16 %v345, %v345
      %v354 = vpack.c.b16 %v346, %v346
      %v355 = vpack.c.b16 %v347, %v347
      %v356 = vpack.c.b16 %v348, %v348
      %v357 = vpack.c.b16 %v349, %v349
      %v358 = vpack.c.b16 %v350, %v350
      %367 = vst [vmem:[%s177] sm:$0xf] %v351
      %368 = vst [vmem:[%s177 + $0x4] sm:$0xf] %v352
      %369 = vst [vmem:[%s177 + $0x8] sm:$0xf] %v353
      %370 = vst [vmem:[%s177 + $0xc] sm:$0xf] %v354
      %371 = vst [vmem:[%s177 + $0x10] sm:$0xf] %v355
      %372 = vst [vmem:[%s177 + $0x14] sm:$0xf] %v356
      %373 = vst [vmem:[%s177 + $0x18] sm:$0xf] %v357
      %374 = vst [vmem:[%s177 + $0x1c] sm:$0xf] %v358
      %p375 = scmp.lt.s32.totalorder %s15, 1
      %s376 = scalar_select %p375, %s15, 1
      %s377 = smul.addr %s376, 8
      %s378 = smul.addr %s377, 4
      %s379 = scalar_lea.vmem %s2, %s378
      %p380 = scmp.lt.s32.totalorder %s15, 1
      %s381 = scalar_select %p380, %s15, 1
      %s382 = smul.addr %s381, 8
      %s383 = scalar_lea.vmem %s3, %s382
      // Predicated region
      $region29: #{basic_block_forward.6} parent=27 // pred_check
        %p384 = pneg %p80
      $region30: #{basic_block_forward.6} parent=27 // pred_check_branch
        %386 = sbr.rel (%p384) target = $region32
      $region31: #{basic_block_forward.6} parent=27 // pred_region
        _
      $region32: #{basic_block_forward.6} parent=27 // pred_fallthru
        _
      // Predicated region
      $region33: #{basic_block_forward.6} parent=27 // pred_check
        %p387 = pneg %p106
      $region34: #{basic_block_forward.6} parent=27 // pred_check_branch
        %389 = sbr.rel (%p387) target = $region36
      $region35: #{basic_block_forward.6} parent=27 // pred_region
        _
      $region36: #{basic_block_forward.6} parent=27 // pred_fallthru
        _
    $region28: #{basic_block_forward.6} parent=5 // pred_fallthru
      _
    %p390 = scmp.le.s32.totalorder 2, %s10
    // Predicated region
    $region37: #{basic_block_forward.6} parent=5 // pred_check
      %p391 = pneg %p390
    $region38: #{basic_block_forward.6} parent=5 // pred_check_branch
      %393 = sbr.rel (%p391) target = $region40
    $region39: #{basic_block_forward.6} parent=5 // pred_region
      %s394 = ssub.s32 %s10, 2
      // Predicated region
      $region41: #{basic_block_forward.6} parent=39 // pred_check
        %p395 = pneg %p86
      $region42: #{basic_block_forward.6} parent=39 // pred_check_branch
        %397 = sbr.rel (%p395) target = $region44
      $region43: #{basic_block_forward.6} parent=39 // pred_region
        %p398 = scmp.lt.s32.totalorder %s16, 1
        %s399 = scalar_select %p398, %s16, 1
        %s400 = smul.addr %s399, 8
        %s401 = smul.addr %s400, 4
        %s402 = scalar_lea.vmem %s2, %s401
      $region44: #{basic_block_forward.6} parent=39 // pred_fallthru
        _
      // Predicated region
      $region45: #{basic_block_forward.6} parent=39 // pred_check
        %p403 = pneg %p112
      $region46: #{basic_block_forward.6} parent=39 // pred_check_branch
        %405 = sbr.rel (%p403) target = $region48
      $region47: #{basic_block_forward.6} parent=39 // pred_region
        %p406 = scmp.lt.s32.totalorder %s16, 1
        %s407 = scalar_select %p406, %s16, 1
        %s408 = smul.addr %s407, 8
        %s409 = scalar_lea.vmem %s3, %s408
      $region48: #{basic_block_forward.6} parent=39 // pred_fallthru
        _
    $region40: #{basic_block_forward.6} parent=5 // pred_fallthru
      _
  $region6: #{basic_block_forward.6} parent=0 // loop_footer
    %s14 = sadd.s32 1, %s10
  $region7: #{basic_block_forward.6} parent=0 // loop_footer_branch
    %9 = sbr.rel target = $region3
  $region8: #{basic_block_forward.6} parent=0 // loop_exit
    _

// kernel: basic_block_forward.7
$region0: #{basic_block_forward.7}
  #allocation0 [shape = 'u32[]', space=smem, size = 0x4, offset = 0x4, fixed_abs, tag = 'smem constant byte address 0x4 - core index']
  #allocation1 [shape = 'u32[144,128]{1,0:T(1,128)}', space=vmem, size = 0x12000, scoped, tag = 'internal scratch']
  %s0 = inlined_call_operand.vmem [shape: bf16[2,64,128], index: 0, kind: input, shape index: {}]
  %s1 = inlined_call_operand.vmem [shape: bf16[2,64,128], index: 1, kind: input, shape index: {}]
  %s2 = inlined_call_operand.vmem [shape: f32[1,128], index: 2, kind: input, shape index: {}]
  %s3 = inlined_call_operand.vmem [shape: f32[1,128], index: 3, kind: input, shape index: {}]
  %s4 = inlined_call_operand.vmem [shape: f32[1,128], index: 4, kind: input, shape index: {}]
  %s5 = inlined_call_operand.vmem [shape: f32[1,128], index: 5, kind: input, shape index: {}]
  %s6 = inlined_call_operand.vmem [shape: f32[2,64,128], index: 6, kind: output, shape index: {}]
  %s7 = sld [smem:[#allocation0]]
  $region57: #{basic_block_forward.7} parent=0
    _
  %s9 = ssub.s32 1, %s7
  %s10 = scalar_select 0, %s9, %s7
  loop: start=0, step=1, limit=4
  $region2: #{basic_block_forward.7} parent=0 // loop_pre_header
    _
  $region3: #{basic_block_forward.7} parent=0 // loop_header
    %s12 = sphi 0, %s16
    %p13 = scmp.ge.s32.totalorder %s12, 4
    %s19 = sphi 0, %s31
    %s20 = sphi 0, %s27
    %s21 = sphi 0, %s19
    %s22 = sphi 0, %s20
    %s23 = sphi 0, %s21
    %s24 = sphi 0, %s22
    %s36 = sphi 0, %s38
    %s39 = sphi 0, %s36
    %s40 = sphi 0, %s39
    %s56 = sphi 0, %s40
    %s64 = sphi 0, %s66
    %s67 = sphi 0, %s64
    %s68 = sphi 0, %s67
    %s84 = sphi 0, %s68
    %s88 = sphi 0, %s88
    %s90 = sphi 0, %s88
    %s91 = sphi 0, %s90
    %s105 = sphi 0, %s91
    %s109 = sphi 0, %s109
    %s111 = sphi 0, %s109
    %s112 = sphi 0, %s111
    %s126 = sphi 0, %s112
    %s130 = sphi 0, %s130
    %s132 = sphi 0, %s130
    %s133 = sphi 0, %s132
    %s147 = sphi 0, %s133
    %s151 = sphi 0, %s151
    %s153 = sphi 0, %s151
    %s154 = sphi 0, %s153
    %s168 = sphi 0, %s154
    %s176 = sphi 0, %s178
    %s179 = sphi 0, %s176
    %s180 = sphi 0, %s179
    %s196 = sphi 0, %s180
  $region4: #{basic_block_forward.7} parent=0 // loop_header_branch
    %15 = sbr.rel (%p13) target = $region8
  $region5: #{basic_block_forward.7} parent=0 // loop_body
    %s17 = ssub.s32 %s12, 1
    %s18 = ssub.s32 %s12, 2
    %s25 = sadd.s32 1, %s20
    %p26 = scmp.ge.s32.totalorder %s25, 1
    %s27 = scalar_select %p26, 0, %s25
    %s28 = sadd.s32 1, %s19
    %s29 = scalar_select %p26, %s28, %s19
    %p30 = scmp.ge.s32.totalorder %s29, 2
    %s31 = scalar_select %p30, 0, %s29
    %s32 = ssub.s32 %s19, %s31
    %s33 = ssub.s32 %s20, %s27
    %s34 = sor.u32 %s32, %s33
    %p35 = scmp.eq.s32.totalorder %s34, 0
    %s37 = sadd.s32 %s36, 1
    %s38 = scalar_select %p35, %s36, %s37
    %p41 = pneg %p35
    %p42 = scmp.eq.s32.totalorder %s12, 1
    %p43 = por %p41, %p42
    %p44 = scmp.ne.s32.totalorder %s36, %s39
    %p45 = scmp.eq.s32.totalorder %s12, 0
    %p46 = por %p44, %p45
    %p47 = scmp.ne.s32.totalorder %s36, %s39
    %p48 = scmp.eq.s32.totalorder %s17, 1
    %p49 = por %p47, %p48
    %p50 = scmp.ne.s32.totalorder %s39, %s40
    %p51 = scmp.eq.s32.totalorder %s17, 0
    %p52 = por %p50, %p51
    %p53 = scmp.ne.s32.totalorder %s39, %s40
    %p54 = scmp.eq.s32.totalorder %s18, 1
    %p55 = por %p53, %p54
    %p57 = scmp.ne.s32.totalorder %s40, %s56
    %p58 = scmp.eq.s32.totalorder %s18, 0
    %p59 = por %p57, %p58
    %s60 = ssub.s32 %s19, %s31
    %s61 = ssub.s32 %s20, %s27
    %s62 = sor.u32 %s60, %s61
    %p63 = scmp.eq.s32.totalorder %s62, 0
    %s65 = sadd.s32 %s64, 1
    %s66 = scalar_select %p63, %s64, %s65
    %p69 = pneg %p63
    %p70 = scmp.eq.s32.totalorder %s12, 1
    %p71 = por %p69, %p70
    %p72 = scmp.ne.s32.totalorder %s64, %s67
    %p73 = scmp.eq.s32.totalorder %s12, 0
    %p74 = por %p72, %p73
    %p75 = scmp.ne.s32.totalorder %s64, %s67
    %p76 = scmp.eq.s32.totalorder %s17, 1
    %p77 = por %p75, %p76
    %p78 = scmp.ne.s32.totalorder %s67, %s68
    %p79 = scmp.eq.s32.totalorder %s17, 0
    %p80 = por %p78, %p79
    %p81 = scmp.ne.s32.totalorder %s67, %s68
    %p82 = scmp.eq.s32.totalorder %s18, 1
    %p83 = por %p81, %p82
    %p85 = scmp.ne.s32.totalorder %s68, %s84
    %p86 = scmp.eq.s32.totalorder %s18, 0
    %p87 = por %p85, %p86
    %s89 = sadd.s32 %s88, 1
    %p92 = scmp.eq.s32.totalorder %s12, 1
    %p93 = scmp.ne.s32.totalorder %s88, %s90
    %p94 = scmp.eq.s32.totalorder %s12, 0
    %p95 = por %p93, %p94
    %p96 = scmp.ne.s32.totalorder %s88, %s90
    %p97 = scmp.eq.s32.totalorder %s17, 1
    %p98 = por %p96, %p97
    %p99 = scmp.ne.s32.totalorder %s90, %s91
    %p100 = scmp.eq.s32.totalorder %s17, 0
    %p101 = por %p99, %p100
    %p102 = scmp.ne.s32.totalorder %s90, %s91
    %p103 = scmp.eq.s32.totalorder %s18, 1
    %p104 = por %p102, %p103
    %p106 = scmp.ne.s32.totalorder %s91, %s105
    %p107 = scmp.eq.s32.totalorder %s18, 0
    %p108 = por %p106, %p107
    %s110 = sadd.s32 %s109, 1
    %p113 = scmp.eq.s32.totalorder %s12, 1
    %p114 = scmp.ne.s32.totalorder %s109, %s111
    %p115 = scmp.eq.s32.totalorder %s12, 0
    %p116 = por %p114, %p115
    %p117 = scmp.ne.s32.totalorder %s109, %s111
    %p118 = scmp.eq.s32.totalorder %s17, 1
    %p119 = por %p117, %p118
    %p120 = scmp.ne.s32.totalorder %s111, %s112
    %p121 = scmp.eq.s32.totalorder %s17, 0
    %p122 = por %p120, %p121
    %p123 = scmp.ne.s32.totalorder %s111, %s112
    %p124 = scmp.eq.s32.totalorder %s18, 1
    %p125 = por %p123, %p124
    %p127 = scmp.ne.s32.totalorder %s112, %s126
    %p128 = scmp.eq.s32.totalorder %s18, 0
    %p129 = por %p127, %p128
    %s131 = sadd.s32 %s130, 1
    %p134 = scmp.eq.s32.totalorder %s12, 1
    %p135 = scmp.ne.s32.totalorder %s130, %s132
    %p136 = scmp.eq.s32.totalorder %s12, 0
    %p137 = por %p135, %p136
    %p138 = scmp.ne.s32.totalorder %s130, %s132
    %p139 = scmp.eq.s32.totalorder %s17, 1
    %p140 = por %p138, %p139
    %p141 = scmp.ne.s32.totalorder %s132, %s133
    %p142 = scmp.eq.s32.totalorder %s17, 0
    %p143 = por %p141, %p142
    %p144 = scmp.ne.s32.totalorder %s132, %s133
    %p145 = scmp.eq.s32.totalorder %s18, 1
    %p146 = por %p144, %p145
    %p148 = scmp.ne.s32.totalorder %s133, %s147
    %p149 = scmp.eq.s32.totalorder %s18, 0
    %p150 = por %p148, %p149
    %s152 = sadd.s32 %s151, 1
    %p155 = scmp.eq.s32.totalorder %s12, 1
    %p156 = scmp.ne.s32.totalorder %s151, %s153
    %p157 = scmp.eq.s32.totalorder %s12, 0
    %p158 = por %p156, %p157
    %p159 = scmp.ne.s32.totalorder %s151, %s153
    %p160 = scmp.eq.s32.totalorder %s17, 1
    %p161 = por %p159, %p160
    %p162 = scmp.ne.s32.totalorder %s153, %s154
    %p163 = scmp.eq.s32.totalorder %s17, 0
    %p164 = por %p162, %p163
    %p165 = scmp.ne.s32.totalorder %s153, %s154
    %p166 = scmp.eq.s32.totalorder %s18, 1
    %p167 = por %p165, %p166
    %p169 = scmp.ne.s32.totalorder %s154, %s168
    %p170 = scmp.eq.s32.totalorder %s18, 0
    %p171 = por %p169, %p170
    %s172 = ssub.s32 %s19, %s31
    %s173 = ssub.s32 %s20, %s27
    %s174 = sor.u32 %s172, %s173
    %p175 = scmp.eq.s32.totalorder %s174, 0
    %s177 = sadd.s32 %s176, 1
    %s178 = scalar_select %p175, %s176, %s177
    %p181 = pneg %p175
    %p182 = scmp.eq.s32.totalorder %s12, 1
    %p183 = por %p181, %p182
    %p184 = scmp.ne.s32.totalorder %s176, %s179
    %p185 = scmp.eq.s32.totalorder %s12, 0
    %p186 = por %p184, %p185
    %p187 = scmp.ne.s32.totalorder %s176, %s179
    %p188 = scmp.eq.s32.totalorder %s17, 1
    %p189 = por %p187, %p188
    %p190 = scmp.ne.s32.totalorder %s179, %s180
    %p191 = scmp.eq.s32.totalorder %s17, 0
    %p192 = por %p190, %p191
    %p193 = scmp.ne.s32.totalorder %s179, %s180
    %p194 = scmp.eq.s32.totalorder %s18, 1
    %p195 = por %p193, %p194
    %p197 = scmp.ne.s32.totalorder %s180, %s196
    %p198 = scmp.eq.s32.totalorder %s18, 0
    %p199 = por %p197, %p198
    %p200 = scmp.le.s32.totalorder 1, %s12
    %p201 = scmp.lt.s32.totalorder %s12, 3
    %p202 = pnand %p200, %p201
    %p203 = pneg %p202
    // Predicated region
    $region9: #{basic_block_forward.7} parent=5 // pred_check
      _
    $region10: #{basic_block_forward.7} parent=5 // pred_check_branch
      %205 = sbr.rel (%p202) target = $region12
    $region11: #{basic_block_forward.7} parent=5 // pred_region
      %s206 = ssub.s32 %s12, 1
      // Predicated region
      $region13: #{basic_block_forward.7} parent=11 // pred_check
        %p207 = pneg %p101
      $region14: #{basic_block_forward.7} parent=11 // pred_check_branch
        %209 = sbr.rel (%p207) target = $region16
      $region15: #{basic_block_forward.7} parent=11 // pred_region
        _
      $region16: #{basic_block_forward.7} parent=11 // pred_fallthru
        _
      // Predicated region
      $region17: #{basic_block_forward.7} parent=11 // pred_check
        %p210 = pneg %p122
      $region18: #{basic_block_forward.7} parent=11 // pred_check_branch
        %212 = sbr.rel (%p210) target = $region20
      $region19: #{basic_block_forward.7} parent=11 // pred_region
        _
      $region20: #{basic_block_forward.7} parent=11 // pred_fallthru
        _
      // Predicated region
      $region21: #{basic_block_forward.7} parent=11 // pred_check
        %p213 = pneg %p143
      $region22: #{basic_block_forward.7} parent=11 // pred_check_branch
        %215 = sbr.rel (%p213) target = $region24
      $region23: #{basic_block_forward.7} parent=11 // pred_region
        _
      $region24: #{basic_block_forward.7} parent=11 // pred_fallthru
        _
      // Predicated region
      $region25: #{basic_block_forward.7} parent=11 // pred_check
        %p216 = pneg %p164
      $region26: #{basic_block_forward.7} parent=11 // pred_check_branch
        %218 = sbr.rel (%p216) target = $region28
      $region27: #{basic_block_forward.7} parent=11 // pred_region
        _
      $region28: #{basic_block_forward.7} parent=11 // pred_fallthru
        _
    $region12: #{basic_block_forward.7} parent=5 // pred_fallthru
      _
    %p219 = scmp.lt.s32.totalorder %s12, 2
    // Predicated region
    $region29: #{basic_block_forward.7} parent=5 // pred_check
      %p220 = pneg %p219
    $region30: #{basic_block_forward.7} parent=5 // pred_check_branch
      %222 = sbr.rel (%p220) target = $region32
    $region31: #{basic_block_forward.7} parent=5 // pred_region
      // Predicated region
      $region33: #{basic_block_forward.7} parent=31 // pred_check
        %p223 = pneg %p46
      $region34: #{basic_block_forward.7} parent=31 // pred_check_branch
        %225 = sbr.rel (%p223) target = $region36
      $region35: #{basic_block_forward.7} parent=31 // pred_region
        %s226 = smul.u32 8, %s20
        %p227 = scmp.lt.s32.totalorder %s19, 1
        %s228 = scalar_select %p227, %s19, 1
        %p229 = scmp.lt.s32.totalorder %s226, 7
        %s230 = scalar_select %p229, %s226, 7
        %s231 = smul.addr %s228, 8
        %s232 = sadd.s32 %s230, %s231
        %s233 = smul.addr %s232, 4
        %s234 = scalar_lea.vmem %s0, %s233
        %s235 = smul.u32 8, %s20
      $region36: #{basic_block_forward.7} parent=31 // pred_fallthru
        _
      // Predicated region
      $region37: #{basic_block_forward.7} parent=31 // pred_check
        %p236 = pneg %p74
      $region38: #{basic_block_forward.7} parent=31 // pred_check_branch
        %238 = sbr.rel (%p236) target = $region40
      $region39: #{basic_block_forward.7} parent=31 // pred_region
        %s239 = smul.u32 8, %s20
        %p240 = scmp.lt.s32.totalorder %s19, 1
        %s241 = scalar_select %p240, %s19, 1
        %p242 = scmp.lt.s32.totalorder %s239, 7
        %s243 = scalar_select %p242, %s239, 7
        %s244 = smul.addr %s241, 8
        %s245 = sadd.s32 %s243, %s244
        %s246 = smul.addr %s245, 4
        %s247 = scalar_lea.vmem %s1, %s246
        %s248 = smul.u32 8, %s20
      $region40: #{basic_block_forward.7} parent=31 // pred_fallthru
        _
    $region32: #{basic_block_forward.7} parent=5 // pred_fallthru
      _
    %p249 = scmp.le.s32.totalorder 1, %s12
    %p250 = scmp.lt.s32.totalorder %s12, 3
    %p251 = pnand %p249, %p250
    %p252 = pneg %p251
    // Predicated region
    $region41: #{basic_block_forward.7} parent=5 // pred_check
      _
    $region42: #{basic_block_forward.7} parent=5 // pred_check_branch
      %254 = sbr.rel (%p251) target = $region44
    $region43: #{basic_block_forward.7} parent=5 // pred_region
      %s255 = ssub.s32 %s12, 1
      %s256 = smul.u32 8, %s22
      %p257 = scmp.lt.s32.totalorder %s21, 1
      %s258 = scalar_select %p257, %s21, 1
      %p259 = scmp.lt.s32.totalorder %s256, 7
      %s260 = scalar_select %p259, %s256, 7
      %s261 = smul.addr %s258, 8
      %s262 = sadd.s32 %s260, %s261
      %s263 = smul.addr %s262, 4
      %s264 = scalar_lea.vmem %s0, %s263
      %p265 = pneg %p52
      %p266 = pneg %p49
      %s267 = smul.u32 8, %s22
      %p268 = scmp.lt.s32.totalorder %s21, 1
      %s269 = scalar_select %p268, %s21, 1
      %p270 = scmp.lt.s32.totalorder %s267, 7
      %s271 = scalar_select %p270, %s267, 7
      %s272 = smul.addr %s269, 8
      %s273 = sadd.s32 %s271, %s272
      %s274 = smul.addr %s273, 4
      %s275 = scalar_lea.vmem %s1, %s274
      %p276 = pneg %p80
      %p277 = pneg %p77
      %p278 = pneg %p101
      %p279 = pneg %p98
      %p280 = pneg %p122
      %p281 = pneg %p119
      %p282 = pneg %p143
      %p283 = pneg %p140
      %p284 = pneg %p164
      %p285 = pneg %p161
      %p286 = pneg %p192
      %p287 = pneg %p189
      %s288 = smul.u32 8, %s22
      %p289 = scmp.lt.s32.totalorder %s21, 1
      %s290 = scalar_select %p289, %s21, 1
      %p291 = scmp.lt.s32.totalorder %s288, 7
      %s292 = scalar_select %p291, %s288, 7
      %s293 = smul.addr %s290, 8
      %s294 = sadd.s32 %s292, %s293
      %s295 = smul.addr %s294, 8
      %s296 = scalar_lea.vmem %s6, %s295
      %s297 = smul.u32 8, %s22
      %p298 = scmp.lt.s32.totalorder %s21, 1
      %s299 = scalar_select %p298, %s21, 1
      %p300 = scmp.lt.s32.totalorder %s297, 7
      %s301 = scalar_select %p300, %s297, 7
      %s302 = smul.addr %s299, 8
      %s303 = sadd.s32 %s301, %s302
      %s304 = smul.addr %s303, 4
      %s305 = scalar_lea.vmem %s0, %s304
      %s306 = smul.u32 8, %s22
      %s307 = smul.u32 8, %s22
      %p308 = scmp.lt.s32.totalorder %s21, 1
      %s309 = scalar_select %p308, %s21, 1
      %p310 = scmp.lt.s32.totalorder %s307, 7
      %s311 = scalar_select %p310, %s307, 7
      %s312 = smul.addr %s309, 8
      %s313 = sadd.s32 %s311, %s312
      %s314 = smul.addr %s313, 4
      %s315 = scalar_lea.vmem %s1, %s314
      %s316 = smul.u32 8, %s22
      %s317 = smul.u32 8, %s22
      %p318 = scmp.lt.s32.totalorder %s21, 1
      %s319 = scalar_select %p318, %s21, 1
      %p320 = scmp.lt.s32.totalorder %s317, 7
      %s321 = scalar_select %p320, %s317, 7
      %s322 = smul.addr %s319, 8
      %s323 = sadd.s32 %s321, %s322
      %s324 = smul.addr %s323, 8
      %s325 = scalar_lea.vmem %s6, %s324
      %s326 = smul.u32 8, %s22
      %v327 = vld [vmem:[%s305] sm:$0xf]
      %v328 = vld [vmem:[%s305 + $0x4] sm:$0xf]
      %v329 = vld [vmem:[%s305 + $0x8] sm:$0xf]
      %v330 = vld [vmem:[%s305 + $0xc] sm:$0xf]
      %v331 = vld [vmem:[%s305 + $0x10] sm:$0xf]
      %v332 = vld [vmem:[%s305 + $0x14] sm:$0xf]
      %v333 = vld [vmem:[%s305 + $0x18] sm:$0xf]
      %v334 = vld [vmem:[%s305 + $0x1c] sm:$0xf]
      %v335 = vunpack.c.l.bf16 %v327
      %v336 = vunpack.c.l.bf16 %v328
      %v337 = vunpack.c.l.bf16 %v329
      %v338 = vunpack.c.l.bf16 %v330
      %v339 = vunpack.c.l.bf16 %v331
      %v340 = vunpack.c.l.bf16 %v332
      %v341 = vunpack.c.l.bf16 %v333
      %v342 = vunpack.c.l.bf16 %v334
      %v343 = vld [vmem:[%s2] sm:$0x1]
      %v345 = vlaneseq
      %v346 = vshrl.u32 %v345, 7
      %v347 = vsub.s32 0, %v346
      %v348 = vrot.slane %v343, %v347
      %v350 = vmul.f32 %v335, %v348
      %v351 = vmul.f32 %v336, %v348
      %v352 = vmul.f32 %v337, %v348
      %v353 = vmul.f32 %v338, %v348
      %v354 = vmul.f32 %v339, %v348
      %v355 = vmul.f32 %v340, %v348
      %v356 = vmul.f32 %v341, %v348
      %v357 = vmul.f32 %v342, %v348
      %v358 = vld [vmem:[%s3] sm:$0x1]
      %v360 = vlaneseq
      %v361 = vshrl.u32 %v360, 7
      %v362 = vsub.s32 0, %v361
      %v363 = vrot.slane %v358, %v362
      %v365 = vadd.f32 %v350, %v363
      %v366 = vadd.f32 %v351, %v363
      %v367 = vadd.f32 %v352, %v363
      %v368 = vadd.f32 %v353, %v363
      %v369 = vadd.f32 %v354, %v363
      %v370 = vadd.f32 %v355, %v363
      %v371 = vadd.f32 %v356, %v363
      %v372 = vadd.f32 %v357, %v363
      %v373 = vld [vmem:[%s315] sm:$0xf]
      %v374 = vld [vmem:[%s315 + $0x4] sm:$0xf]
      %v375 = vld [vmem:[%s315 + $0x8] sm:$0xf]
      %v376 = vld [vmem:[%s315 + $0xc] sm:$0xf]
      %v377 = vld [vmem:[%s315 + $0x10] sm:$0xf]
      %v378 = vld [vmem:[%s315 + $0x14] sm:$0xf]
      %v379 = vld [vmem:[%s315 + $0x18] sm:$0xf]
      %v380 = vld [vmem:[%s315 + $0x1c] sm:$0xf]
      %v381 = vunpack.c.l.bf16 %v373
      %v382 = vunpack.c.l.bf16 %v374
      %v383 = vunpack.c.l.bf16 %v375
      %v384 = vunpack.c.l.bf16 %v376
      %v385 = vunpack.c.l.bf16 %v377
      %v386 = vunpack.c.l.bf16 %v378
      %v387 = vunpack.c.l.bf16 %v379
      %v388 = vunpack.c.l.bf16 %v380
      %v389 = vld [vmem:[%s4] sm:$0x1]
      %v391 = vlaneseq
      %v392 = vshrl.u32 %v391, 7
      %v393 = vsub.s32 0, %v392
      %v394 = vrot.slane %v389, %v393
      %v396 = vmul.f32 %v381, %v394
      %v397 = vmul.f32 %v382, %v394
      %v398 = vmul.f32 %v383, %v394
      %v399 = vmul.f32 %v384, %v394
      %v400 = vmul.f32 %v385, %v394
      %v401 = vmul.f32 %v386, %v394
      %v402 = vmul.f32 %v387, %v394
      %v403 = vmul.f32 %v388, %v394
      %v404 = vld [vmem:[%s5] sm:$0x1]
      %v406 = vlaneseq
      %v407 = vshrl.u32 %v406, 7
      %v408 = vsub.s32 0, %v407
      %v409 = vrot.slane %v404, %v408
      %v411 = vadd.f32 %v396, %v409
      %v412 = vadd.f32 %v397, %v409
      %v413 = vadd.f32 %v398, %v409
      %v414 = vadd.f32 %v399, %v409
      %v415 = vadd.f32 %v400, %v409
      %v416 = vadd.f32 %v401, %v409
      %v417 = vadd.f32 %v402, %v409
      %v418 = vadd.f32 %v403, %v409
      %v419 = vadd.f32 %v365, %v411
      %v420 = vadd.f32 %v366, %v412
      %v421 = vadd.f32 %v367, %v413
      %v422 = vadd.f32 %v368, %v414
      %v423 = vadd.f32 %v369, %v415
      %v424 = vadd.f32 %v370, %v416
      %v425 = vadd.f32 %v371, %v417
      %v426 = vadd.f32 %v372, %v418
      %v427 = vmax.f32 %v419, 0.0
      %v428 = vmax.f32 %v420, 0.0
      %v429 = vmax.f32 %v421, 0.0
      %v430 = vmax.f32 %v422, 0.0
      %v431 = vmax.f32 %v423, 0.0
      %v432 = vmax.f32 %v424, 0.0
      %v433 = vmax.f32 %v425, 0.0
      %v434 = vmax.f32 %v426, 0.0
      %435 = vst [vmem:[%s325] sm:$0xff] %v427
      %436 = vst [vmem:[%s325 + $0x8] sm:$0xff] %v428
      %437 = vst [vmem:[%s325 + $0x10] sm:$0xff] %v429
      %438 = vst [vmem:[%s325 + $0x18] sm:$0xff] %v430
      %439 = vst [vmem:[%s325 + $0x20] sm:$0xff] %v431
      %440 = vst [vmem:[%s325 + $0x28] sm:$0xff] %v432
      %441 = vst [vmem:[%s325 + $0x30] sm:$0xff] %v433
      %442 = vst [vmem:[%s325 + $0x38] sm:$0xff] %v434
      %s443 = smul.u32 8, %s22
      %p444 = scmp.lt.s32.totalorder %s21, 1
      %s445 = scalar_select %p444, %s21, 1
      %p446 = scmp.lt.s32.totalorder %s443, 7
      %s447 = scalar_select %p446, %s443, 7
      %s448 = smul.addr %s445, 8
      %s449 = sadd.s32 %s447, %s448
      %s450 = smul.addr %s449, 8
      %s451 = scalar_lea.vmem %s6, %s450
      // Predicated region
      $region45: #{basic_block_forward.7} parent=43 // pred_check
        %p452 = pneg %p189
      $region46: #{basic_block_forward.7} parent=43 // pred_check_branch
        %454 = sbr.rel (%p452) target = $region48
      $region47: #{basic_block_forward.7} parent=43 // pred_region
        %s455 = smul.u32 8, %s22
      $region48: #{basic_block_forward.7} parent=43 // pred_fallthru
        _
    $region44: #{basic_block_forward.7} parent=5 // pred_fallthru
      _
    %p456 = scmp.le.s32.totalorder 2, %s12
    // Predicated region
    $region49: #{basic_block_forward.7} parent=5 // pred_check
      %p457 = pneg %p456
    $region50: #{basic_block_forward.7} parent=5 // pred_check_branch
      %459 = sbr.rel (%p457) target = $region52
    $region51: #{basic_block_forward.7} parent=5 // pred_region
      %s460 = ssub.s32 %s12, 2
      // Predicated region
      $region53: #{basic_block_forward.7} parent=51 // pred_check
        %p461 = pneg %p195
      $region54: #{basic_block_forward.7} parent=51 // pred_check_branch
        %463 = sbr.rel (%p461) target = $region56
      $region55: #{basic_block_forward.7} parent=51 // pred_region
        %s464 = smul.u32 8, %s24
        %p465 = scmp.lt.s32.totalorder %s23, 1
        %s466 = scalar_select %p465, %s23, 1
        %p467 = scmp.lt.s32.totalorder %s464, 7
        %s468 = scalar_select %p467, %s464, 7
        %s469 = smul.addr %s466, 8
        %s470 = sadd.s32 %s468, %s469
        %s471 = smul.addr %s470, 8
        %s472 = scalar_lea.vmem %s6, %s471
      $region56: #{basic_block_forward.7} parent=51 // pred_fallthru
        _
    $region52: #{basic_block_forward.7} parent=5 // pred_fallthru
      _
  $region6: #{basic_block_forward.7} parent=0 // loop_footer
    %s16 = sadd.s32 1, %s12
  $region7: #{basic_block_forward.7} parent=0 // loop_footer_branch
    %11 = sbr.rel target = $region3
  $region8: #{basic_block_forward.7} parent=0 // loop_exit
    _

// kernel: basic_block_forward.5
$region0: #{basic_block_forward.5}
  #allocation0 [shape = 'u32[]', space=smem, size = 0x4, offset = 0x4, fixed_abs, tag = 'smem constant byte address 0x4 - core index']
  #allocation1 [shape = 'u32[144,128]{1,0:T(1,128)}', space=vmem, size = 0x12000, scoped, tag = 'internal scratch']
  %s0 = inlined_call_operand.vmem [shape: bf16[2,10,10,128], index: 0, kind: input, shape index: {}]
  %s1 = inlined_call_operand.vmem [shape: bf16[9,128,128], index: 1, kind: input, shape index: {}]
  %s2 = inlined_call_operand.vmem [shape: f32[1,128], index: 2, kind: input, shape index: {}]
  %s3 = inlined_call_operand.vmem [shape: f32[1,128], index: 3, kind: input, shape index: {}]
  %s4 = inlined_call_operand.vmem [shape: bf16[2,64,128], index: 4, kind: output, shape index: {0}]
  %s5 = inlined_call_operand.vmem [shape: f32[2,8,128], index: 5, kind: output, shape index: {1}]
  %6 = xla_tuple %s4, %s5
  %s7 = sld [smem:[#allocation0]]
  $region57: #{basic_block_forward.5} parent=0
    _
  %s9 = ssub.s32 1, %s7
  %s10 = scalar_select 0, %s9, %s7
  loop: start=0, step=1, limit=4
  $region2: #{basic_block_forward.5} parent=0 // loop_pre_header
    _
  $region3: #{basic_block_forward.5} parent=0 // loop_header
    %s12 = sphi 0, %s16
    %p13 = scmp.ge.s32.totalorder %s12, 4
    %s22 = sphi 0, %s24
    %s25 = sphi 0, %s22
    %s26 = sphi 0, %s25
    %s42 = sphi 0, %s26
    %s46 = sphi 0, %s46
    %s48 = sphi 0, %s46
    %s49 = sphi 0, %s48
    %s63 = sphi 0, %s49
    %s67 = sphi 0, %s67
    %s69 = sphi 0, %s67
    %s70 = sphi 0, %s69
    %s84 = sphi 0, %s70
    %s88 = sphi 0, %s88
    %s90 = sphi 0, %s88
    %s91 = sphi 0, %s90
    %s105 = sphi 0, %s91
    %s111 = sphi 0, %s113
    %s114 = sphi 0, %s111
    %s115 = sphi 0, %s114
    %s131 = sphi 0, %s115
    %s137 = sphi 0, %s139
    %s140 = sphi 0, %s137
    %s141 = sphi 0, %s140
    %s157 = sphi 0, %s141
  $region4: #{basic_block_forward.5} parent=0 // loop_header_branch
    %15 = sbr.rel (%p13) target = $region8
  $region5: #{basic_block_forward.5} parent=0 // loop_body
    %s17 = ssub.s32 %s12, 1
    %s18 = ssub.s32 %s12, 2
    %s19 = sadd.s32 %s12, 1
    %s20 = ssub.s32 %s12, %s19
    %p21 = scmp.eq.s32.totalorder %s20, 0
    %s23 = sadd.s32 %s22, 1
    %s24 = scalar_select %p21, %s22, %s23
    %p27 = pneg %p21
    %p28 = scmp.eq.s32.totalorder %s12, 1
    %p29 = por %p27, %p28
    %p30 = scmp.ne.s32.totalorder %s22, %s25
    %p31 = scmp.eq.s32.totalorder %s12, 0
    %p32 = por %p30, %p31
    %p33 = scmp.ne.s32.totalorder %s22, %s25
    %p34 = scmp.eq.s32.totalorder %s17, 1
    %p35 = por %p33, %p34
    %p36 = scmp.ne.s32.totalorder %s25, %s26
    %p37 = scmp.eq.s32.totalorder %s17, 0
    %p38 = por %p36, %p37
    %p39 = scmp.ne.s32.totalorder %s25, %s26
    %p40 = scmp.eq.s32.totalorder %s18, 1
    %p41 = por %p39, %p40
    %p43 = scmp.ne.s32.totalorder %s26, %s42
    %p44 = scmp.eq.s32.totalorder %s18, 0
    %p45 = por %p43, %p44
    %s47 = sadd.s32 %s46, 1
    %p50 = scmp.eq.s32.totalorder %s12, 1
    %p51 = scmp.ne.s32.totalorder %s46, %s48
    %p52 = scmp.eq.s32.totalorder %s12, 0
    %p53 = por %p51, %p52
    %p54 = scmp.ne.s32.totalorder %s46, %s48
    %p55 = scmp.eq.s32.totalorder %s17, 1
    %p56 = por %p54, %p55
    %p57 = scmp.ne.s32.totalorder %s48, %s49
    %p58 = scmp.eq.s32.totalorder %s17, 0
    %p59 = por %p57, %p58
    %p60 = scmp.ne.s32.totalorder %s48, %s49
    %p61 = scmp.eq.s32.totalorder %s18, 1
    %p62 = por %p60, %p61
    %p64 = scmp.ne.s32.totalorder %s49, %s63
    %p65 = scmp.eq.s32.totalorder %s18, 0
    %p66 = por %p64, %p65
    %s68 = sadd.s32 %s67, 1
    %p71 = scmp.eq.s32.totalorder %s12, 1
    %p72 = scmp.ne.s32.totalorder %s67, %s69
    %p73 = scmp.eq.s32.totalorder %s12, 0
    %p74 = por %p72, %p73
    %p75 = scmp.ne.s32.totalorder %s67, %s69
    %p76 = scmp.eq.s32.totalorder %s17, 1
    %p77 = por %p75, %p76
    %p78 = scmp.ne.s32.totalorder %s69, %s70
    %p79 = scmp.eq.s32.totalorder %s17, 0
    %p80 = por %p78, %p79
    %p81 = scmp.ne.s32.totalorder %s69, %s70
    %p82 = scmp.eq.s32.totalorder %s18, 1
    %p83 = por %p81, %p82
    %p85 = scmp.ne.s32.totalorder %s70, %s84
    %p86 = scmp.eq.s32.totalorder %s18, 0
    %p87 = por %p85, %p86
    %s89 = sadd.s32 %s88, 1
    %p92 = scmp.eq.s32.totalorder %s12, 1
    %p93 = scmp.ne.s32.totalorder %s88, %s90
    %p94 = scmp.eq.s32.totalorder %s12, 0
    %p95 = por %p93, %p94
    %p96 = scmp.ne.s32.totalorder %s88, %s90
    %p97 = scmp.eq.s32.totalorder %s17, 1
    %p98 = por %p96, %p97
    %p99 = scmp.ne.s32.totalorder %s90, %s91
    %p100 = scmp.eq.s32.totalorder %s17, 0
    %p101 = por %p99, %p100
    %p102 = scmp.ne.s32.totalorder %s90, %s91
    %p103 = scmp.eq.s32.totalorder %s18, 1
    %p104 = por %p102, %p103
    %p106 = scmp.ne.s32.totalorder %s91, %s105
    %p107 = scmp.eq.s32.totalorder %s18, 0
    %p108 = por %p106, %p107
    %s109 = ssub.s32 %s12, %s19
    %p110 = scmp.eq.s32.totalorder %s109, 0
    %s112 = sadd.s32 %s111, 1
    %s113 = scalar_select %p110, %s111, %s112
    %p116 = pneg %p110
    %p117 = scmp.eq.s32.totalorder %s12, 1
    %p118 = por %p116, %p117
    %p119 = scmp.ne.s32.totalorder %s111, %s114
    %p120 = scmp.eq.s32.totalorder %s12, 0
    %p121 = por %p119, %p120
    %p122 = scmp.ne.s32.totalorder %s111, %s114
    %p123 = scmp.eq.s32.totalorder %s17, 1
    %p124 = por %p122, %p123
    %p125 = scmp.ne.s32.totalorder %s114, %s115
    %p126 = scmp.eq.s32.totalorder %s17, 0
    %p127 = por %p125, %p126
    %p128 = scmp.ne.s32.totalorder %s114, %s115
    %p129 = scmp.eq.s32.totalorder %s18, 1
    %p130 = por %p128, %p129
    %p132 = scmp.ne.s32.totalorder %s115, %s131
    %p133 = scmp.eq.s32.totalorder %s18, 0
    %p134 = por %p132, %p133
    %s135 = ssub.s32 %s12, %s19
    %p136 = scmp.eq.s32.totalorder %s135, 0
    %s138 = sadd.s32 %s137, 1
    %s139 = scalar_select %p136, %s137, %s138
    %p142 = pneg %p136
    %p143 = scmp.eq.s32.totalorder %s12, 1
    %p144 = por %p142, %p143
    %p145 = scmp.ne.s32.totalorder %s137, %s140
    %p146 = scmp.eq.s32.totalorder %s12, 0
    %p147 = por %p145, %p146
    %p148 = scmp.ne.s32.totalorder %s137, %s140
    %p149 = scmp.eq.s32.totalorder %s17, 1
    %p150 = por %p148, %p149
    %p151 = scmp.ne.s32.totalorder %s140, %s141
    %p152 = scmp.eq.s32.totalorder %s17, 0
    %p153 = por %p151, %p152
    %p154 = scmp.ne.s32.totalorder %s140, %s141
    %p155 = scmp.eq.s32.totalorder %s18, 1
    %p156 = por %p154, %p155
    %p158 = scmp.ne.s32.totalorder %s141, %s157
    %p159 = scmp.eq.s32.totalorder %s18, 0
    %p160 = por %p158, %p159
    %p161 = scmp.le.s32.totalorder 1, %s12
    %p162 = scmp.lt.s32.totalorder %s12, 3
    %p163 = pnand %p161, %p162
    %p164 = pneg %p163
    // Predicated region
    $region9: #{basic_block_forward.5} parent=5 // pred_check
      _
    $region10: #{basic_block_forward.5} parent=5 // pred_check_branch
      %166 = sbr.rel (%p163) target = $region12
    $region11: #{basic_block_forward.5} parent=5 // pred_region
      %s167 = ssub.s32 %s12, 1
      // Predicated region
      $region13: #{basic_block_forward.5} parent=11 // pred_check
        %p168 = pneg %p59
      $region14: #{basic_block_forward.5} parent=11 // pred_check_branch
        %170 = sbr.rel (%p168) target = $region16
      $region15: #{basic_block_forward.5} parent=11 // pred_region
        _
      $region16: #{basic_block_forward.5} parent=11 // pred_fallthru
        _
      // Predicated region
      $region17: #{basic_block_forward.5} parent=11 // pred_check
        %p171 = pneg %p80
      $region18: #{basic_block_forward.5} parent=11 // pred_check_branch
        %173 = sbr.rel (%p171) target = $region20
      $region19: #{basic_block_forward.5} parent=11 // pred_region
        _
      $region20: #{basic_block_forward.5} parent=11 // pred_fallthru
        _
      // Predicated region
      $region21: #{basic_block_forward.5} parent=11 // pred_check
        %p174 = pneg %p101
      $region22: #{basic_block_forward.5} parent=11 // pred_check_branch
        %176 = sbr.rel (%p174) target = $region24
      $region23: #{basic_block_forward.5} parent=11 // pred_region
        _
      $region24: #{basic_block_forward.5} parent=11 // pred_fallthru
        _
    $region12: #{basic_block_forward.5} parent=5 // pred_fallthru
      _
    %p177 = scmp.lt.s32.totalorder %s12, 2
    // Predicated region
    $region25: #{basic_block_forward.5} parent=5 // pred_check
      %p178 = pneg %p177
    $region26: #{basic_block_forward.5} parent=5 // pred_check_branch
      %180 = sbr.rel (%p178) target = $region28
    $region27: #{basic_block_forward.5} parent=5 // pred_region
      // Predicated region
      $region29: #{basic_block_forward.5} parent=27 // pred_check
        %p181 = pneg %p32
      $region30: #{basic_block_forward.5} parent=27 // pred_check_branch
        %183 = sbr.rel (%p181) target = $region32
      $region31: #{basic_block_forward.5} parent=27 // pred_region
        %p184 = scmp.lt.s32.totalorder %s12, 1
        %s185 = scalar_select %p184, %s12, 1
        %s186 = smul.addr %s185, 20
        %s187 = smul.addr %s186, 4
        %s188 = scalar_lea.vmem %s0, %s187
      $region32: #{basic_block_forward.5} parent=27 // pred_fallthru
        _
    $region28: #{basic_block_forward.5} parent=5 // pred_fallthru
      _
    %p189 = scmp.le.s32.totalorder 1, %s12
    %p190 = scmp.lt.s32.totalorder %s12, 3
    %p191 = pnand %p189, %p190
    %p192 = pneg %p191
    // Predicated region
    $region33: #{basic_block_forward.5} parent=5 // pred_check
      _
    $region34: #{basic_block_forward.5} parent=5 // pred_check_branch
      %194 = sbr.rel (%p191) target = $region36
    $region35: #{basic_block_forward.5} parent=5 // pred_region
      %s195 = ssub.s32 %s12, 1
      %p196 = scmp.lt.s32.totalorder %s17, 1
      %s197 = scalar_select %p196, %s17, 1
      %s198 = smul.addr %s197, 20
      %s199 = smul.addr %s198, 4
      %s200 = scalar_lea.vmem %s0, %s199
      %p201 = pneg %p38
      %p202 = pneg %p35
      %p203 = pneg %p59
      %p204 = pneg %p56
      %p205 = pneg %p80
      %p206 = pneg %p77
      %p207 = pneg %p101
      %p208 = pneg %p98
      %p209 = pneg %p127
      %p210 = pneg %p124
      %p211 = scmp.lt.s32.totalorder %s17, 1
      %s212 = scalar_select %p211, %s17, 1
      %s213 = smul.addr %s212, 8
      %s214 = smul.addr %s213, 4
      %s215 = scalar_lea.vmem %s4, %s214
      %p216 = pneg %p153
      %p217 = pneg %p150
      %p218 = scmp.lt.s32.totalorder %s17, 1
      %s219 = scalar_select %p218, %s17, 1
      %s220 = smul.addr %s219, 8
      %s221 = scalar_lea.vmem %s5, %s220
      %p222 = scmp.lt.s32.totalorder %s17, 1
      %s223 = scalar_select %p222, %s17, 1
      %s224 = smul.addr %s223, 20
      %s225 = smul.addr %s224, 4
      %s226 = scalar_lea.vmem %s0, %s225
      %p227 = scmp.lt.s32.totalorder %s17, 1
      %s228 = scalar_select %p227, %s17, 1
      %s229 = smul.addr %s228, 8
      %s230 = smul.addr %s229, 4
      %s231 = scalar_lea.vmem %s4, %s230
      %p232 = scmp.lt.s32.totalorder %s17, 1
      %s233 = scalar_select %p232, %s17, 1
      %s234 = smul.addr %s233, 8
      %s235 = scalar_lea.vmem %s5, %s234
      %v237 = vld [vmem:[%s2] sm:$0x1]
      %v238 = vld [vmem:[%s3] sm:$0x1]
      %v239 = vlaneseq
      %v240 = vshrl.u32 %v239, 7
      %v241 = vld [vmem:[%s226] sm:$0xf]
      %v242 = vld [vmem:[%s226 + $0x8] sm:$0xf]
      %v243 = vld [vmem:[%s226 + $0x10] sm:$0xf]
      %v244 = vld [vmem:[%s226 + $0x18] sm:$0xf]
      %v245 = vld [vmem:[%s226 + $0x20] sm:$0xf]
      %v246 = vld [vmem:[%s226 + $0x28] sm:$0xf]
      %v247 = vld [vmem:[%s226 + $0x30] sm:$0xf]
      %v248 = vld [vmem:[%s226 + $0x38] sm:$0xf]
      %v249 = vunpack.c.l.bf16 %v241
      %v250 = vunpack.c.l.bf16 %v242
      %v251 = vunpack.c.l.bf16 %v243
      %v252 = vunpack.c.l.bf16 %v244
      %v253 = vunpack.c.l.bf16 %v245
      %v254 = vunpack.c.l.bf16 %v246
      %v255 = vunpack.c.l.bf16 %v247
      %v256 = vunpack.c.l.bf16 %v248
      %v258 = vlaneseq
      %v259 = vshrl.u32 %v258, 7
      %v260 = vsub.s32 0, %v259
      %v261 = vrot.slane %v237, %v260
      %v263 = vmul.f32 %v249, %v261
      %v264 = vmul.f32 %v250, %v261
      %v265 = vmul.f32 %v251, %v261
      %v266 = vmul.f32 %v252, %v261
      %v267 = vmul.f32 %v253, %v261
      %v268 = vmul.f32 %v254, %v261
      %v269 = vmul.f32 %v255, %v261
      %v270 = vmul.f32 %v256, %v261
      %v272 = vlaneseq
      %v273 = vshrl.u32 %v272, 7
      %v274 = vsub.s32 0, %v273
      %v275 = vrot.slane %v238, %v274
      %v277 = vadd.f32 %v263, %v275
      %v278 = vadd.f32 %v264, %v275
      %v279 = vadd.f32 %v265, %v275
      %v280 = vadd.f32 %v266, %v275
      %v281 = vadd.f32 %v267, %v275
      %v282 = vadd.f32 %v268, %v275
      %v283 = vadd.f32 %v269, %v275
      %v284 = vadd.f32 %v270, %v275
      %v285 = vmax.f32 %v277, 0.0
      %v286 = vmax.f32 %v278, 0.0
      %v287 = vmax.f32 %v279, 0.0
      %v288 = vmax.f32 %v280, 0.0
      %v289 = vmax.f32 %v281, 0.0
      %v290 = vmax.f32 %v282, 0.0
      %v291 = vmax.f32 %v283, 0.0
      %v292 = vmax.f32 %v284, 0.0
      %vm293 = vcmp.ge.s32.totalorder %v240, 1
      %vm294 = vmand 0, %vm293
      %vm295 = vmand 1, %vm293
      %vm296 = vcmp.le.s32.totalorder %v240, 8
      %vm297 = vmand %vm294, %vm296
      %vm298 = vmand %vm295, %vm296
      %v299 = vsel %vm297, 1, 0
      %v300 = vsel %vm298, 1, 0
      %vm301 = vcmp.eq.s32.totalorder %v299, 1
      %vm302 = vcmp.eq.s32.totalorder %v300, 1
      %v303 = vsel %vm301, %v285, 0.0
      %v304 = vsel %vm302, %v286, 0.0
      %v305 = vsel %vm302, %v287, 0.0
      %v306 = vsel %vm302, %v288, 0.0
      %v307 = vsel %vm302, %v289, 0.0
      %v308 = vsel %vm302, %v290, 0.0
      %v309 = vsel %vm302, %v291, 0.0
      %v310 = vsel %vm302, %v292, 0.0
      %v311 = vpack.c.bf16 %v303, %v303
      %v312 = vpack.c.bf16 %v304, %v304
      %v313 = vpack.c.bf16 %v305, %v305
      %v314 = vpack.c.bf16 %v306, %v306
      %v315 = vpack.c.bf16 %v307, %v307
      %v316 = vpack.c.bf16 %v308, %v308
      %v317 = vpack.c.bf16 %v309, %v309
      %v318 = vpack.c.bf16 %v310, %v310
      %v319 = vld [vmem:[%s1] sm:$0xf]
      %v320 = vld [vmem:[%s1 + $0x4] sm:$0xf]
      %v321 = vld [vmem:[%s1 + $0x8] sm:$0xf]
      %v322 = vld [vmem:[%s1 + $0xc] sm:$0xf]
      %v323 = vld [vmem:[%s1 + $0x10] sm:$0xf]
      %v324 = vld [vmem:[%s1 + $0x14] sm:$0xf]
      %v325 = vld [vmem:[%s1 + $0x18] sm:$0xf]
      %v326 = vld [vmem:[%s1 + $0x1c] sm:$0xf]
      %v327 = vld [vmem:[%s1 + $0x20] sm:$0xf]
      %v328 = vld [vmem:[%s1 + $0x24] sm:$0xf]
      %v329 = vld [vmem:[%s1 + $0x28] sm:$0xf]
      %v330 = vld [vmem:[%s1 + $0x2c] sm:$0xf]
      %v331 = vld [vmem:[%s1 + $0x30] sm:$0xf]
      %v332 = vld [vmem:[%s1 + $0x34] sm:$0xf]
      %v333 = vld [vmem:[%s1 + $0x38] sm:$0xf]
      %v334 = vld [vmem:[%s1 + $0x3c] sm:$0xf]
      %v335 = vld [vmem:[%s226 + $0x4] sm:$0x1]
      %v336 = vld [vmem:[%s226 + $0xc] sm:$0x1]
      %v337 = vld [vmem:[%s226 + $0x14] sm:$0x1]
      %v338 = vld [vmem:[%s226 + $0x1c] sm:$0x1]
      %v339 = vld [vmem:[%s226 + $0x24] sm:$0x1]
      %v340 = vld [vmem:[%s226 + $0x2c] sm:$0x1]
      %v341 = vld [vmem:[%s226 + $0x34] sm:$0x1]
      %v342 = vld [vmem:[%s226 + $0x3c] sm:$0x1]
      %v343 = vunpack.c.l.bf16 %v335
      %v344 = vunpack.c.l.bf16 %v336
      %v345 = vunpack.c.l.bf16 %v337
      %v346 = vunpack.c.l.bf16 %v338
      %v347 = vunpack.c.l.bf16 %v339
      %v348 = vunpack.c.l.bf16 %v340
      %v349 = vunpack.c.l.bf16 %v341
      %v350 = vunpack.c.l.bf16 %v342
      %v351 = vmul.f32 %v343, %v261
      %v352 = vmul.f32 %v344, %v261
      %v353 = vmul.f32 %v345, %v261
      %v354 = vmul.f32 %v346, %v261
      %v355 = vmul.f32 %v347, %v261
      %v356 = vmul.f32 %v348, %v261
      %v357 = vmul.f32 %v349, %v261
      %v358 = vmul.f32 %v350, %v261
      %v359 = vadd.f32 %v351, %v275
      %v360 = vadd.f32 %v352, %v275
      %v361 = vadd.f32 %v353, %v275
      %v362 = vadd.f32 %v354, %v275
      %v363 = vadd.f32 %v355, %v275
      %v364 = vadd.f32 %v356, %v275
      %v365 = vadd.f32 %v357, %v275
      %v366 = vadd.f32 %v358, %v275
      %v367 = vmax.f32 %v359, 0.0
      %v368 = vmax.f32 %v360, 0.0
      %v369 = vmax.f32 %v361, 0.0
      %v370 = vmax.f32 %v362, 0.0
      %v371 = vmax.f32 %v363, 0.0
      %v372 = vmax.f32 %v364, 0.0
      %v373 = vmax.f32 %v365, 0.0
      %v374 = vmax.f32 %v366, 0.0
      %v375 = vadd.s32 %v240, 1
      %vm376 = vcmp.ge.s32.totalorder %v375, 1
      %vm377 = vmand 0, %vm376
      %vm378 = vmand 1, %vm376
      %vm379 = vcmp.le.s32.totalorder %v375, 8
      %vm380 = vmand %vm377, %vm379
      %vm381 = vmand %vm378, %vm379
      %v382 = vsel %vm380, 1, 0
      %v383 = vsel %vm381, 1, 0
      %vm384 = vcmp.eq.s32.totalorder %v382, 1
      %vm385 = vcmp.eq.s32.totalorder %v383, 1
      %vm402 = vcmask 1046528
      %v403 = vrot.slane %v285, 1
      %v404 = vrot.slane %v367, 1
      %v405 = vsel %vm402, %v403, %v404
      %v406 = vrot.slane %v286, 1
      %v407 = vrot.slane %v368, 1
      %v408 = vsel %vm402, %v406, %v407
      %v409 = vrot.slane %v287, 1
      %v410 = vrot.slane %v369, 1
      %v411 = vsel %vm402, %v409, %v410
      %v412 = vrot.slane %v288, 1
      %v413 = vrot.slane %v370, 1
      %v414 = vsel %vm402, %v412, %v413
      %v415 = vrot.slane %v289, 1
      %v416 = vrot.slane %v371, 1
      %v417 = vsel %vm402, %v415, %v416
      %v418 = vrot.slane %v290, 1
      %v419 = vrot.slane %v372, 1
      %v420 = vsel %vm402, %v418, %v419
      %v421 = vrot.slane %v291, 1
      %v422 = vrot.slane %v373, 1
      %v423 = vsel %vm402, %v421, %v422
      %v424 = vrot.slane %v292, 1
      %v425 = vrot.slane %v374, 1
      %v426 = vsel %vm402, %v424, %v425
      %v435 = vsel %vm384, %v405, 0.0
      %v436 = vsel %vm385, %v408, 0.0
      %v437 = vsel %vm385, %v411, 0.0
      %v438 = vsel %vm385, %v414, 0.0
      %v439 = vsel %vm385, %v417, 0.0
      %v440 = vsel %vm385, %v420, 0.0
      %v441 = vsel %vm385, %v423, 0.0
      %v442 = vsel %vm385, %v426, 0.0
      %v443 = vpack.c.bf16 %v435, %v435
      %v444 = vpack.c.bf16 %v436, %v436
      %v445 = vpack.c.bf16 %v437, %v437
      %v446 = vpack.c.bf16 %v438, %v438
      %v447 = vpack.c.bf16 %v439, %v439
      %v448 = vpack.c.bf16 %v440, %v440
      %v449 = vpack.c.bf16 %v441, %v441
      %v450 = vpack.c.bf16 %v442, %v442
      %s451 = scalar_lea.vmem %s1, 64
      %v452 = vld [vmem:[%s451] sm:$0xf]
      %v453 = vld [vmem:[%s451 + $0x4] sm:$0xf]
      %v454 = vld [vmem:[%s451 + $0x8] sm:$0xf]
      %v455 = vld [vmem:[%s451 + $0xc] sm:$0xf]
      %v456 = vld [vmem:[%s451 + $0x10] sm:$0xf]
      %v457 = vld [vmem:[%s451 + $0x14] sm:$0xf]
      %v458 = vld [vmem:[%s451 + $0x18] sm:$0xf]
      %v459 = vld [vmem:[%s451 + $0x1c] sm:$0xf]
      %v460 = vld [vmem:[%s451 + $0x20] sm:$0xf]
      %v461 = vld [vmem:[%s451 + $0x24] sm:$0xf]
      %v462 = vld [vmem:[%s451 + $0x28] sm:$0xf]
      %v463 = vld [vmem:[%s451 + $0x2c] sm:$0xf]
      %v464 = vld [vmem:[%s451 + $0x30] sm:$0xf]
      %v465 = vld [vmem:[%s451 + $0x34] sm:$0xf]
      %v466 = vld [vmem:[%s451 + $0x38] sm:$0xf]
      %v467 = vld [vmem:[%s451 + $0x3c] sm:$0xf]
      %v476 = vunpack.c.l.b16 %v443
      %v477 = vunpack.c.l.b16 %v444
      %v478 = vunpack.c.l.b16 %v445
      %v479 = vunpack.c.l.b16 %v446
      %v480 = vunpack.c.l.b16 %v447
      %v481 = vunpack.c.l.b16 %v448
      %v482 = vunpack.c.l.b16 %v449
      %v483 = vunpack.c.l.b16 %v450
      %v484 = vpack.c.b16 %v477, %v476
      %v485 = vpack.c.b16 %v479, %v478
      %v486 = vpack.c.b16 %v481, %v480
      %v487 = vpack.c.b16 %v483, %v482
      %v508 = vunpack.c.l.b16 %v452
      %v509 = vunpack.c.l.b16 %v453
      %v510 = vunpack.c.l.b16 %v454
      %v511 = vunpack.c.l.b16 %v455
      %v512 = vunpack.c.l.b16 %v456
      %v513 = vunpack.c.l.b16 %v457
      %v514 = vunpack.c.l.b16 %v458
      %v515 = vunpack.c.l.b16 %v459
      %v516 = vunpack.c.l.b16 %v460
      %v517 = vunpack.c.l.b16 %v461
      %v518 = vunpack.c.l.b16 %v462
      %v519 = vunpack.c.l.b16 %v463
      %v520 = vunpack.c.l.b16 %v464
      %v521 = vunpack.c.l.b16 %v465
      %v522 = vunpack.c.l.b16 %v466
      %v523 = vunpack.c.l.b16 %v467
      %v524 = vpack.c.b16 %v509, %v508
      %v525 = vpack.c.b16 %v511, %v510
      %v526 = vpack.c.b16 %v513, %v512
      %v527 = vpack.c.b16 %v515, %v514
      %v528 = vpack.c.b16 %v517, %v516
      %v529 = vpack.c.b16 %v519, %v518
      %v530 = vpack.c.b16 %v521, %v520
      %v531 = vpack.c.b16 %v523, %v522
      %540 = vmatprep.subr.bf16.mxu0 0
      %541 = vmatpush1.bf16.msra.mxu0 %v531
      %542 = vmatprep.subr.bf16.mxu0 0
      %543 = vmatpush1.bf16.msra.mxu0 %v530
      %544 = vmatprep.subr.bf16.mxu0 0
      %545 = vmatpush1.bf16.msra.mxu0 %v529
      %546 = vmatprep.subr.bf16.mxu0 0
      %547 = vmatpush1.bf16.msra.mxu0 %v528
      %548 = vmatprep.subr.bf16.mxu0 0
      %549 = vmatpush1.bf16.msra.mxu0 %v527
      %550 = vmatprep.subr.bf16.mxu0 0
      %551 = vmatpush1.bf16.msra.mxu0 %v526
      %552 = vmatprep.subr.bf16.mxu0 0
      %553 = vmatpush1.bf16.msra.mxu0 %v525
      %554 = vmatprep.subr.bf16.mxu0 0
      %555 = vmatpush1.bf16.msra.mxu0 %v524
      %556 = vmatprep.subr.bf16.mxu0 0
      %557 = vmatpush2.bf16.msra.mxu0 0
      %558 = vmatprep.subr.bf16.mxu0 0
      %559 = vmatpush2.bf16.msra.mxu0 0
      %560 = vmatprep.subr.bf16.mxu0 0
      %561 = vmatpush2.bf16.msra.mxu0 0
      %562 = vmatprep.subr.bf16.mxu0 0
      %563 = vmatpush2.bf16.msra.mxu0 0
      %564 = vmatprep.subr.bf16.mxu0 0
      %565 = vmatpush2.bf16.msra.mxu0 0
      %566 = vmatprep.subr.bf16.mxu0 0
      %567 = vmatpush2.bf16.msra.mxu0 0
      %568 = vmatprep.subr.bf16.mxu0 0
      %569 = vmatpush2.bf16.msra.mxu0 0
      %570 = vmatprep.subr.bf16.mxu0 0
      %571 = vmatpush2.bf16.msra.mxu0 0
      %572 = vmatprep.mubr.bf16.mxu0 0
      %573 = vmatmul.mubr.bf16.gmra.mxu0 %v484
      %v574 = vpop.f32.mrf.mxu0
      %v575 = vadd.f32 0.0, %v574
      %v576 = vpop.f32.mrf.mxu0
      %v577 = vpop.f32.mrf.mxu0
      %v578 = vadd.f32 0.0, %v577
      %v579 = vpop.f32.mrf.mxu0
      %580 = vmatprep.mubr.bf16.mxu0 0
      %581 = vmatmul.mubr.bf16.gmra.mxu0 %v485
      %v582 = vpop.f32.mrf.mxu0
      %v583 = vadd.f32 0.0, %v582
      %v584 = vpop.f32.mrf.mxu0
      %v585 = vpop.f32.mrf.mxu0
      %v586 = vadd.f32 0.0, %v585
      %v587 = vpop.f32.mrf.mxu0
      %588 = vmatprep.mubr.bf16.mxu0 0
      %589 = vmatmul.mubr.bf16.gmra.mxu0 %v486
      %v590 = vpop.f32.mrf.mxu0
      %v591 = vadd.f32 0.0, %v590
      %v592 = vpop.f32.mrf.mxu0
      %v593 = vpop.f32.mrf.mxu0
      %v594 = vadd.f32 0.0, %v593
      %v595 = vpop.f32.mrf.mxu0
      %596 = vmatprep.mubr.bf16.mxu0 0
      %597 = vmatmul.mubr.bf16.gmra.mxu0 %v487
      %v598 = vpop.f32.mrf.mxu0
      %v599 = vadd.f32 0.0, %v598
      %v600 = vpop.f32.mrf.mxu0
      %v601 = vpop.f32.mrf.mxu0
      %v602 = vadd.f32 0.0, %v601
      %v603 = vpop.f32.mrf.mxu0
      %604 = vdwg.mxu0
      %v613 = vunpack.c.l.b16 %v311
      %v614 = vunpack.c.l.b16 %v312
      %v615 = vunpack.c.l.b16 %v313
      %v616 = vunpack.c.l.b16 %v314
      %v617 = vunpack.c.l.b16 %v315
      %v618 = vunpack.c.l.b16 %v316
      %v619 = vunpack.c.l.b16 %v317
      %v620 = vunpack.c.l.b16 %v318
      %v621 = vpack.c.b16 %v614, %v613
      %v622 = vpack.c.b16 %v616, %v615
      %v623 = vpack.c.b16 %v618, %v617
      %v624 = vpack.c.b16 %v620, %v619
      %v645 = vunpack.c.l.b16 %v319
      %v646 = vunpack.c.l.b16 %v320
      %v647 = vunpack.c.l.b16 %v321
      %v648 = vunpack.c.l.b16 %v322
      %v649 = vunpack.c.l.b16 %v323
      %v650 = vunpack.c.l.b16 %v324
      %v651 = vunpack.c.l.b16 %v325
      %v652 = vunpack.c.l.b16 %v326
      %v653 = vunpack.c.l.b16 %v327
      %v654 = vunpack.c.l.b16 %v328
      %v655 = vunpack.c.l.b16 %v329
      %v656 = vunpack.c.l.b16 %v330
      %v657 = vunpack.c.l.b16 %v331
      %v658 = vunpack.c.l.b16 %v332
      %v659 = vunpack.c.l.b16 %v333
      %v660 = vunpack.c.l.b16 %v334
      %v661 = vpack.c.b16 %v646, %v645
      %v662 = vpack.c.b16 %v648, %v647
      %v663 = vpack.c.b16 %v650, %v649
      %v664 = vpack.c.b16 %v652, %v651
      %v665 = vpack.c.b16 %v654, %v653
      %v666 = vpack.c.b16 %v656, %v655
      %v667 = vpack.c.b16 %v658, %v657
      %v668 = vpack.c.b16 %v660, %v659
      %677 = vmatprep.subr.bf16.mxu0 0
      %678 = vmatpush1.bf16.msra.mxu0 %v668
      %679 = vmatprep.subr.bf16.mxu0 0
      %680 = vmatpush1.bf16.msra.mxu0 %v667
      %681 = vmatprep.subr.bf16.mxu0 0
      %682 = vmatpush1.bf16.msra.mxu0 %v666
      %683 = vmatprep.subr.bf16.mxu0 0
      %684 = vmatpush1.bf16.msra.mxu0 %v665
      %685 = vmatprep.subr.bf16.mxu0 0
      %686 = vmatpush1.bf16.msra.mxu0 %v664
      %687 = vmatprep.subr.bf16.mxu0 0
      %688 = vmatpush1.bf16.msra.mxu0 %v663
      %689 = vmatprep.subr.bf16.mxu0 0
      %690 = vmatpush1.bf16.msra.mxu0 %v662
      %691 = vmatprep.subr.bf16.mxu0 0
      %692 = vmatpush1.bf16.msra.mxu0 %v661
      %693 = vmatprep.subr.bf16.mxu0 0
      %694 = vmatpush2.bf16.msra.mxu0 0
      %695 = vmatprep.subr.bf16.mxu0 0
      %696 = vmatpush2.bf16.msra.mxu0 0
      %697 = vmatprep.subr.bf16.mxu0 0
      %698 = vmatpush2.bf16.msra.mxu0 0
      %699 = vmatprep.subr.bf16.mxu0 0
      %700 = vmatpush2.bf16.msra.mxu0 0
      %701 = vmatprep.subr.bf16.mxu0 0
      %702 = vmatpush2.bf16.msra.mxu0 0
      %703 = vmatprep.subr.bf16.mxu0 0
      %704 = vmatpush2.bf16.msra.mxu0 0
      %705 = vmatprep.subr.bf16.mxu0 0
      %706 = vmatpush2.bf16.msra.mxu0 0
      %707 = vmatprep.subr.bf16.mxu0 0
      %708 = vmatpush2.bf16.msra.mxu0 0
      %709 = vmatprep.mubr.bf16.mxu0 0
      %710 = vmatmul.mubr.bf16.gmra.mxu0 %v621
      %v711 = vpop.f32.mrf.mxu0
      %v712 = vadd.f32 %v575, %v711
      %v713 = vpop.f32.mrf.mxu0
      %v714 = vpop.f32.mrf.mxu0
      %v715 = vadd.f32 %v578, %v714
      %v716 = vpop.f32.mrf.mxu0
      %717 = vmatprep.mubr.bf16.mxu0 0
      %718 = vmatmul.mubr.bf16.gmra.mxu0 %v622
      %v719 = vpop.f32.mrf.mxu0
      %v720 = vadd.f32 %v583, %v719
      %v721 = vpop.f32.mrf.mxu0
      %v722 = vpop.f32.mrf.mxu0
      %v723 = vadd.f32 %v586, %v722
      %v724 = vpop.f32.mrf.mxu0
      %725 = vmatprep.mubr.bf16.mxu0 0
      %726 = vmatmul.mubr.bf16.gmra.mxu0 %v623
      %v727 = vpop.f32.mrf.mxu0
      %v728 = vadd.f32 %v591, %v727
      %v729 = vpop.f32.mrf.mxu0
      %v730 = vpop.f32.mrf.mxu0
      %v731 = vadd.f32 %v594, %v730
      %v732 = vpop.f32.mrf.mxu0
      %733 = vmatprep.mubr.bf16.mxu0 0
      %734 = vmatmul.mubr.bf16.gmra.mxu0 %v624
      %v735 = vpop.f32.mrf.mxu0
      %v736 = vadd.f32 %v599, %v735
      %v737 = vpop.f32.mrf.mxu0
      %v738 = vpop.f32.mrf.mxu0
      %v739 = vadd.f32 %v602, %v738
      %v740 = vpop.f32.mrf.mxu0
      %741 = vdwg.mxu0
      %v742 = vld [vmem:[%s226] sm:$0xe]
      %v743 = vld [vmem:[%s226 + $0x8] sm:$0xe]
      %v744 = vld [vmem:[%s226 + $0x10] sm:$0xe]
      %v745 = vld [vmem:[%s226 + $0x18] sm:$0xe]
      %v746 = vld [vmem:[%s226 + $0x20] sm:$0xe]
      %v747 = vld [vmem:[%s226 + $0x28] sm:$0xe]
      %v748 = vld [vmem:[%s226 + $0x30] sm:$0xe]
      %v749 = vld [vmem:[%s226 + $0x38] sm:$0xe]
      %v750 = vunpack.c.l.bf16 %v742
      %v751 = vunpack.c.l.bf16 %v743
      %v752 = vunpack.c.l.bf16 %v744
      %v753 = vunpack.c.l.bf16 %v745
      %v754 = vunpack.c.l.bf16 %v746
      %v755 = vunpack.c.l.bf16 %v747
      %v756 = vunpack.c.l.bf16 %v748
      %v757 = vunpack.c.l.bf16 %v749
      %v758 = vmul.f32 %v750, %v261
      %v759 = vmul.f32 %v751, %v261
      %v760 = vmul.f32 %v752, %v261
      %v761 = vmul.f32 %v753, %v261
      %v762 = vmul.f32 %v754, %v261
      %v763 = vmul.f32 %v755, %v261
      %v764 = vmul.f32 %v756, %v261
      %v765 = vmul.f32 %v757, %v261
      %v766 = vadd.f32 %v758, %v275
      %v767 = vadd.f32 %v759, %v275
      %v768 = vadd.f32 %v760, %v275
      %v769 = vadd.f32 %v761, %v275
      %v770 = vadd.f32 %v762, %v275
      %v771 = vadd.f32 %v763, %v275
      %v772 = vadd.f32 %v764, %v275
      %v773 = vadd.f32 %v765, %v275
      %v774 = vmax.f32 %v766, 0.0
      %v775 = vmax.f32 %v767, 0.0
      %v776 = vmax.f32 %v768, 0.0
      %v777 = vmax.f32 %v769, 0.0
      %v778 = vmax.f32 %v770, 0.0
      %v779 = vmax.f32 %v771, 0.0
      %v780 = vmax.f32 %v772, 0.0
      %v781 = vmax.f32 %v773, 0.0
      %v782 = vadd.s32 %v240, 2
      %vm783 = vcmp.ge.s32.totalorder %v782, 1
      %vm784 = vmand 0, %vm783
      %vm785 = vmand 1, %vm783
      %vm786 = vcmp.le.s32.totalorder %v782, 8
      %vm787 = vmand %vm784, %vm786
      %vm788 = vmand %vm785, %vm786
      %v789 = vsel %vm787, 1, 0
      %v790 = vsel %vm788, 1, 0
      %vm791 = vcmp.eq.s32.totalorder %v789, 1
      %vm792 = vcmp.eq.s32.totalorder %v790, 1
      %vm801 = vcmask 1045504
      %v802 = vrot.slane %v774, 2
      %v803 = vrot.slane %v367, 2
      %v804 = vsel %vm801, %v802, %v803
      %v805 = vrot.slane %v775, 2
      %v806 = vrot.slane %v368, 2
      %v807 = vsel %vm801, %v805, %v806
      %v808 = vrot.slane %v776, 2
      %v809 = vrot.slane %v369, 2
      %v810 = vsel %vm801, %v808, %v809
      %v811 = vrot.slane %v777, 2
      %v812 = vrot.slane %v370, 2
      %v813 = vsel %vm801, %v811, %v812
      %v814 = vrot.slane %v778, 2
      %v815 = vrot.slane %v371, 2
      %v816 = vsel %vm801, %v814, %v815
      %v817 = vrot.slane %v779, 2
      %v818 = vrot.slane %v372, 2
      %v819 = vsel %vm801, %v817, %v818
      %v820 = vrot.slane %v780, 2
      %v821 = vrot.slane %v373, 2
      %v822 = vsel %vm801, %v820, %v821
      %v823 = vrot.slane %v781, 2
      %v824 = vrot.slane %v374, 2
      %v825 = vsel %vm801, %v823, %v824
      %v834 = vsel %vm791, %v804, 0.0
      %v835 = vsel %vm792, %v807, 0.0
      %v836 = vsel %vm792, %v810, 0.0
      %v837 = vsel %vm792, %v813, 0.0
      %v838 = vsel %vm792, %v816, 0.0
      %v839 = vsel %vm792, %v819, 0.0
      %v840 = vsel %vm792, %v822, 0.0
      %v841 = vsel %vm792, %v825, 0.0
      %v842 = vpack.c.bf16 %v834, %v834
      %v843 = vpack.c.bf16 %v835, %v835
      %v844 = vpack.c.bf16 %v836, %v836
      %v845 = vpack.c.bf16 %v837, %v837
      %v846 = vpack.c.bf16 %v838, %v838
      %v847 = vpack.c.bf16 %v839, %v839
      %v848 = vpack.c.bf16 %v840, %v840
      %v849 = vpack.c.bf16 %v841, %v841
      %s850 = scalar_lea.vmem %s1, 128
      %v851 = vld [vmem:[%s850] sm:$0xf]
      %v852 = vld [vmem:[%s850 + $0x4] sm:$0xf]
      %v853 = vld [vmem:[%s850 + $0x8] sm:$0xf]
      %v854 = vld [vmem:[%s850 + $0xc] sm:$0xf]
      %v855 = vld [vmem:[%s850 + $0x10] sm:$0xf]
      %v856 = vld [vmem:[%s850 + $0x14] sm:$0xf]
      %v857 = vld [vmem:[%s850 + $0x18] sm:$0xf]
      %v858 = vld [vmem:[%s850 + $0x1c] sm:$0xf]
      %v859 = vld [vmem:[%s850 + $0x20] sm:$0xf]
      %v860 = vld [vmem:[%s850 + $0x24] sm:$0xf]
      %v861 = vld [vmem:[%s850 + $0x28] sm:$0xf]
      %v862 = vld [vmem:[%s850 + $0x2c] sm:$0xf]
      %v863 = vld [vmem:[%s850 + $0x30] sm:$0xf]
      %v864 = vld [vmem:[%s850 + $0x34] sm:$0xf]
      %v865 = vld [vmem:[%s850 + $0x38] sm:$0xf]
      %v866 = vld [vmem:[%s850 + $0x3c] sm:$0xf]
      %v875 = vunpack.c.l.b16 %v842
      %v876 = vunpack.c.l.b16 %v843
      %v877 = vunpack.c.l.b16 %v844
      %v878 = vunpack.c.l.b16 %v845
      %v879 = vunpack.c.l.b16 %v846
      %v880 = vunpack.c.l.b16 %v847
      %v881 = vunpack.c.l.b16 %v848
      %v882 = vunpack.c.l.b16 %v849
      %v883 = vpack.c.b16 %v876, %v875
      %v884 = vpack.c.b16 %v878, %v877
      %v885 = vpack.c.b16 %v880, %v879
      %v886 = vpack.c.b16 %v882, %v881
      %v907 = vunpack.c.l.b16 %v851
      %v908 = vunpack.c.l.b16 %v852
      %v909 = vunpack.c.l.b16 %v853
      %v910 = vunpack.c.l.b16 %v854
      %v911 = vunpack.c.l.b16 %v855
      %v912 = vunpack.c.l.b16 %v856
      %v913 = vunpack.c.l.b16 %v857
      %v914 = vunpack.c.l.b16 %v858
      %v915 = vunpack.c.l.b16 %v859
      %v916 = vunpack.c.l.b16 %v860
      %v917 = vunpack.c.l.b16 %v861
      %v918 = vunpack.c.l.b16 %v862
      %v919 = vunpack.c.l.b16 %v863
      %v920 = vunpack.c.l.b16 %v864
      %v921 = vunpack.c.l.b16 %v865
      %v922 = vunpack.c.l.b16 %v866
      %v923 = vpack.c.b16 %v908, %v907
      %v924 = vpack.c.b16 %v910, %v909
      %v925 = vpack.c.b16 %v912, %v911
      %v926 = vpack.c.b16 %v914, %v913
      %v927 = vpack.c.b16 %v916, %v915
      %v928 = vpack.c.b16 %v918, %v917
      %v929 = vpack.c.b16 %v920, %v919
      %v930 = vpack.c.b16 %v922, %v921
      %939 = vmatprep.subr.bf16.mxu0 0
      %940 = vmatpush1.bf16.msra.mxu0 %v930
      %941 = vmatprep.subr.bf16.mxu0 0
      %942 = vmatpush1.bf16.msra.mxu0 %v929
      %943 = vmatprep.subr.bf16.mxu0 0
      %944 = vmatpush1.bf16.msra.mxu0 %v928
      %945 = vmatprep.subr.bf16.mxu0 0
      %946 = vmatpush1.bf16.msra.mxu0 %v927
      %947 = vmatprep.subr.bf16.mxu0 0
      %948 = vmatpush1.bf16.msra.mxu0 %v926
      %949 = vmatprep.subr.bf16.mxu0 0
      %950 = vmatpush1.bf16.msra.mxu0 %v925
      %951 = vmatprep.subr.bf16.mxu0 0
      %952 = vmatpush1.bf16.msra.mxu0 %v924
      %953 = vmatprep.subr.bf16.mxu0 0
      %954 = vmatpush1.bf16.msra.mxu0 %v923
      %955 = vmatprep.subr.bf16.mxu0 0
      %956 = vmatpush2.bf16.msra.mxu0 0
      %957 = vmatprep.subr.bf16.mxu0 0
      %958 = vmatpush2.bf16.msra.mxu0 0
      %959 = vmatprep.subr.bf16.mxu0 0
      %960 = vmatpush2.bf16.msra.mxu0 0
      %961 = vmatprep.subr.bf16.mxu0 0
      %962 = vmatpush2.bf16.msra.mxu0 0
      %963 = vmatprep.subr.bf16.mxu0 0
      %964 = vmatpush2.bf16.msra.mxu0 0
      %965 = vmatprep.subr.bf16.mxu0 0
      %966 = vmatpush2.bf16.msra.mxu0 0
      %967 = vmatprep.subr.bf16.mxu0 0
      %968 = vmatpush2.bf16.msra.mxu0 0
      %969 = vmatprep.subr.bf16.mxu0 0
      %970 = vmatpush2.bf16.msra.mxu0 0
      %971 = vmatprep.mubr.bf16.mxu0 0
      %972 = vmatmul.mubr.bf16.gmra.mxu0 %v883
      %v973 = vpop.f32.mrf.mxu0
      %v974 = vadd.f32 0.0, %v973
      %v975 = vpop.f32.mrf.mxu0
      %v976 = vpop.f32.mrf.mxu0
      %v977 = vadd.f32 0.0, %v976
      %v978 = vpop.f32.mrf.mxu0
      %979 = vmatprep.mubr.bf16.mxu0 0
      %980 = vmatmul.mubr.bf16.gmra.mxu0 %v884
      %v981 = vpop.f32.mrf.mxu0
      %v982 = vadd.f32 0.0, %v981
      %v983 = vpop.f32.mrf.mxu0
      %v984 = vpop.f32.mrf.mxu0
      %v985 = vadd.f32 0.0, %v984
      %v986 = vpop.f32.mrf.mxu0
      %987 = vmatprep.mubr.bf16.mxu0 0
      %988 = vmatmul.mubr.bf16.gmra.mxu0 %v885
      %v989 = vpop.f32.mrf.mxu0
      %v990 = vadd.f32 0.0, %v989
      %v991 = vpop.f32.mrf.mxu0
      %v992 = vpop.f32.mrf.mxu0
      %v993 = vadd.f32 0.0, %v992
      %v994 = vpop.f32.mrf.mxu0
      %995 = vmatprep.mubr.bf16.mxu0 0
      %996 = vmatmul.mubr.bf16.gmra.mxu0 %v886
      %v997 = vpop.f32.mrf.mxu0
      %v998 = vadd.f32 0.0, %v997
      %v999 = vpop.f32.mrf.mxu0
      %v1000 = vpop.f32.mrf.mxu0
      %v1001 = vadd.f32 0.0, %v1000
      %v1002 = vpop.f32.mrf.mxu0
      %1003 = vdwg.mxu0
      %v1004 = vadd.f32 %v712, %v974
      %v1005 = vadd.f32 %v715, %v977
      %v1006 = vadd.f32 %v720, %v982
      %v1007 = vadd.f32 %v723, %v985
      %v1008 = vadd.f32 %v728, %v990
      %v1009 = vadd.f32 %v731, %v993
      %v1010 = vadd.f32 %v736, %v998
      %v1011 = vadd.f32 %v739, %v1001
      %s1012 = scalar_lea.vmem %s226, 8
      %v1013 = vld [vmem:[%s1012] sm:$0xf]
      %v1014 = vld [vmem:[%s1012 + $0x8] sm:$0xf]
      %v1015 = vld [vmem:[%s1012 + $0x10] sm:$0xf]
      %v1016 = vld [vmem:[%s1012 + $0x18] sm:$0xf]
      %v1017 = vld [vmem:[%s1012 + $0x20] sm:$0xf]
      %v1018 = vld [vmem:[%s1012 + $0x28] sm:$0xf]
      %v1019 = vld [vmem:[%s1012 + $0x30] sm:$0xf]
      %v1020 = vld [vmem:[%s1012 + $0x38] sm:$0xf]
      %v1021 = vunpack.c.l.bf16 %v1013
      %v1022 = vunpack.c.l.bf16 %v1014
      %v1023 = vunpack.c.l.bf16 %v1015
      %v1024 = vunpack.c.l.bf16 %v1016
      %v1025 = vunpack.c.l.bf16 %v1017
      %v1026 = vunpack.c.l.bf16 %v1018
      %v1027 = vunpack.c.l.bf16 %v1019
      %v1028 = vunpack.c.l.bf16 %v1020
      %v1029 = vmul.f32 %v1021, %v261
      %v1030 = vmul.f32 %v1022, %v261
      %v1031 = vmul.f32 %v1023, %v261
      %v1032 = vmul.f32 %v1024, %v261
      %v1033 = vmul.f32 %v1025, %v261
      %v1034 = vmul.f32 %v1026, %v261
      %v1035 = vmul.f32 %v1027, %v261
      %v1036 = vmul.f32 %v1028, %v261
      %v1037 = vadd.f32 %v1029, %v275
      %v1038 = vadd.f32 %v1030, %v275
      %v1039 = vadd.f32 %v1031, %v275
      %v1040 = vadd.f32 %v1032, %v275
      %v1041 = vadd.f32 %v1033, %v275
      %v1042 = vadd.f32 %v1034, %v275
      %v1043 = vadd.f32 %v1035, %v275
      %v1044 = vadd.f32 %v1036, %v275
      %v1045 = vmax.f32 %v1037, 0.0
      %v1046 = vmax.f32 %v1038, 0.0
      %v1047 = vmax.f32 %v1039, 0.0
      %v1048 = vmax.f32 %v1040, 0.0
      %v1049 = vmax.f32 %v1041, 0.0
      %v1050 = vmax.f32 %v1042, 0.0
      %v1051 = vmax.f32 %v1043, 0.0
      %v1052 = vmax.f32 %v1044, 0.0
      %v1053 = vsel %vm302, %v1045, 0.0
      %v1054 = vsel %vm302, %v1046, 0.0
      %v1055 = vsel %vm302, %v1047, 0.0
      %v1056 = vsel %vm302, %v1048, 0.0
      %v1057 = vsel %vm302, %v1049, 0.0
      %v1058 = vsel %vm302, %v1050, 0.0
      %v1059 = vsel %vm302, %v1051, 0.0
      %v1060 = vsel %vm302, %v1052, 0.0
      %v1061 = vpack.c.bf16 %v1053, %v1053
      %v1062 = vpack.c.bf16 %v1054, %v1054
      %v1063 = vpack.c.bf16 %v1055, %v1055
      %v1064 = vpack.c.bf16 %v1056, %v1056
      %v1065 = vpack.c.bf16 %v1057, %v1057
      %v1066 = vpack.c.bf16 %v1058, %v1058
      %v1067 = vpack.c.bf16 %v1059, %v1059
      %v1068 = vpack.c.bf16 %v1060, %v1060
      %s1069 = scalar_lea.vmem %s1, 192
      %v1070 = vld [vmem:[%s1069] sm:$0xf]
      %v1071 = vld [vmem:[%s1069 + $0x4] sm:$0xf]
      %v1072 = vld [vmem:[%s1069 + $0x8] sm:$0xf]
      %v1073 = vld [vmem:[%s1069 + $0xc] sm:$0xf]
      %v1074 = vld [vmem:[%s1069 + $0x10] sm:$0xf]
      %v1075 = vld [vmem:[%s1069 + $0x14] sm:$0xf]
      %v1076 = vld [vmem:[%s1069 + $0x18] sm:$0xf]
      %v1077 = vld [vmem:[%s1069 + $0x1c] sm:$0xf]
      %v1078 = vld [vmem:[%s1069 + $0x20] sm:$0xf]
      %v1079 = vld [vmem:[%s1069 + $0x24] sm:$0xf]
      %v1080 = vld [vmem:[%s1069 + $0x28] sm:$0xf]
      %v1081 = vld [vmem:[%s1069 + $0x2c] sm:$0xf]
      %v1082 = vld [vmem:[%s1069 + $0x30] sm:$0xf]
      %v1083 = vld [vmem:[%s1069 + $0x34] sm:$0xf]
      %v1084 = vld [vmem:[%s1069 + $0x38] sm:$0xf]
      %v1085 = vld [vmem:[%s1069 + $0x3c] sm:$0xf]
      %v1094 = vunpack.c.l.b16 %v1061
      %v1095 = vunpack.c.l.b16 %v1062
      %v1096 = vunpack.c.l.b16 %v1063
      %v1097 = vunpack.c.l.b16 %v1064
      %v1098 = vunpack.c.l.b16 %v1065
      %v1099 = vunpack.c.l.b16 %v1066
      %v1100 = vunpack.c.l.b16 %v1067
      %v1101 = vunpack.c.l.b16 %v1068
      %v1102 = vpack.c.b16 %v1095, %v1094
      %v1103 = vpack.c.b16 %v1097, %v1096
      %v1104 = vpack.c.b16 %v1099, %v1098
      %v1105 = vpack.c.b16 %v1101, %v1100
      %v1126 = vunpack.c.l.b16 %v1070
      %v1127 = vunpack.c.l.b16 %v1071
      %v1128 = vunpack.c.l.b16 %v1072
      %v1129 = vunpack.c.l.b16 %v1073
      %v1130 = vunpack.c.l.b16 %v1074
      %v1131 = vunpack.c.l.b16 %v1075
      %v1132 = vunpack.c.l.b16 %v1076
      %v1133 = vunpack.c.l.b16 %v1077
      %v1134 = vunpack.c.l.b16 %v1078
      %v1135 = vunpack.c.l.b16 %v1079
      %v1136 = vunpack.c.l.b16 %v1080
      %v1137 = vunpack.c.l.b16 %v1081
      %v1138 = vunpack.c.l.b16 %v1082
      %v1139 = vunpack.c.l.b16 %v1083
      %v1140 = vunpack.c.l.b16 %v1084
      %v1141 = vunpack.c.l.b16 %v1085
      %v1142 = vpack.c.b16 %v1127, %v1126
      %v1143 = vpack.c.b16 %v1129, %v1128
      %v1144 = vpack.c.b16 %v1131, %v1130
      %v1145 = vpack.c.b16 %v1133, %v1132
      %v1146 = vpack.c.b16 %v1135, %v1134
      %v1147 = vpack.c.b16 %v1137, %v1136
      %v1148 = vpack.c.b16 %v1139, %v1138
      %v1149 = vpack.c.b16 %v1141, %v1140
      %1158 = vmatprep.subr.bf16.mxu0 0
      %1159 = vmatpush1.bf16.msra.mxu0 %v1149
      %1160 = vmatprep.subr.bf16.mxu0 0
      %1161 = vmatpush1.bf16.msra.mxu0 %v1148
      %1162 = vmatprep.subr.bf16.mxu0 0
      %1163 = vmatpush1.bf16.msra.mxu0 %v1147
      %1164 = vmatprep.subr.bf16.mxu0 0
      %1165 = vmatpush1.bf16.msra.mxu0 %v1146
      %1166 = vmatprep.subr.bf16.mxu0 0
      %1167 = vmatpush1.bf16.msra.mxu0 %v1145
      %1168 = vmatprep.subr.bf16.mxu0 0
      %1169 = vmatpush1.bf16.msra.mxu0 %v1144
      %1170 = vmatprep.subr.bf16.mxu0 0
      %1171 = vmatpush1.bf16.msra.mxu0 %v1143
      %1172 = vmatprep.subr.bf16.mxu0 0
      %1173 = vmatpush1.bf16.msra.mxu0 %v1142
      %1174 = vmatprep.subr.bf16.mxu0 0
      %1175 = vmatpush2.bf16.msra.mxu0 0
      %1176 = vmatprep.subr.bf16.mxu0 0
      %1177 = vmatpush2.bf16.msra.mxu0 0
      %1178 = vmatprep.subr.bf16.mxu0 0
      %1179 = vmatpush2.bf16.msra.mxu0 0
      %1180 = vmatprep.subr.bf16.mxu0 0
      %1181 = vmatpush2.bf16.msra.mxu0 0
      %1182 = vmatprep.subr.bf16.mxu0 0
      %1183 = vmatpush2.bf16.msra.mxu0 0
      %1184 = vmatprep.subr.bf16.mxu0 0
      %1185 = vmatpush2.bf16.msra.mxu0 0
      %1186 = vmatprep.subr.bf16.mxu0 0
      %1187 = vmatpush2.bf16.msra.mxu0 0
      %1188 = vmatprep.subr.bf16.mxu0 0
      %1189 = vmatpush2.bf16.msra.mxu0 0
      %1190 = vmatprep.mubr.bf16.mxu0 0
      %1191 = vmatmul.mubr.bf16.gmra.mxu0 %v1102
      %v1192 = vpop.f32.mrf.mxu0
      %v1193 = vadd.f32 0.0, %v1192
      %v1194 = vpop.f32.mrf.mxu0
      %v1195 = vpop.f32.mrf.mxu0
      %v1196 = vadd.f32 0.0, %v1195
      %v1197 = vpop.f32.mrf.mxu0
      %1198 = vmatprep.mubr.bf16.mxu0 0
      %1199 = vmatmul.mubr.bf16.gmra.mxu0 %v1103
      %v1200 = vpop.f32.mrf.mxu0
      %v1201 = vadd.f32 0.0, %v1200
      %v1202 = vpop.f32.mrf.mxu0
      %v1203 = vpop.f32.mrf.mxu0
      %v1204 = vadd.f32 0.0, %v1203
      %v1205 = vpop.f32.mrf.mxu0
      %1206 = vmatprep.mubr.bf16.mxu0 0
      %1207 = vmatmul.mubr.bf16.gmra.mxu0 %v1104
      %v1208 = vpop.f32.mrf.mxu0
      %v1209 = vadd.f32 0.0, %v1208
      %v1210 = vpop.f32.mrf.mxu0
      %v1211 = vpop.f32.mrf.mxu0
      %v1212 = vadd.f32 0.0, %v1211
      %v1213 = vpop.f32.mrf.mxu0
      %1214 = vmatprep.mubr.bf16.mxu0 0
      %1215 = vmatmul.mubr.bf16.gmra.mxu0 %v1105
      %v1216 = vpop.f32.mrf.mxu0
      %v1217 = vadd.f32 0.0, %v1216
      %v1218 = vpop.f32.mrf.mxu0
      %v1219 = vpop.f32.mrf.mxu0
      %v1220 = vadd.f32 0.0, %v1219
      %v1221 = vpop.f32.mrf.mxu0
      %1222 = vdwg.mxu0
      %v1223 = vadd.f32 %v1004, %v1193
      %v1224 = vadd.f32 %v1005, %v1196
      %v1225 = vadd.f32 %v1006, %v1201
      %v1226 = vadd.f32 %v1007, %v1204
      %v1227 = vadd.f32 %v1008, %v1209
      %v1228 = vadd.f32 %v1009, %v1212
      %v1229 = vadd.f32 %v1010, %v1217
      %v1230 = vadd.f32 %v1011, %v1220
      %v1231 = vld [vmem:[%s1012] sm:$0xf]
      %v1232 = vld [vmem:[%s1012 + $0x4] sm:$0x1]
      %v1233 = vld [vmem:[%s1012 + $0x8] sm:$0xf]
      %v1234 = vld [vmem:[%s1012 + $0xc] sm:$0x1]
      %v1235 = vld [vmem:[%s1012 + $0x10] sm:$0xf]
      %v1236 = vld [vmem:[%s1012 + $0x14] sm:$0x1]
      %v1237 = vld [vmem:[%s1012 + $0x18] sm:$0xf]
      %v1238 = vld [vmem:[%s1012 + $0x1c] sm:$0x1]
      %v1239 = vld [vmem:[%s1012 + $0x20] sm:$0xf]
      %v1240 = vld [vmem:[%s1012 + $0x24] sm:$0x1]
      %v1241 = vld [vmem:[%s1012 + $0x28] sm:$0xf]
      %v1242 = vld [vmem:[%s1012 + $0x2c] sm:$0x1]
      %v1243 = vld [vmem:[%s1012 + $0x30] sm:$0xf]
      %v1244 = vld [vmem:[%s1012 + $0x34] sm:$0x1]
      %v1245 = vld [vmem:[%s1012 + $0x38] sm:$0xf]
      %v1246 = vld [vmem:[%s1012 + $0x3c] sm:$0x1]
      %v1247 = vunpack.c.l.bf16 %v1231
      %v1248 = vunpack.c.l.bf16 %v1232
      %v1249 = vunpack.c.l.bf16 %v1233
      %v1250 = vunpack.c.l.bf16 %v1234
      %v1251 = vunpack.c.l.bf16 %v1235
      %v1252 = vunpack.c.l.bf16 %v1236
      %v1253 = vunpack.c.l.bf16 %v1237
      %v1254 = vunpack.c.l.bf16 %v1238
      %v1255 = vunpack.c.l.bf16 %v1239
      %v1256 = vunpack.c.l.bf16 %v1240
      %v1257 = vunpack.c.l.bf16 %v1241
      %v1258 = vunpack.c.l.bf16 %v1242
      %v1259 = vunpack.c.l.bf16 %v1243
      %v1260 = vunpack.c.l.bf16 %v1244
      %v1261 = vunpack.c.l.bf16 %v1245
      %v1262 = vunpack.c.l.bf16 %v1246
      %v1263 = vmul.f32 %v1247, %v261
      %v1264 = vmul.f32 %v1248, %v261
      %v1265 = vmul.f32 %v1249, %v261
      %v1266 = vmul.f32 %v1250, %v261
      %v1267 = vmul.f32 %v1251, %v261
      %v1268 = vmul.f32 %v1252, %v261
      %v1269 = vmul.f32 %v1253, %v261
      %v1270 = vmul.f32 %v1254, %v261
      %v1271 = vmul.f32 %v1255, %v261
      %v1272 = vmul.f32 %v1256, %v261
      %v1273 = vmul.f32 %v1257, %v261
      %v1274 = vmul.f32 %v1258, %v261
      %v1275 = vmul.f32 %v1259, %v261
      %v1276 = vmul.f32 %v1260, %v261
      %v1277 = vmul.f32 %v1261, %v261
      %v1278 = vmul.f32 %v1262, %v261
      %v1279 = vadd.f32 %v1263, %v275
      %v1280 = vadd.f32 %v1264, %v275
      %v1281 = vadd.f32 %v1265, %v275
      %v1282 = vadd.f32 %v1266, %v275
      %v1283 = vadd.f32 %v1267, %v275
      %v1284 = vadd.f32 %v1268, %v275
      %v1285 = vadd.f32 %v1269, %v275
      %v1286 = vadd.f32 %v1270, %v275
      %v1287 = vadd.f32 %v1271, %v275
      %v1288 = vadd.f32 %v1272, %v275
      %v1289 = vadd.f32 %v1273, %v275
      %v1290 = vadd.f32 %v1274, %v275
      %v1291 = vadd.f32 %v1275, %v275
      %v1292 = vadd.f32 %v1276, %v275
      %v1293 = vadd.f32 %v1277, %v275
      %v1294 = vadd.f32 %v1278, %v275
      %v1295 = vmax.f32 %v1279, 0.0
      %v1296 = vmax.f32 %v1280, 0.0
      %v1297 = vmax.f32 %v1281, 0.0
      %v1298 = vmax.f32 %v1282, 0.0
      %v1299 = vmax.f32 %v1283, 0.0
      %v1300 = vmax.f32 %v1284, 0.0
      %v1301 = vmax.f32 %v1285, 0.0
      %v1302 = vmax.f32 %v1286, 0.0
      %v1303 = vmax.f32 %v1287, 0.0
      %v1304 = vmax.f32 %v1288, 0.0
      %v1305 = vmax.f32 %v1289, 0.0
      %v1306 = vmax.f32 %v1290, 0.0
      %v1307 = vmax.f32 %v1291, 0.0
      %v1308 = vmax.f32 %v1292, 0.0
      %v1309 = vmax.f32 %v1293, 0.0
      %v1310 = vmax.f32 %v1294, 0.0
      %v1327 = vrot.slane %v1295, 1
      %v1328 = vrot.slane %v1296, 1
      %v1329 = vsel %vm402, %v1327, %v1328
      %v1330 = vrot.slane %v1297, 1
      %v1331 = vrot.slane %v1298, 1
      %v1332 = vsel %vm402, %v1330, %v1331
      %v1333 = vrot.slane %v1299, 1
      %v1334 = vrot.slane %v1300, 1
      %v1335 = vsel %vm402, %v1333, %v1334
      %v1336 = vrot.slane %v1301, 1
      %v1337 = vrot.slane %v1302, 1
      %v1338 = vsel %vm402, %v1336, %v1337
      %v1339 = vrot.slane %v1303, 1
      %v1340 = vrot.slane %v1304, 1
      %v1341 = vsel %vm402, %v1339, %v1340
      %v1342 = vrot.slane %v1305, 1
      %v1343 = vrot.slane %v1306, 1
      %v1344 = vsel %vm402, %v1342, %v1343
      %v1345 = vrot.slane %v1307, 1
      %v1346 = vrot.slane %v1308, 1
      %v1347 = vsel %vm402, %v1345, %v1346
      %v1348 = vrot.slane %v1309, 1
      %v1349 = vrot.slane %v1310, 1
      %v1350 = vsel %vm402, %v1348, %v1349
      %v1359 = vsel %vm385, %v1329, 0.0
      %v1360 = vsel %vm385, %v1332, 0.0
      %v1361 = vsel %vm385, %v1335, 0.0
      %v1362 = vsel %vm385, %v1338, 0.0
      %v1363 = vsel %vm385, %v1341, 0.0
      %v1364 = vsel %vm385, %v1344, 0.0
      %v1365 = vsel %vm385, %v1347, 0.0
      %v1366 = vsel %vm385, %v1350, 0.0
      %v1367 = vpack.c.bf16 %v1359, %v1359
      %v1368 = vpack.c.bf16 %v1360, %v1360
      %v1369 = vpack.c.bf16 %v1361, %v1361
      %v1370 = vpack.c.bf16 %v1362, %v1362
      %v1371 = vpack.c.bf16 %v1363, %v1363
      %v1372 = vpack.c.bf16 %v1364, %v1364
      %v1373 = vpack.c.bf16 %v1365, %v1365
      %v1374 = vpack.c.bf16 %v1366, %v1366
      %s1375 = scalar_lea.vmem %s1, 256
      %v1376 = vld [vmem:[%s1375] sm:$0xf]
      %v1377 = vld [vmem:[%s1375 + $0x4] sm:$0xf]
      %v1378 = vld [vmem:[%s1375 + $0x8] sm:$0xf]
      %v1379 = vld [vmem:[%s1375 + $0xc] sm:$0xf]
      %v1380 = vld [vmem:[%s1375 + $0x10] sm:$0xf]
      %v1381 = vld [vmem:[%s1375 + $0x14] sm:$0xf]
      %v1382 = vld [vmem:[%s1375 + $0x18] sm:$0xf]
      %v1383 = vld [vmem:[%s1375 + $0x1c] sm:$0xf]
      %v1384 = vld [vmem:[%s1375 + $0x20] sm:$0xf]
      %v1385 = vld [vmem:[%s1375 + $0x24] sm:$0xf]
      %v1386 = vld [vmem:[%s1375 + $0x28] sm:$0xf]
      %v1387 = vld [vmem:[%s1375 + $0x2c] sm:$0xf]
      %v1388 = vld [vmem:[%s1375 + $0x30] sm:$0xf]
      %v1389 = vld [vmem:[%s1375 + $0x34] sm:$0xf]
      %v1390 = vld [vmem:[%s1375 + $0x38] sm:$0xf]
      %v1391 = vld [vmem:[%s1375 + $0x3c] sm:$0xf]
      %v1400 = vunpack.c.l.b16 %v1367
      %v1401 = vunpack.c.l.b16 %v1368
      %v1402 = vunpack.c.l.b16 %v1369
      %v1403 = vunpack.c.l.b16 %v1370
      %v1404 = vunpack.c.l.b16 %v1371
      %v1405 = vunpack.c.l.b16 %v1372
      %v1406 = vunpack.c.l.b16 %v1373
      %v1407 = vunpack.c.l.b16 %v1374
      %v1408 = vpack.c.b16 %v1401, %v1400
      %v1409 = vpack.c.b16 %v1403, %v1402
      %v1410 = vpack.c.b16 %v1405, %v1404
      %v1411 = vpack.c.b16 %v1407, %v1406
      %v1432 = vunpack.c.l.b16 %v1376
      %v1433 = vunpack.c.l.b16 %v1377
      %v1434 = vunpack.c.l.b16 %v1378
      %v1435 = vunpack.c.l.b16 %v1379
      %v1436 = vunpack.c.l.b16 %v1380
      %v1437 = vunpack.c.l.b16 %v1381
      %v1438 = vunpack.c.l.b16 %v1382
      %v1439 = vunpack.c.l.b16 %v1383
      %v1440 = vunpack.c.l.b16 %v1384
      %v1441 = vunpack.c.l.b16 %v1385
      %v1442 = vunpack.c.l.b16 %v1386
      %v1443 = vunpack.c.l.b16 %v1387
      %v1444 = vunpack.c.l.b16 %v1388
      %v1445 = vunpack.c.l.b16 %v1389
      %v1446 = vunpack.c.l.b16 %v1390
      %v1447 = vunpack.c.l.b16 %v1391
      %v1448 = vpack.c.b16 %v1433, %v1432
      %v1449 = vpack.c.b16 %v1435, %v1434
      %v1450 = vpack.c.b16 %v1437, %v1436
      %v1451 = vpack.c.b16 %v1439, %v1438
      %v1452 = vpack.c.b16 %v1441, %v1440
      %v1453 = vpack.c.b16 %v1443, %v1442
      %v1454 = vpack.c.b16 %v1445, %v1444
      %v1455 = vpack.c.b16 %v1447, %v1446
      %1464 = vmatprep.subr.bf16.mxu0 0
      %1465 = vmatpush1.bf16.msra.mxu0 %v1455
      %1466 = vmatprep.subr.bf16.mxu0 0
      %1467 = vmatpush1.bf16.msra.mxu0 %v1454
      %1468 = vmatprep.subr.bf16.mxu0 0
      %1469 = vmatpush1.bf16.msra.mxu0 %v1453
      %1470 = vmatprep.subr.bf16.mxu0 0
      %1471 = vmatpush1.bf16.msra.mxu0 %v1452
      %1472 = vmatprep.subr.bf16.mxu0 0
      %1473 = vmatpush1.bf16.msra.mxu0 %v1451
      %1474 = vmatprep.subr.bf16.mxu0 0
      %1475 = vmatpush1.bf16.msra.mxu0 %v1450
      %1476 = vmatprep.subr.bf16.mxu0 0
      %1477 = vmatpush1.bf16.msra.mxu0 %v1449
      %1478 = vmatprep.subr.bf16.mxu0 0
      %1479 = vmatpush1.bf16.msra.mxu0 %v1448
      %1480 = vmatprep.subr.bf16.mxu0 0
      %1481 = vmatpush2.bf16.msra.mxu0 0
      %1482 = vmatprep.subr.bf16.mxu0 0
      %1483 = vmatpush2.bf16.msra.mxu0 0
      %1484 = vmatprep.subr.bf16.mxu0 0
      %1485 = vmatpush2.bf16.msra.mxu0 0
      %1486 = vmatprep.subr.bf16.mxu0 0
      %1487 = vmatpush2.bf16.msra.mxu0 0
      %1488 = vmatprep.subr.bf16.mxu0 0
      %1489 = vmatpush2.bf16.msra.mxu0 0
      %1490 = vmatprep.subr.bf16.mxu0 0
      %1491 = vmatpush2.bf16.msra.mxu0 0
      %1492 = vmatprep.subr.bf16.mxu0 0
      %1493 = vmatpush2.bf16.msra.mxu0 0
      %1494 = vmatprep.subr.bf16.mxu0 0
      %1495 = vmatpush2.bf16.msra.mxu0 0
      %1496 = vmatprep.mubr.bf16.mxu0 0
      %1497 = vmatmul.mubr.bf16.gmra.mxu0 %v1408
      %v1498 = vpop.f32.mrf.mxu0
      %v1499 = vadd.f32 0.0, %v1498
      %v1500 = vpop.f32.mrf.mxu0
      %v1501 = vpop.f32.mrf.mxu0
      %v1502 = vadd.f32 0.0, %v1501
      %v1503 = vpop.f32.mrf.mxu0
      %1504 = vmatprep.mubr.bf16.mxu0 0
      %1505 = vmatmul.mubr.bf16.gmra.mxu0 %v1409
      %v1506 = vpop.f32.mrf.mxu0
      %v1507 = vadd.f32 0.0, %v1506
      %v1508 = vpop.f32.mrf.mxu0
      %v1509 = vpop.f32.mrf.mxu0
      %v1510 = vadd.f32 0.0, %v1509
      %v1511 = vpop.f32.mrf.mxu0
      %1512 = vmatprep.mubr.bf16.mxu0 0
      %1513 = vmatmul.mubr.bf16.gmra.mxu0 %v1410
      %v1514 = vpop.f32.mrf.mxu0
      %v1515 = vadd.f32 0.0, %v1514
      %v1516 = vpop.f32.mrf.mxu0
      %v1517 = vpop.f32.mrf.mxu0
      %v1518 = vadd.f32 0.0, %v1517
      %v1519 = vpop.f32.mrf.mxu0
      %1520 = vmatprep.mubr.bf16.mxu0 0
      %1521 = vmatmul.mubr.bf16.gmra.mxu0 %v1411
      %v1522 = vpop.f32.mrf.mxu0
      %v1523 = vadd.f32 0.0, %v1522
      %v1524 = vpop.f32.mrf.mxu0
      %v1525 = vpop.f32.mrf.mxu0
      %v1526 = vadd.f32 0.0, %v1525
      %v1527 = vpop.f32.mrf.mxu0
      %1528 = vdwg.mxu0
      %v1529 = vadd.f32 %v1223, %v1499
      %v1530 = vadd.f32 %v1224, %v1502
      %v1531 = vadd.f32 %v1225, %v1507
      %v1532 = vadd.f32 %v1226, %v1510
      %v1533 = vadd.f32 %v1227, %v1515
      %v1534 = vadd.f32 %v1228, %v1518
      %v1535 = vadd.f32 %v1229, %v1523
      %v1536 = vadd.f32 %v1230, %v1526
      %v1537 = vld [vmem:[%s1012] sm:$0xe]
      %v1538 = vld [vmem:[%s1012 + $0x8] sm:$0xe]
      %v1539 = vld [vmem:[%s1012 + $0x10] sm:$0xe]
      %v1540 = vld [vmem:[%s1012 + $0x18] sm:$0xe]
      %v1541 = vld [vmem:[%s1012 + $0x20] sm:$0xe]
      %v1542 = vld [vmem:[%s1012 + $0x28] sm:$0xe]
      %v1543 = vld [vmem:[%s1012 + $0x30] sm:$0xe]
      %v1544 = vld [vmem:[%s1012 + $0x38] sm:$0xe]
      %v1545 = vunpack.c.l.bf16 %v1537
      %v1546 = vunpack.c.l.bf16 %v1538
      %v1547 = vunpack.c.l.bf16 %v1539
      %v1548 = vunpack.c.l.bf16 %v1540
      %v1549 = vunpack.c.l.bf16 %v1541
      %v1550 = vunpack.c.l.bf16 %v1542
      %v1551 = vunpack.c.l.bf16 %v1543
      %v1552 = vunpack.c.l.bf16 %v1544
      %v1553 = vmul.f32 %v1545, %v261
      %v1554 = vmul.f32 %v1546, %v261
      %v1555 = vmul.f32 %v1547, %v261
      %v1556 = vmul.f32 %v1548, %v261
      %v1557 = vmul.f32 %v1549, %v261
      %v1558 = vmul.f32 %v1550, %v261
      %v1559 = vmul.f32 %v1551, %v261
      %v1560 = vmul.f32 %v1552, %v261
      %v1561 = vadd.f32 %v1553, %v275
      %v1562 = vadd.f32 %v1554, %v275
      %v1563 = vadd.f32 %v1555, %v275
      %v1564 = vadd.f32 %v1556, %v275
      %v1565 = vadd.f32 %v1557, %v275
      %v1566 = vadd.f32 %v1558, %v275
      %v1567 = vadd.f32 %v1559, %v275
      %v1568 = vadd.f32 %v1560, %v275
      %v1569 = vmax.f32 %v1561, 0.0
      %v1570 = vmax.f32 %v1562, 0.0
      %v1571 = vmax.f32 %v1563, 0.0
      %v1572 = vmax.f32 %v1564, 0.0
      %v1573 = vmax.f32 %v1565, 0.0
      %v1574 = vmax.f32 %v1566, 0.0
      %v1575 = vmax.f32 %v1567, 0.0
      %v1576 = vmax.f32 %v1568, 0.0
      %v1585 = vrot.slane %v1569, 2
      %v1586 = vrot.slane %v1296, 2
      %v1587 = vsel %vm801, %v1585, %v1586
      %v1588 = vrot.slane %v1570, 2
      %v1589 = vrot.slane %v1298, 2
      %v1590 = vsel %vm801, %v1588, %v1589
      %v1591 = vrot.slane %v1571, 2
      %v1592 = vrot.slane %v1300, 2
      %v1593 = vsel %vm801, %v1591, %v1592
      %v1594 = vrot.slane %v1572, 2
      %v1595 = vrot.slane %v1302, 2
      %v1596 = vsel %vm801, %v1594, %v1595
      %v1597 = vrot.slane %v1573, 2
      %v1598 = vrot.slane %v1304, 2
      %v1599 = vsel %vm801, %v1597, %v1598
      %v1600 = vrot.slane %v1574, 2
      %v1601 = vrot.slane %v1306, 2
      %v1602 = vsel %vm801, %v1600, %v1601
      %v1603 = vrot.slane %v1575, 2
      %v1604 = vrot.slane %v1308, 2
      %v1605 = vsel %vm801, %v1603, %v1604
      %v1606 = vrot.slane %v1576, 2
      %v1607 = vrot.slane %v1310, 2
      %v1608 = vsel %vm801, %v1606, %v1607
      %v1617 = vsel %vm792, %v1587, 0.0
      %v1618 = vsel %vm792, %v1590, 0.0
      %v1619 = vsel %vm792, %v1593, 0.0
      %v1620 = vsel %vm792, %v1596, 0.0
      %v1621 = vsel %vm792, %v1599, 0.0
      %v1622 = vsel %vm792, %v1602, 0.0
      %v1623 = vsel %vm792, %v1605, 0.0
      %v1624 = vsel %vm792, %v1608, 0.0
      %v1625 = vpack.c.bf16 %v1617, %v1617
      %v1626 = vpack.c.bf16 %v1618, %v1618
      %v1627 = vpack.c.bf16 %v1619, %v1619
      %v1628 = vpack.c.bf16 %v1620, %v1620
      %v1629 = vpack.c.bf16 %v1621, %v1621
      %v1630 = vpack.c.bf16 %v1622, %v1622
      %v1631 = vpack.c.bf16 %v1623, %v1623
      %v1632 = vpack.c.bf16 %v1624, %v1624
      %s1633 = scalar_lea.vmem %s1, 320
      %v1634 = vld [vmem:[%s1633] sm:$0xf]
      %v1635 = vld [vmem:[%s1633 + $0x4] sm:$0xf]
      %v1636 = vld [vmem:[%s1633 + $0x8] sm:$0xf]
      %v1637 = vld [vmem:[%s1633 + $0xc] sm:$0xf]
      %v1638 = vld [vmem:[%s1633 + $0x10] sm:$0xf]
      %v1639 = vld [vmem:[%s1633 + $0x14] sm:$0xf]
      %v1640 = vld [vmem:[%s1633 + $0x18] sm:$0xf]
      %v1641 = vld [vmem:[%s1633 + $0x1c] sm:$0xf]
      %v1642 = vld [vmem:[%s1633 + $0x20] sm:$0xf]
      %v1643 = vld [vmem:[%s1633 + $0x24] sm:$0xf]
      %v1644 = vld [vmem:[%s1633 + $0x28] sm:$0xf]
      %v1645 = vld [vmem:[%s1633 + $0x2c] sm:$0xf]
      %v1646 = vld [vmem:[%s1633 + $0x30] sm:$0xf]
      %v1647 = vld [vmem:[%s1633 + $0x34] sm:$0xf]
      %v1648 = vld [vmem:[%s1633 + $0x38] sm:$0xf]
      %v1649 = vld [vmem:[%s1633 + $0x3c] sm:$0xf]
      %v1658 = vunpack.c.l.b16 %v1625
      %v1659 = vunpack.c.l.b16 %v1626
      %v1660 = vunpack.c.l.b16 %v1627
      %v1661 = vunpack.c.l.b16 %v1628
      %v1662 = vunpack.c.l.b16 %v1629
      %v1663 = vunpack.c.l.b16 %v1630
      %v1664 = vunpack.c.l.b16 %v1631
      %v1665 = vunpack.c.l.b16 %v1632
      %v1666 = vpack.c.b16 %v1659, %v1658
      %v1667 = vpack.c.b16 %v1661, %v1660
      %v1668 = vpack.c.b16 %v1663, %v1662
      %v1669 = vpack.c.b16 %v1665, %v1664
      %v1690 = vunpack.c.l.b16 %v1634
      %v1691 = vunpack.c.l.b16 %v1635
      %v1692 = vunpack.c.l.b16 %v1636
      %v1693 = vunpack.c.l.b16 %v1637
      %v1694 = vunpack.c.l.b16 %v1638
      %v1695 = vunpack.c.l.b16 %v1639
      %v1696 = vunpack.c.l.b16 %v1640
      %v1697 = vunpack.c.l.b16 %v1641
      %v1698 = vunpack.c.l.b16 %v1642
      %v1699 = vunpack.c.l.b16 %v1643
      %v1700 = vunpack.c.l.b16 %v1644
      %v1701 = vunpack.c.l.b16 %v1645
      %v1702 = vunpack.c.l.b16 %v1646
      %v1703 = vunpack.c.l.b16 %v1647
      %v1704 = vunpack.c.l.b16 %v1648
      %v1705 = vunpack.c.l.b16 %v1649
      %v1706 = vpack.c.b16 %v1691, %v1690
      %v1707 = vpack.c.b16 %v1693, %v1692
      %v1708 = vpack.c.b16 %v1695, %v1694
      %v1709 = vpack.c.b16 %v1697, %v1696
      %v1710 = vpack.c.b16 %v1699, %v1698
      %v1711 = vpack.c.b16 %v1701, %v1700
      %v1712 = vpack.c.b16 %v1703, %v1702
      %v1713 = vpack.c.b16 %v1705, %v1704
      %1722 = vmatprep.subr.bf16.mxu0 0
      %1723 = vmatpush1.bf16.msra.mxu0 %v1713
      %1724 = vmatprep.subr.bf16.mxu0 0
      %1725 = vmatpush1.bf16.msra.mxu0 %v1712
      %1726 = vmatprep.subr.bf16.mxu0 0
      %1727 = vmatpush1.bf16.msra.mxu0 %v1711
      %1728 = vmatprep.subr.bf16.mxu0 0
      %1729 = vmatpush1.bf16.msra.mxu0 %v1710
      %1730 = vmatprep.subr.bf16.mxu0 0
      %1731 = vmatpush1.bf16.msra.mxu0 %v1709
      %1732 = vmatprep.subr.bf16.mxu0 0
      %1733 = vmatpush1.bf16.msra.mxu0 %v1708
      %1734 = vmatprep.subr.bf16.mxu0 0
      %1735 = vmatpush1.bf16.msra.mxu0 %v1707
      %1736 = vmatprep.subr.bf16.mxu0 0
      %1737 = vmatpush1.bf16.msra.mxu0 %v1706
      %1738 = vmatprep.subr.bf16.mxu0 0
      %1739 = vmatpush2.bf16.msra.mxu0 0
      %1740 = vmatprep.subr.bf16.mxu0 0
      %1741 = vmatpush2.bf16.msra.mxu0 0
      %1742 = vmatprep.subr.bf16.mxu0 0
      %1743 = vmatpush2.bf16.msra.mxu0 0
      %1744 = vmatprep.subr.bf16.mxu0 0
      %1745 = vmatpush2.bf16.msra.mxu0 0
      %1746 = vmatprep.subr.bf16.mxu0 0
      %1747 = vmatpush2.bf16.msra.mxu0 0
      %1748 = vmatprep.subr.bf16.mxu0 0
      %1749 = vmatpush2.bf16.msra.mxu0 0
      %1750 = vmatprep.subr.bf16.mxu0 0
      %1751 = vmatpush2.bf16.msra.mxu0 0
      %1752 = vmatprep.subr.bf16.mxu0 0
      %1753 = vmatpush2.bf16.msra.mxu0 0
      %1754 = vmatprep.mubr.bf16.mxu0 0
      %1755 = vmatmul.mubr.bf16.gmra.mxu0 %v1666
      %v1756 = vpop.f32.mrf.mxu0
      %v1757 = vadd.f32 0.0, %v1756
      %v1758 = vpop.f32.mrf.mxu0
      %v1759 = vpop.f32.mrf.mxu0
      %v1760 = vadd.f32 0.0, %v1759
      %v1761 = vpop.f32.mrf.mxu0
      %1762 = vmatprep.mubr.bf16.mxu0 0
      %1763 = vmatmul.mubr.bf16.gmra.mxu0 %v1667
      %v1764 = vpop.f32.mrf.mxu0
      %v1765 = vadd.f32 0.0, %v1764
      %v1766 = vpop.f32.mrf.mxu0
      %v1767 = vpop.f32.mrf.mxu0
      %v1768 = vadd.f32 0.0, %v1767
      %v1769 = vpop.f32.mrf.mxu0
      %1770 = vmatprep.mubr.bf16.mxu0 0
      %1771 = vmatmul.mubr.bf16.gmra.mxu0 %v1668
      %v1772 = vpop.f32.mrf.mxu0
      %v1773 = vadd.f32 0.0, %v1772
      %v1774 = vpop.f32.mrf.mxu0
      %v1775 = vpop.f32.mrf.mxu0
      %v1776 = vadd.f32 0.0, %v1775
      %v1777 = vpop.f32.mrf.mxu0
      %1778 = vmatprep.mubr.bf16.mxu0 0
      %1779 = vmatmul.mubr.bf16.gmra.mxu0 %v1669
      %v1780 = vpop.f32.mrf.mxu0
      %v1781 = vadd.f32 0.0, %v1780
      %v1782 = vpop.f32.mrf.mxu0
      %v1783 = vpop.f32.mrf.mxu0
      %v1784 = vadd.f32 0.0, %v1783
      %v1785 = vpop.f32.mrf.mxu0
      %1786 = vdwg.mxu0
      %v1787 = vadd.f32 %v1529, %v1757
      %v1788 = vadd.f32 %v1530, %v1760
      %v1789 = vadd.f32 %v1531, %v1765
      %v1790 = vadd.f32 %v1532, %v1768
      %v1791 = vadd.f32 %v1533, %v1773
      %v1792 = vadd.f32 %v1534, %v1776
      %v1793 = vadd.f32 %v1535, %v1781
      %v1794 = vadd.f32 %v1536, %v1784
      %s1795 = scalar_lea.vmem %s226, 16
      %v1796 = vld [vmem:[%s1795] sm:$0xf]
      %v1797 = vld [vmem:[%s1795 + $0x8] sm:$0xf]
      %v1798 = vld [vmem:[%s1795 + $0x10] sm:$0xf]
      %v1799 = vld [vmem:[%s1795 + $0x18] sm:$0xf]
      %v1800 = vld [vmem:[%s1795 + $0x20] sm:$0xf]
      %v1801 = vld [vmem:[%s1795 + $0x28] sm:$0xf]
      %v1802 = vld [vmem:[%s1795 + $0x30] sm:$0xf]
      %v1803 = vld [vmem:[%s1795 + $0x38] sm:$0xf]
      %v1804 = vunpack.c.l.bf16 %v1796
      %v1805 = vunpack.c.l.bf16 %v1797
      %v1806 = vunpack.c.l.bf16 %v1798
      %v1807 = vunpack.c.l.bf16 %v1799
      %v1808 = vunpack.c.l.bf16 %v1800
      %v1809 = vunpack.c.l.bf16 %v1801
      %v1810 = vunpack.c.l.bf16 %v1802
      %v1811 = vunpack.c.l.bf16 %v1803
      %v1812 = vmul.f32 %v1804, %v261
      %v1813 = vmul.f32 %v1805, %v261
      %v1814 = vmul.f32 %v1806, %v261
      %v1815 = vmul.f32 %v1807, %v261
      %v1816 = vmul.f32 %v1808, %v261
      %v1817 = vmul.f32 %v1809, %v261
      %v1818 = vmul.f32 %v1810, %v261
      %v1819 = vmul.f32 %v1811, %v261
      %v1820 = vadd.f32 %v1812, %v275
      %v1821 = vadd.f32 %v1813, %v275
      %v1822 = vadd.f32 %v1814, %v275
      %v1823 = vadd.f32 %v1815, %v275
      %v1824 = vadd.f32 %v1816, %v275
      %v1825 = vadd.f32 %v1817, %v275
      %v1826 = vadd.f32 %v1818, %v275
      %v1827 = vadd.f32 %v1819, %v275
      %v1828 = vmax.f32 %v1820, 0.0
      %v1829 = vmax.f32 %v1821, 0.0
      %v1830 = vmax.f32 %v1822, 0.0
      %v1831 = vmax.f32 %v1823, 0.0
      %v1832 = vmax.f32 %v1824, 0.0
      %v1833 = vmax.f32 %v1825, 0.0
      %v1834 = vmax.f32 %v1826, 0.0
      %v1835 = vmax.f32 %v1827, 0.0
      %v1836 = vsel %vm302, %v1828, 0.0
      %v1837 = vsel %vm302, %v1829, 0.0
      %v1838 = vsel %vm302, %v1830, 0.0
      %v1839 = vsel %vm302, %v1831, 0.0
      %v1840 = vsel %vm302, %v1832, 0.0
      %v1841 = vsel %vm302, %v1833, 0.0
      %v1842 = vsel %vm302, %v1834, 0.0
      %v1843 = vsel %vm301, %v1835, 0.0
      %v1844 = vpack.c.bf16 %v1836, %v1836
      %v1845 = vpack.c.bf16 %v1837, %v1837
      %v1846 = vpack.c.bf16 %v1838, %v1838
      %v1847 = vpack.c.bf16 %v1839, %v1839
      %v1848 = vpack.c.bf16 %v1840, %v1840
      %v1849 = vpack.c.bf16 %v1841, %v1841
      %v1850 = vpack.c.bf16 %v1842, %v1842
      %v1851 = vpack.c.bf16 %v1843, %v1843
      %s1852 = scalar_lea.vmem %s1, 384
      %v1853 = vld [vmem:[%s1852] sm:$0xf]
      %v1854 = vld [vmem:[%s1852 + $0x4] sm:$0xf]
      %v1855 = vld [vmem:[%s1852 + $0x8] sm:$0xf]
      %v1856 = vld [vmem:[%s1852 + $0xc] sm:$0xf]
      %v1857 = vld [vmem:[%s1852 + $0x10] sm:$0xf]
      %v1858 = vld [vmem:[%s1852 + $0x14] sm:$0xf]
      %v1859 = vld [vmem:[%s1852 + $0x18] sm:$0xf]
      %v1860 = vld [vmem:[%s1852 + $0x1c] sm:$0xf]
      %v1861 = vld [vmem:[%s1852 + $0x20] sm:$0xf]
      %v1862 = vld [vmem:[%s1852 + $0x24] sm:$0xf]
      %v1863 = vld [vmem:[%s1852 + $0x28] sm:$0xf]
      %v1864 = vld [vmem:[%s1852 + $0x2c] sm:$0xf]
      %v1865 = vld [vmem:[%s1852 + $0x30] sm:$0xf]
      %v1866 = vld [vmem:[%s1852 + $0x34] sm:$0xf]
      %v1867 = vld [vmem:[%s1852 + $0x38] sm:$0xf]
      %v1868 = vld [vmem:[%s1852 + $0x3c] sm:$0xf]
      %v1877 = vunpack.c.l.b16 %v1844
      %v1878 = vunpack.c.l.b16 %v1845
      %v1879 = vunpack.c.l.b16 %v1846
      %v1880 = vunpack.c.l.b16 %v1847
      %v1881 = vunpack.c.l.b16 %v1848
      %v1882 = vunpack.c.l.b16 %v1849
      %v1883 = vunpack.c.l.b16 %v1850
      %v1884 = vunpack.c.l.b16 %v1851
      %v1885 = vpack.c.b16 %v1878, %v1877
      %v1886 = vpack.c.b16 %v1880, %v1879
      %v1887 = vpack.c.b16 %v1882, %v1881
      %v1888 = vpack.c.b16 %v1884, %v1883
      %v1909 = vunpack.c.l.b16 %v1853
      %v1910 = vunpack.c.l.b16 %v1854
      %v1911 = vunpack.c.l.b16 %v1855
      %v1912 = vunpack.c.l.b16 %v1856
      %v1913 = vunpack.c.l.b16 %v1857
      %v1914 = vunpack.c.l.b16 %v1858
      %v1915 = vunpack.c.l.b16 %v1859
      %v1916 = vunpack.c.l.b16 %v1860
      %v1917 = vunpack.c.l.b16 %v1861
      %v1918 = vunpack.c.l.b16 %v1862
      %v1919 = vunpack.c.l.b16 %v1863
      %v1920 = vunpack.c.l.b16 %v1864
      %v1921 = vunpack.c.l.b16 %v1865
      %v1922 = vunpack.c.l.b16 %v1866
      %v1923 = vunpack.c.l.b16 %v1867
      %v1924 = vunpack.c.l.b16 %v1868
      %v1925 = vpack.c.b16 %v1910, %v1909
      %v1926 = vpack.c.b16 %v1912, %v1911
      %v1927 = vpack.c.b16 %v1914, %v1913
      %v1928 = vpack.c.b16 %v1916, %v1915
      %v1929 = vpack.c.b16 %v1918, %v1917
      %v1930 = vpack.c.b16 %v1920, %v1919
      %v1931 = vpack.c.b16 %v1922, %v1921
      %v1932 = vpack.c.b16 %v1924, %v1923
      %1941 = vmatprep.subr.bf16.mxu0 0
      %1942 = vmatpush1.bf16.msra.mxu0 %v1932
      %1943 = vmatprep.subr.bf16.mxu0 0
      %1944 = vmatpush1.bf16.msra.mxu0 %v1931
      %1945 = vmatprep.subr.bf16.mxu0 0
      %1946 = vmatpush1.bf16.msra.mxu0 %v1930
      %1947 = vmatprep.subr.bf16.mxu0 0
      %1948 = vmatpush1.bf16.msra.mxu0 %v1929
      %1949 = vmatprep.subr.bf16.mxu0 0
      %1950 = vmatpush1.bf16.msra.mxu0 %v1928
      %1951 = vmatprep.subr.bf16.mxu0 0
      %1952 = vmatpush1.bf16.msra.mxu0 %v1927
      %1953 = vmatprep.subr.bf16.mxu0 0
      %1954 = vmatpush1.bf16.msra.mxu0 %v1926
      %1955 = vmatprep.subr.bf16.mxu0 0
      %1956 = vmatpush1.bf16.msra.mxu0 %v1925
      %1957 = vmatprep.subr.bf16.mxu0 0
      %1958 = vmatpush2.bf16.msra.mxu0 0
      %1959 = vmatprep.subr.bf16.mxu0 0
      %1960 = vmatpush2.bf16.msra.mxu0 0
      %1961 = vmatprep.subr.bf16.mxu0 0
      %1962 = vmatpush2.bf16.msra.mxu0 0
      %1963 = vmatprep.subr.bf16.mxu0 0
      %1964 = vmatpush2.bf16.msra.mxu0 0
      %1965 = vmatprep.subr.bf16.mxu0 0
      %1966 = vmatpush2.bf16.msra.mxu0 0
      %1967 = vmatprep.subr.bf16.mxu0 0
      %1968 = vmatpush2.bf16.msra.mxu0 0
      %1969 = vmatprep.subr.bf16.mxu0 0
      %1970 = vmatpush2.bf16.msra.mxu0 0
      %1971 = vmatprep.subr.bf16.mxu0 0
      %1972 = vmatpush2.bf16.msra.mxu0 0
      %1973 = vmatprep.mubr.bf16.mxu0 0
      %1974 = vmatmul.mubr.bf16.gmra.mxu0 %v1885
      %v1975 = vpop.f32.mrf.mxu0
      %v1976 = vadd.f32 0.0, %v1975
      %v1977 = vpop.f32.mrf.mxu0
      %v1978 = vpop.f32.mrf.mxu0
      %v1979 = vadd.f32 0.0, %v1978
      %v1980 = vpop.f32.mrf.mxu0
      %1981 = vmatprep.mubr.bf16.mxu0 0
      %1982 = vmatmul.mubr.bf16.gmra.mxu0 %v1886
      %v1983 = vpop.f32.mrf.mxu0
      %v1984 = vadd.f32 0.0, %v1983
      %v1985 = vpop.f32.mrf.mxu0
      %v1986 = vpop.f32.mrf.mxu0
      %v1987 = vadd.f32 0.0, %v1986
      %v1988 = vpop.f32.mrf.mxu0
      %1989 = vmatprep.mubr.bf16.mxu0 0
      %1990 = vmatmul.mubr.bf16.gmra.mxu0 %v1887
      %v1991 = vpop.f32.mrf.mxu0
      %v1992 = vadd.f32 0.0, %v1991
      %v1993 = vpop.f32.mrf.mxu0
      %v1994 = vpop.f32.mrf.mxu0
      %v1995 = vadd.f32 0.0, %v1994
      %v1996 = vpop.f32.mrf.mxu0
      %1997 = vmatprep.mubr.bf16.mxu0 0
      %1998 = vmatmul.mubr.bf16.gmra.mxu0 %v1888
      %v1999 = vpop.f32.mrf.mxu0
      %v2000 = vadd.f32 0.0, %v1999
      %v2001 = vpop.f32.mrf.mxu0
      %v2002 = vpop.f32.mrf.mxu0
      %v2003 = vadd.f32 0.0, %v2002
      %v2004 = vpop.f32.mrf.mxu0
      %2005 = vdwg.mxu0
      %v2006 = vadd.f32 %v1787, %v1976
      %v2007 = vadd.f32 %v1788, %v1979
      %v2008 = vadd.f32 %v1789, %v1984
      %v2009 = vadd.f32 %v1790, %v1987
      %v2010 = vadd.f32 %v1791, %v1992
      %v2011 = vadd.f32 %v1792, %v1995
      %v2012 = vadd.f32 %v1793, %v2000
      %v2013 = vadd.f32 %v1794, %v2003
      %v2014 = vld [vmem:[%s1795] sm:$0xf]
      %v2015 = vld [vmem:[%s1795 + $0x4] sm:$0x1]
      %v2016 = vld [vmem:[%s1795 + $0x8] sm:$0xf]
      %v2017 = vld [vmem:[%s1795 + $0xc] sm:$0x1]
      %v2018 = vld [vmem:[%s1795 + $0x10] sm:$0xf]
      %v2019 = vld [vmem:[%s1795 + $0x14] sm:$0x1]
      %v2020 = vld [vmem:[%s1795 + $0x18] sm:$0xf]
      %v2021 = vld [vmem:[%s1795 + $0x1c] sm:$0x1]
      %v2022 = vld [vmem:[%s1795 + $0x20] sm:$0xf]
      %v2023 = vld [vmem:[%s1795 + $0x24] sm:$0x1]
      %v2024 = vld [vmem:[%s1795 + $0x28] sm:$0xf]
      %v2025 = vld [vmem:[%s1795 + $0x2c] sm:$0x1]
      %v2026 = vld [vmem:[%s1795 + $0x30] sm:$0xf]
      %v2027 = vld [vmem:[%s1795 + $0x34] sm:$0x1]
      %v2028 = vld [vmem:[%s1795 + $0x38] sm:$0xf]
      %v2029 = vld [vmem:[%s1795 + $0x3c] sm:$0x1]
      %v2030 = vunpack.c.l.bf16 %v2014
      %v2031 = vunpack.c.l.bf16 %v2015
      %v2032 = vunpack.c.l.bf16 %v2016
      %v2033 = vunpack.c.l.bf16 %v2017
      %v2034 = vunpack.c.l.bf16 %v2018
      %v2035 = vunpack.c.l.bf16 %v2019
      %v2036 = vunpack.c.l.bf16 %v2020
      %v2037 = vunpack.c.l.bf16 %v2021
      %v2038 = vunpack.c.l.bf16 %v2022
      %v2039 = vunpack.c.l.bf16 %v2023
      %v2040 = vunpack.c.l.bf16 %v2024
      %v2041 = vunpack.c.l.bf16 %v2025
      %v2042 = vunpack.c.l.bf16 %v2026
      %v2043 = vunpack.c.l.bf16 %v2027
      %v2044 = vunpack.c.l.bf16 %v2028
      %v2045 = vunpack.c.l.bf16 %v2029
      %v2046 = vmul.f32 %v2030, %v261
      %v2047 = vmul.f32 %v2031, %v261
      %v2048 = vmul.f32 %v2032, %v261
      %v2049 = vmul.f32 %v2033, %v261
      %v2050 = vmul.f32 %v2034, %v261
      %v2051 = vmul.f32 %v2035, %v261
      %v2052 = vmul.f32 %v2036, %v261
      %v2053 = vmul.f32 %v2037, %v261
      %v2054 = vmul.f32 %v2038, %v261
      %v2055 = vmul.f32 %v2039, %v261
      %v2056 = vmul.f32 %v2040, %v261
      %v2057 = vmul.f32 %v2041, %v261
      %v2058 = vmul.f32 %v2042, %v261
      %v2059 = vmul.f32 %v2043, %v261
      %v2060 = vmul.f32 %v2044, %v261
      %v2061 = vmul.f32 %v2045, %v261
      %v2062 = vadd.f32 %v2046, %v275
      %v2063 = vadd.f32 %v2047, %v275
      %v2064 = vadd.f32 %v2048, %v275
      %v2065 = vadd.f32 %v2049, %v275
      %v2066 = vadd.f32 %v2050, %v275
      %v2067 = vadd.f32 %v2051, %v275
      %v2068 = vadd.f32 %v2052, %v275
      %v2069 = vadd.f32 %v2053, %v275
      %v2070 = vadd.f32 %v2054, %v275
      %v2071 = vadd.f32 %v2055, %v275
      %v2072 = vadd.f32 %v2056, %v275
      %v2073 = vadd.f32 %v2057, %v275
      %v2074 = vadd.f32 %v2058, %v275
      %v2075 = vadd.f32 %v2059, %v275
      %v2076 = vadd.f32 %v2060, %v275
      %v2077 = vadd.f32 %v2061, %v275
      %v2078 = vmax.f32 %v2062, 0.0
      %v2079 = vmax.f32 %v2063, 0.0
      %v2080 = vmax.f32 %v2064, 0.0
      %v2081 = vmax.f32 %v2065, 0.0
      %v2082 = vmax.f32 %v2066, 0.0
      %v2083 = vmax.f32 %v2067, 0.0
      %v2084 = vmax.f32 %v2068, 0.0
      %v2085 = vmax.f32 %v2069, 0.0
      %v2086 = vmax.f32 %v2070, 0.0
      %v2087 = vmax.f32 %v2071, 0.0
      %v2088 = vmax.f32 %v2072, 0.0
      %v2089 = vmax.f32 %v2073, 0.0
      %v2090 = vmax.f32 %v2074, 0.0
      %v2091 = vmax.f32 %v2075, 0.0
      %v2092 = vmax.f32 %v2076, 0.0
      %v2093 = vmax.f32 %v2077, 0.0
      %v2110 = vrot.slane %v2078, 1
      %v2111 = vrot.slane %v2079, 1
      %v2112 = vsel %vm402, %v2110, %v2111
      %v2113 = vrot.slane %v2080, 1
      %v2114 = vrot.slane %v2081, 1
      %v2115 = vsel %vm402, %v2113, %v2114
      %v2116 = vrot.slane %v2082, 1
      %v2117 = vrot.slane %v2083, 1
      %v2118 = vsel %vm402, %v2116, %v2117
      %v2119 = vrot.slane %v2084, 1
      %v2120 = vrot.slane %v2085, 1
      %v2121 = vsel %vm402, %v2119, %v2120
      %v2122 = vrot.slane %v2086, 1
      %v2123 = vrot.slane %v2087, 1
      %v2124 = vsel %vm402, %v2122, %v2123
      %v2125 = vrot.slane %v2088, 1
      %v2126 = vrot.slane %v2089, 1
      %v2127 = vsel %vm402, %v2125, %v2126
      %v2128 = vrot.slane %v2090, 1
      %v2129 = vrot.slane %v2091, 1
      %v2130 = vsel %vm402, %v2128, %v2129
      %v2131 = vrot.slane %v2092, 1
      %v2132 = vrot.slane %v2093, 1
      %v2133 = vsel %vm402, %v2131, %v2132
      %v2142 = vsel %vm385, %v2112, 0.0
      %v2143 = vsel %vm385, %v2115, 0.0
      %v2144 = vsel %vm385, %v2118, 0.0
      %v2145 = vsel %vm385, %v2121, 0.0
      %v2146 = vsel %vm385, %v2124, 0.0
      %v2147 = vsel %vm385, %v2127, 0.0
      %v2148 = vsel %vm385, %v2130, 0.0
      %v2149 = vsel %vm384, %v2133, 0.0
      %v2150 = vpack.c.bf16 %v2142, %v2142
      %v2151 = vpack.c.bf16 %v2143, %v2143
      %v2152 = vpack.c.bf16 %v2144, %v2144
      %v2153 = vpack.c.bf16 %v2145, %v2145
      %v2154 = vpack.c.bf16 %v2146, %v2146
      %v2155 = vpack.c.bf16 %v2147, %v2147
      %v2156 = vpack.c.bf16 %v2148, %v2148
      %v2157 = vpack.c.bf16 %v2149, %v2149
      %s2158 = scalar_lea.vmem %s1, 448
      %v2159 = vld [vmem:[%s2158] sm:$0xf]
      %v2160 = vld [vmem:[%s2158 + $0x4] sm:$0xf]
      %v2161 = vld [vmem:[%s2158 + $0x8] sm:$0xf]
      %v2162 = vld [vmem:[%s2158 + $0xc] sm:$0xf]
      %v2163 = vld [vmem:[%s2158 + $0x10] sm:$0xf]
      %v2164 = vld [vmem:[%s2158 + $0x14] sm:$0xf]
      %v2165 = vld [vmem:[%s2158 + $0x18] sm:$0xf]
      %v2166 = vld [vmem:[%s2158 + $0x1c] sm:$0xf]
      %v2167 = vld [vmem:[%s2158 + $0x20] sm:$0xf]
      %v2168 = vld [vmem:[%s2158 + $0x24] sm:$0xf]
      %v2169 = vld [vmem:[%s2158 + $0x28] sm:$0xf]
      %v2170 = vld [vmem:[%s2158 + $0x2c] sm:$0xf]
      %v2171 = vld [vmem:[%s2158 + $0x30] sm:$0xf]
      %v2172 = vld [vmem:[%s2158 + $0x34] sm:$0xf]
      %v2173 = vld [vmem:[%s2158 + $0x38] sm:$0xf]
      %v2174 = vld [vmem:[%s2158 + $0x3c] sm:$0xf]
      %v2183 = vunpack.c.l.b16 %v2150
      %v2184 = vunpack.c.l.b16 %v2151
      %v2185 = vunpack.c.l.b16 %v2152
      %v2186 = vunpack.c.l.b16 %v2153
      %v2187 = vunpack.c.l.b16 %v2154
      %v2188 = vunpack.c.l.b16 %v2155
      %v2189 = vunpack.c.l.b16 %v2156
      %v2190 = vunpack.c.l.b16 %v2157
      %v2191 = vpack.c.b16 %v2184, %v2183
      %v2192 = vpack.c.b16 %v2186, %v2185
      %v2193 = vpack.c.b16 %v2188, %v2187
      %v2194 = vpack.c.b16 %v2190, %v2189
      %v2215 = vunpack.c.l.b16 %v2159
      %v2216 = vunpack.c.l.b16 %v2160
      %v2217 = vunpack.c.l.b16 %v2161
      %v2218 = vunpack.c.l.b16 %v2162
      %v2219 = vunpack.c.l.b16 %v2163
      %v2220 = vunpack.c.l.b16 %v2164
      %v2221 = vunpack.c.l.b16 %v2165
      %v2222 = vunpack.c.l.b16 %v2166
      %v2223 = vunpack.c.l.b16 %v2167
      %v2224 = vunpack.c.l.b16 %v2168
      %v2225 = vunpack.c.l.b16 %v2169
      %v2226 = vunpack.c.l.b16 %v2170
      %v2227 = vunpack.c.l.b16 %v2171
      %v2228 = vunpack.c.l.b16 %v2172
      %v2229 = vunpack.c.l.b16 %v2173
      %v2230 = vunpack.c.l.b16 %v2174
      %v2231 = vpack.c.b16 %v2216, %v2215
      %v2232 = vpack.c.b16 %v2218, %v2217
      %v2233 = vpack.c.b16 %v2220, %v2219
      %v2234 = vpack.c.b16 %v2222, %v2221
      %v2235 = vpack.c.b16 %v2224, %v2223
      %v2236 = vpack.c.b16 %v2226, %v2225
      %v2237 = vpack.c.b16 %v2228, %v2227
      %v2238 = vpack.c.b16 %v2230, %v2229
      %2247 = vmatprep.subr.bf16.mxu0 0
      %2248 = vmatpush1.bf16.msra.mxu0 %v2238
      %2249 = vmatprep.subr.bf16.mxu0 0
      %2250 = vmatpush1.bf16.msra.mxu0 %v2237
      %2251 = vmatprep.subr.bf16.mxu0 0
      %2252 = vmatpush1.bf16.msra.mxu0 %v2236
      %2253 = vmatprep.subr.bf16.mxu0 0
      %2254 = vmatpush1.bf16.msra.mxu0 %v2235
      %2255 = vmatprep.subr.bf16.mxu0 0
      %2256 = vmatpush1.bf16.msra.mxu0 %v2234
      %2257 = vmatprep.subr.bf16.mxu0 0
      %2258 = vmatpush1.bf16.msra.mxu0 %v2233
      %2259 = vmatprep.subr.bf16.mxu0 0
      %2260 = vmatpush1.bf16.msra.mxu0 %v2232
      %2261 = vmatprep.subr.bf16.mxu0 0
      %2262 = vmatpush1.bf16.msra.mxu0 %v2231
      %2263 = vmatprep.subr.bf16.mxu0 0
      %2264 = vmatpush2.bf16.msra.mxu0 0
      %2265 = vmatprep.subr.bf16.mxu0 0
      %2266 = vmatpush2.bf16.msra.mxu0 0
      %2267 = vmatprep.subr.bf16.mxu0 0
      %2268 = vmatpush2.bf16.msra.mxu0 0
      %2269 = vmatprep.subr.bf16.mxu0 0
      %2270 = vmatpush2.bf16.msra.mxu0 0
      %2271 = vmatprep.subr.bf16.mxu0 0
      %2272 = vmatpush2.bf16.msra.mxu0 0
      %2273 = vmatprep.subr.bf16.mxu0 0
      %2274 = vmatpush2.bf16.msra.mxu0 0
      %2275 = vmatprep.subr.bf16.mxu0 0
      %2276 = vmatpush2.bf16.msra.mxu0 0
      %2277 = vmatprep.subr.bf16.mxu0 0
      %2278 = vmatpush2.bf16.msra.mxu0 0
      %2279 = vmatprep.mubr.bf16.mxu0 0
      %2280 = vmatmul.mubr.bf16.gmra.mxu0 %v2191
      %v2281 = vpop.f32.mrf.mxu0
      %v2282 = vadd.f32 0.0, %v2281
      %v2283 = vpop.f32.mrf.mxu0
      %v2284 = vpop.f32.mrf.mxu0
      %v2285 = vadd.f32 0.0, %v2284
      %v2286 = vpop.f32.mrf.mxu0
      %2287 = vmatprep.mubr.bf16.mxu0 0
      %2288 = vmatmul.mubr.bf16.gmra.mxu0 %v2192
      %v2289 = vpop.f32.mrf.mxu0
      %v2290 = vadd.f32 0.0, %v2289
      %v2291 = vpop.f32.mrf.mxu0
      %v2292 = vpop.f32.mrf.mxu0
      %v2293 = vadd.f32 0.0, %v2292
      %v2294 = vpop.f32.mrf.mxu0
      %2295 = vmatprep.mubr.bf16.mxu0 0
      %2296 = vmatmul.mubr.bf16.gmra.mxu0 %v2193
      %v2297 = vpop.f32.mrf.mxu0
      %v2298 = vadd.f32 0.0, %v2297
      %v2299 = vpop.f32.mrf.mxu0
      %v2300 = vpop.f32.mrf.mxu0
      %v2301 = vadd.f32 0.0, %v2300
      %v2302 = vpop.f32.mrf.mxu0
      %2303 = vmatprep.mubr.bf16.mxu0 0
      %2304 = vmatmul.mubr.bf16.gmra.mxu0 %v2194
      %v2305 = vpop.f32.mrf.mxu0
      %v2306 = vadd.f32 0.0, %v2305
      %v2307 = vpop.f32.mrf.mxu0
      %v2308 = vpop.f32.mrf.mxu0
      %v2309 = vadd.f32 0.0, %v2308
      %v2310 = vpop.f32.mrf.mxu0
      %2311 = vdwg.mxu0
      %v2312 = vadd.f32 %v2006, %v2282
      %v2313 = vadd.f32 %v2007, %v2285
      %v2314 = vadd.f32 %v2008, %v2290
      %v2315 = vadd.f32 %v2009, %v2293
      %v2316 = vadd.f32 %v2010, %v2298
      %v2317 = vadd.f32 %v2011, %v2301
      %v2318 = vadd.f32 %v2012, %v2306
      %v2319 = vadd.f32 %v2013, %v2309
      %v2320 = vld [vmem:[%s1795] sm:$0xe]
      %v2321 = vld [vmem:[%s1795 + $0x8] sm:$0xe]
      %v2322 = vld [vmem:[%s1795 + $0x10] sm:$0xe]
      %v2323 = vld [vmem:[%s1795 + $0x18] sm:$0xe]
      %v2324 = vld [vmem:[%s1795 + $0x20] sm:$0xe]
      %v2325 = vld [vmem:[%s1795 + $0x28] sm:$0xe]
      %v2326 = vld [vmem:[%s1795 + $0x30] sm:$0xe]
      %v2327 = vld [vmem:[%s1795 + $0x38] sm:$0xe]
      %v2328 = vunpack.c.l.bf16 %v2320
      %v2329 = vunpack.c.l.bf16 %v2321
      %v2330 = vunpack.c.l.bf16 %v2322
      %v2331 = vunpack.c.l.bf16 %v2323
      %v2332 = vunpack.c.l.bf16 %v2324
      %v2333 = vunpack.c.l.bf16 %v2325
      %v2334 = vunpack.c.l.bf16 %v2326
      %v2335 = vunpack.c.l.bf16 %v2327
      %v2336 = vmul.f32 %v2328, %v261
      %v2337 = vmul.f32 %v2329, %v261
      %v2338 = vmul.f32 %v2330, %v261
      %v2339 = vmul.f32 %v2331, %v261
      %v2340 = vmul.f32 %v2332, %v261
      %v2341 = vmul.f32 %v2333, %v261
      %v2342 = vmul.f32 %v2334, %v261
      %v2343 = vmul.f32 %v2335, %v261
      %v2344 = vadd.f32 %v2336, %v275
      %v2345 = vadd.f32 %v2337, %v275
      %v2346 = vadd.f32 %v2338, %v275
      %v2347 = vadd.f32 %v2339, %v275
      %v2348 = vadd.f32 %v2340, %v275
      %v2349 = vadd.f32 %v2341, %v275
      %v2350 = vadd.f32 %v2342, %v275
      %v2351 = vadd.f32 %v2343, %v275
      %v2352 = vmax.f32 %v2344, 0.0
      %v2353 = vmax.f32 %v2345, 0.0
      %v2354 = vmax.f32 %v2346, 0.0
      %v2355 = vmax.f32 %v2347, 0.0
      %v2356 = vmax.f32 %v2348, 0.0
      %v2357 = vmax.f32 %v2349, 0.0
      %v2358 = vmax.f32 %v2350, 0.0
      %v2359 = vmax.f32 %v2351, 0.0
      %v2368 = vrot.slane %v2352, 2
      %v2369 = vrot.slane %v2079, 2
      %v2370 = vsel %vm801, %v2368, %v2369
      %v2371 = vrot.slane %v2353, 2
      %v2372 = vrot.slane %v2081, 2
      %v2373 = vsel %vm801, %v2371, %v2372
      %v2374 = vrot.slane %v2354, 2
      %v2375 = vrot.slane %v2083, 2
      %v2376 = vsel %vm801, %v2374, %v2375
      %v2377 = vrot.slane %v2355, 2
      %v2378 = vrot.slane %v2085, 2
      %v2379 = vsel %vm801, %v2377, %v2378
      %v2380 = vrot.slane %v2356, 2
      %v2381 = vrot.slane %v2087, 2
      %v2382 = vsel %vm801, %v2380, %v2381
      %v2383 = vrot.slane %v2357, 2
      %v2384 = vrot.slane %v2089, 2
      %v2385 = vsel %vm801, %v2383, %v2384
      %v2386 = vrot.slane %v2358, 2
      %v2387 = vrot.slane %v2091, 2
      %v2388 = vsel %vm801, %v2386, %v2387
      %v2389 = vrot.slane %v2359, 2
      %v2390 = vrot.slane %v2093, 2
      %v2391 = vsel %vm801, %v2389, %v2390
      %v2400 = vsel %vm792, %v2370, 0.0
      %v2401 = vsel %vm792, %v2373, 0.0
      %v2402 = vsel %vm792, %v2376, 0.0
      %v2403 = vsel %vm792, %v2379, 0.0
      %v2404 = vsel %vm792, %v2382, 0.0
      %v2405 = vsel %vm792, %v2385, 0.0
      %v2406 = vsel %vm792, %v2388, 0.0
      %v2407 = vsel %vm791, %v2391, 0.0
      %v2408 = vpack.c.bf16 %v2400, %v2400
      %v2409 = vpack.c.bf16 %v2401, %v2401
      %v2410 = vpack.c.bf16 %v2402, %v2402
      %v2411 = vpack.c.bf16 %v2403, %v2403
      %v2412 = vpack.c.bf16 %v2404, %v2404
      %v2413 = vpack.c.bf16 %v2405, %v2405
      %v2414 = vpack.c.bf16 %v2406, %v2406
      %v2415 = vpack.c.bf16 %v2407, %v2407
      %s2416 = scalar_lea.vmem %s1, 512
      %v2417 = vld [vmem:[%s2416] sm:$0xf]
      %v2418 = vld [vmem:[%s2416 + $0x4] sm:$0xf]
      %v2419 = vld [vmem:[%s2416 + $0x8] sm:$0xf]
      %v2420 = vld [vmem:[%s2416 + $0xc] sm:$0xf]
      %v2421 = vld [vmem:[%s2416 + $0x10] sm:$0xf]
      %v2422 = vld [vmem:[%s2416 + $0x14] sm:$0xf]
      %v2423 = vld [vmem:[%s2416 + $0x18] sm:$0xf]
      %v2424 = vld [vmem:[%s2416 + $0x1c] sm:$0xf]
      %v2425 = vld [vmem:[%s2416 + $0x20] sm:$0xf]
      %v2426 = vld [vmem:[%s2416 + $0x24] sm:$0xf]
      %v2427 = vld [vmem:[%s2416 + $0x28] sm:$0xf]
      %v2428 = vld [vmem:[%s2416 + $0x2c] sm:$0xf]
      %v2429 = vld [vmem:[%s2416 + $0x30] sm:$0xf]
      %v2430 = vld [vmem:[%s2416 + $0x34] sm:$0xf]
      %v2431 = vld [vmem:[%s2416 + $0x38] sm:$0xf]
      %v2432 = vld [vmem:[%s2416 + $0x3c] sm:$0xf]
      %v2441 = vunpack.c.l.b16 %v2408
      %v2442 = vunpack.c.l.b16 %v2409
      %v2443 = vunpack.c.l.b16 %v2410
      %v2444 = vunpack.c.l.b16 %v2411
      %v2445 = vunpack.c.l.b16 %v2412
      %v2446 = vunpack.c.l.b16 %v2413
      %v2447 = vunpack.c.l.b16 %v2414
      %v2448 = vunpack.c.l.b16 %v2415
      %v2449 = vpack.c.b16 %v2442, %v2441
      %v2450 = vpack.c.b16 %v2444, %v2443
      %v2451 = vpack.c.b16 %v2446, %v2445
      %v2452 = vpack.c.b16 %v2448, %v2447
      %v2473 = vunpack.c.l.b16 %v2417
      %v2474 = vunpack.c.l.b16 %v2418
      %v2475 = vunpack.c.l.b16 %v2419
      %v2476 = vunpack.c.l.b16 %v2420
      %v2477 = vunpack.c.l.b16 %v2421
      %v2478 = vunpack.c.l.b16 %v2422
      %v2479 = vunpack.c.l.b16 %v2423
      %v2480 = vunpack.c.l.b16 %v2424
      %v2481 = vunpack.c.l.b16 %v2425
      %v2482 = vunpack.c.l.b16 %v2426
      %v2483 = vunpack.c.l.b16 %v2427
      %v2484 = vunpack.c.l.b16 %v2428
      %v2485 = vunpack.c.l.b16 %v2429
      %v2486 = vunpack.c.l.b16 %v2430
      %v2487 = vunpack.c.l.b16 %v2431
      %v2488 = vunpack.c.l.b16 %v2432
      %v2489 = vpack.c.b16 %v2474, %v2473
      %v2490 = vpack.c.b16 %v2476, %v2475
      %v2491 = vpack.c.b16 %v2478, %v2477
      %v2492 = vpack.c.b16 %v2480, %v2479
      %v2493 = vpack.c.b16 %v2482, %v2481
      %v2494 = vpack.c.b16 %v2484, %v2483
      %v2495 = vpack.c.b16 %v2486, %v2485
      %v2496 = vpack.c.b16 %v2488, %v2487
      %2505 = vmatprep.subr.bf16.mxu0 0
      %2506 = vmatpush1.bf16.msra.mxu0 %v2496
      %2507 = vmatprep.subr.bf16.mxu0 0
      %2508 = vmatpush1.bf16.msra.mxu0 %v2495
      %2509 = vmatprep.subr.bf16.mxu0 0
      %2510 = vmatpush1.bf16.msra.mxu0 %v2494
      %2511 = vmatprep.subr.bf16.mxu0 0
      %2512 = vmatpush1.bf16.msra.mxu0 %v2493
      %2513 = vmatprep.subr.bf16.mxu0 0
      %2514 = vmatpush1.bf16.msra.mxu0 %v2492
      %2515 = vmatprep.subr.bf16.mxu0 0
      %2516 = vmatpush1.bf16.msra.mxu0 %v2491
      %2517 = vmatprep.subr.bf16.mxu0 0
      %2518 = vmatpush1.bf16.msra.mxu0 %v2490
      %2519 = vmatprep.subr.bf16.mxu0 0
      %2520 = vmatpush1.bf16.msra.mxu0 %v2489
      %2521 = vmatprep.subr.bf16.mxu0 0
      %2522 = vmatpush2.bf16.msra.mxu0 0
      %2523 = vmatprep.subr.bf16.mxu0 0
      %2524 = vmatpush2.bf16.msra.mxu0 0
      %2525 = vmatprep.subr.bf16.mxu0 0
      %2526 = vmatpush2.bf16.msra.mxu0 0
      %2527 = vmatprep.subr.bf16.mxu0 0
      %2528 = vmatpush2.bf16.msra.mxu0 0
      %2529 = vmatprep.subr.bf16.mxu0 0
      %2530 = vmatpush2.bf16.msra.mxu0 0
      %2531 = vmatprep.subr.bf16.mxu0 0
      %2532 = vmatpush2.bf16.msra.mxu0 0
      %2533 = vmatprep.subr.bf16.mxu0 0
      %2534 = vmatpush2.bf16.msra.mxu0 0
      %2535 = vmatprep.subr.bf16.mxu0 0
      %2536 = vmatpush2.bf16.msra.mxu0 0
      %2537 = vmatprep.mubr.bf16.mxu0 0
      %2538 = vmatmul.mubr.bf16.gmra.mxu0 %v2449
      %v2539 = vpop.f32.mrf.mxu0
      %v2540 = vadd.f32 0.0, %v2539
      %v2541 = vpop.f32.mrf.mxu0
      %v2542 = vpop.f32.mrf.mxu0
      %v2543 = vadd.f32 0.0, %v2542
      %v2544 = vpop.f32.mrf.mxu0
      %2545 = vmatprep.mubr.bf16.mxu0 0
      %2546 = vmatmul.mubr.bf16.gmra.mxu0 %v2450
      %v2547 = vpop.f32.mrf.mxu0
      %v2548 = vadd.f32 0.0, %v2547
      %v2549 = vpop.f32.mrf.mxu0
      %v2550 = vpop.f32.mrf.mxu0
      %v2551 = vadd.f32 0.0, %v2550
      %v2552 = vpop.f32.mrf.mxu0
      %2553 = vmatprep.mubr.bf16.mxu0 0
      %2554 = vmatmul.mubr.bf16.gmra.mxu0 %v2451
      %v2555 = vpop.f32.mrf.mxu0
      %v2556 = vadd.f32 0.0, %v2555
      %v2557 = vpop.f32.mrf.mxu0
      %v2558 = vpop.f32.mrf.mxu0
      %v2559 = vadd.f32 0.0, %v2558
      %v2560 = vpop.f32.mrf.mxu0
      %2561 = vmatprep.mubr.bf16.mxu0 0
      %2562 = vmatmul.mubr.bf16.gmra.mxu0 %v2452
      %v2563 = vpop.f32.mrf.mxu0
      %v2564 = vadd.f32 0.0, %v2563
      %v2565 = vpop.f32.mrf.mxu0
      %v2566 = vpop.f32.mrf.mxu0
      %v2567 = vadd.f32 0.0, %v2566
      %v2568 = vpop.f32.mrf.mxu0
      %2569 = vdwg.mxu0
      %v2570 = vadd.f32 %v2312, %v2540
      %v2571 = vadd.f32 %v2313, %v2543
      %v2572 = vadd.f32 %v2314, %v2548
      %v2573 = vadd.f32 %v2315, %v2551
      %v2574 = vadd.f32 %v2316, %v2556
      %v2575 = vadd.f32 %v2317, %v2559
      %v2576 = vadd.f32 %v2318, %v2564
      %v2577 = vadd.f32 %v2319, %v2567
      %v2578 = vadd.f32 %v2570, %v2571
      %v2579 = vadd.f32 %v2578, %v2572
      %v2580 = vadd.f32 %v2579, %v2573
      %v2581 = vadd.f32 %v2580, %v2574
      %v2582 = vadd.f32 %v2581, %v2575
      %v2583 = vadd.f32 %v2582, %v2576
      %v2584 = vadd.f32 %v2583, %v2577
      %v2585 = vrot.slane %v2584, 4
      %v2586 = vadd.f32 %v2584, %v2585
      %v2587 = vrot.slane %v2586, 2
      %v2588 = vadd.f32 %v2586, %v2587
      %v2589 = vrot.slane %v2588, 1
      %v2590 = vadd.f32 %v2588, %v2589
      %v2591 = vmul.f32 %v2570, %v2570
      %v2592 = vmul.f32 %v2571, %v2571
      %v2593 = vmul.f32 %v2572, %v2572
      %v2594 = vmul.f32 %v2573, %v2573
      %v2595 = vmul.f32 %v2574, %v2574
      %v2596 = vmul.f32 %v2575, %v2575
      %v2597 = vmul.f32 %v2576, %v2576
      %v2598 = vmul.f32 %v2577, %v2577
      %v2599 = vadd.f32 %v2591, %v2592
      %v2600 = vadd.f32 %v2599, %v2593
      %v2601 = vadd.f32 %v2600, %v2594
      %v2602 = vadd.f32 %v2601, %v2595
      %v2603 = vadd.f32 %v2602, %v2596
      %v2604 = vadd.f32 %v2603, %v2597
      %v2605 = vadd.f32 %v2604, %v2598
      %v2606 = vrot.slane %v2605, 4
      %v2607 = vadd.f32 %v2605, %v2606
      %v2608 = vrot.slane %v2607, 2
      %v2609 = vadd.f32 %v2607, %v2608
      %v2610 = vrot.slane %v2609, 1
      %v2611 = vadd.f32 %v2609, %v2610
      %vm2612 = vcmp.eq.s32.totalorder %v240, 0
      %vm2613 = vcmp.eq.s32.totalorder %v240, 1
      %v2614 = vsel %vm2613, %v2611, 0.0
      %v2615 = vsel %vm2612, %v2590, %v2614
      %2616 = vst [vmem:[%s235] sm:$0xff] %v2615
      %v2617 = vpack.c.bf16 %v2571, %v2570
      %v2618 = vpack.c.bf16 %v2573, %v2572
      %v2619 = vpack.c.bf16 %v2575, %v2574
      %v2620 = vpack.c.bf16 %v2577, %v2576
      %v2625 = vunpack.c.l.b16 %v2617
      %v2626 = vunpack.c.h.b16 %v2617
      %v2627 = vunpack.c.l.b16 %v2618
      %v2628 = vunpack.c.h.b16 %v2618
      %v2629 = vunpack.c.l.b16 %v2619
      %v2630 = vunpack.c.h.b16 %v2619
      %v2631 = vunpack.c.l.b16 %v2620
      %v2632 = vunpack.c.h.b16 %v2620
      %v2633 = vpack.c.b16 %v2625, %v2625
      %v2634 = vpack.c.b16 %v2626, %v2626
      %v2635 = vpack.c.b16 %v2627, %v2627
      %v2636 = vpack.c.b16 %v2628, %v2628
      %v2637 = vpack.c.b16 %v2629, %v2629
      %v2638 = vpack.c.b16 %v2630, %v2630
      %v2639 = vpack.c.b16 %v2631, %v2631
      %v2640 = vpack.c.b16 %v2632, %v2632
      %2649 = vst [vmem:[%s231] sm:$0xf] %v2633
      %2650 = vst [vmem:[%s231 + $0x4] sm:$0xf] %v2634
      %2651 = vst [vmem:[%s231 + $0x8] sm:$0xf] %v2635
      %2652 = vst [vmem:[%s231 + $0xc] sm:$0xf] %v2636
      %2653 = vst [vmem:[%s231 + $0x10] sm:$0xf] %v2637
      %2654 = vst [vmem:[%s231 + $0x14] sm:$0xf] %v2638
      %2655 = vst [vmem:[%s231 + $0x18] sm:$0xf] %v2639
      %2656 = vst [vmem:[%s231 + $0x1c] sm:$0xf] %v2640
      %p2657 = scmp.lt.s32.totalorder %s17, 1
      %s2658 = scalar_select %p2657, %s17, 1
      %s2659 = smul.addr %s2658, 8
      %s2660 = smul.addr %s2659, 4
      %s2661 = scalar_lea.vmem %s4, %s2660
      %p2662 = scmp.lt.s32.totalorder %s17, 1
      %s2663 = scalar_select %p2662, %s17, 1
      %s2664 = smul.addr %s2663, 8
      %s2665 = scalar_lea.vmem %s5, %s2664
      // Predicated region
      $region37: #{basic_block_forward.5} parent=35 // pred_check
        %p2666 = pneg %p124
      $region38: #{basic_block_forward.5} parent=35 // pred_check_branch
        %2668 = sbr.rel (%p2666) target = $region40
      $region39: #{basic_block_forward.5} parent=35 // pred_region
        _
      $region40: #{basic_block_forward.5} parent=35 // pred_fallthru
        _
      // Predicated region
      $region41: #{basic_block_forward.5} parent=35 // pred_check
        %p2669 = pneg %p150
      $region42: #{basic_block_forward.5} parent=35 // pred_check_branch
        %2671 = sbr.rel (%p2669) target = $region44
      $region43: #{basic_block_forward.5} parent=35 // pred_region
        _
      $region44: #{basic_block_forward.5} parent=35 // pred_fallthru
        _
    $region36: #{basic_block_forward.5} parent=5 // pred_fallthru
      _
    %p2672 = scmp.le.s32.totalorder 2, %s12
    // Predicated region
    $region45: #{basic_block_forward.5} parent=5 // pred_check
      %p2673 = pneg %p2672
    $region46: #{basic_block_forward.5} parent=5 // pred_check_branch
      %2675 = sbr.rel (%p2673) target = $region48
    $region47: #{basic_block_forward.5} parent=5 // pred_region
      %s2676 = ssub.s32 %s12, 2
      // Predicated region
      $region49: #{basic_block_forward.5} parent=47 // pred_check
        %p2677 = pneg %p130
      $region50: #{basic_block_forward.5} parent=47 // pred_check_branch
        %2679 = sbr.rel (%p2677) target = $region52
      $region51: #{basic_block_forward.5} parent=47 // pred_region
        %p2680 = scmp.lt.s32.totalorder %s18, 1
        %s2681 = scalar_select %p2680, %s18, 1
        %s2682 = smul.addr %s2681, 8
        %s2683 = smul.addr %s2682, 4
        %s2684 = scalar_lea.vmem %s4, %s2683
      $region52: #{basic_block_forward.5} parent=47 // pred_fallthru
        _
      // Predicated region
      $region53: #{basic_block_forward.5} parent=47 // pred_check
        %p2685 = pneg %p156
      $region54: #{basic_block_forward.5} parent=47 // pred_check_branch
        %2687 = sbr.rel (%p2685) target = $region56
      $region55: #{basic_block_forward.5} parent=47 // pred_region
        %p2688 = scmp.lt.s32.totalorder %s18, 1
        %s2689 = scalar_select %p2688, %s18, 1
        %s2690 = smul.addr %s2689, 8
        %s2691 = scalar_lea.vmem %s5, %s2690
      $region56: #{basic_block_forward.5} parent=47 // pred_fallthru
        _
    $region48: #{basic_block_forward.5} parent=5 // pred_fallthru
      _
  $region6: #{basic_block_forward.5} parent=0 // loop_footer
    %s16 = sadd.s32 1, %s12
  $region7: #{basic_block_forward.5} parent=0 // loop_footer_branch
    %11 = sbr.rel target = $region3
  $region8: #{basic_block_forward.5} parent=0 // loop_exit
    _

</llo_original>
